<compile_context>
chip_gen: v7x
topology: tpu7x:2x2x1
jax: 0.10.0
libtpu: 0.0.40
codegen_flags: <defaults>
</compile_context>

<pallas_src>
import jax
import jax.numpy as jnp
from jax import lax
from jax.experimental import pallas as pl
from jax.experimental.pallas import tpu as pltpu

# ---------------- model configuration (small, deterministic) ----------------
IMG = 16
IN_CHANS = 3
PATCH = 4
GRID = IMG // PATCH                      # 4
NUM_PATCHES = GRID * GRID                # 16
PATCH_DIM = IN_CHANS * PATCH * PATCH     # 48
EMBED_DIM = 32
NUM_HEADS = 4
HEAD_DIM = EMBED_DIM // NUM_HEADS        # 8
DEPTH = 2
MLP_DIM = 4 * EMBED_DIM                  # 128
DEC_C1 = 16                              # stands in for 256
DEC_C2 = 8                               # stands in for 64
DKER = 4                                 # deconv kernel_size == stride
DEC1_COLS = DKER * DKER * DEC_C1         # 256, columns ordered (ki, kj, c1)
OUT_COLS = DKER ** 4                     # 256, columns ordered (ki, kj, kl, km)
LN_EPS = 1e-6                            # timm ViT uses LayerNorm(eps=1e-6)
N_TOK = NUM_PATCHES + 1                  # 17 (cls + patches)
N_PAD = 24                               # tokens padded to a sublane multiple (8 | 24)


# ---------------- small in-kernel helpers ----------------
def _normalize(x, eps=LN_EPS):
    """LayerNorm without gamma/beta (those are folded into the consuming matmul weights)."""
    mu = jnp.mean(x, axis=-1, keepdims=True)
    xc = x - mu
    var = jnp.mean(xc * xc, axis=-1, keepdims=True)
    return xc * lax.rsqrt(var + eps)


def _gelu(x):
    # TODO(synk): PyTorch nn.GELU default is exact erf-GELU; using the tanh approximation.
    return 0.5 * x * (1.0 + jnp.tanh(0.7978845608028654 * (x + 0.044715 * x * x * x)))


# ---------------- the single fused forward kernel ----------------
def _fused_forward_kernel(patch_ref, tokb_ref, abias_ref, pw_ref,
                          qkvw_ref, qkvb_ref, projw_ref, projb_ref,
                          fc1w_ref, fc1b_ref, fc2w_ref, fc2b_ref,
                          d1w_ref, d1b_ref, d2w_ref, d2b_ref,
                          o_ref, attn_ref):
    """R = (batch elements per step) * N_PAD token rows, processed fully in VMEM."""
    D, Dh = EMBED_DIM, HEAD_DIM
    bf16 = jnp.bfloat16

    # ---- patch embedding; cls token + pos embed arrive as a per-row additive bias ----
    patches = patch_ref[...].astype(bf16)                          # (R, 48); pad rows are zero
    x = jnp.dot(patches, pw_ref[...], preferred_element_type=jnp.float32) + tokb_ref[...]

    abias = abias_ref[...]                                          # (R, R) additive attn mask

    # ---- transformer blocks (fully unrolled; every weight resident in VMEM) ----
    for d in range(DEPTH):
        # attention: x += proj(attn(norm1(x)))  (ln1 gamma/beta + 1/sqrt(dh) folded into qkv)
        h = _normalize(x).astype(bf16)
        qkv = jnp.dot(h, qkvw_ref[d], preferred_element_type=jnp.float32) + qkvb_ref[d]
        for hh in range(NUM_HEADS):
            q = qkv[:, hh * Dh:(hh + 1) * Dh].astype(bf16)
            k = qkv[:, D + hh * Dh:D + (hh + 1) * Dh].astype(bf16)
            v = qkv[:, 2 * D + hh * Dh:2 * D + (hh + 1) * Dh].astype(bf16)
            s = lax.dot_general(q, k, (((1,), (1,)), ((), ())),
                                preferred_element_type=jnp.float32) + abias   # (R, R)
            s = s - jnp.max(s, axis=-1, keepdims=True)
            p = jnp.exp(s)
            p = p * pl.reciprocal(jnp.sum(p, axis=-1, keepdims=True), approx=True)
            # lane-pack this head's output into the (R, 32) VMEM tile
            attn_ref[:, hh * Dh:(hh + 1) * Dh] = jnp.dot(
                p.astype(bf16), v, preferred_element_type=jnp.float32)
        attn = attn_ref[...].astype(bf16)                           # (R, 32) -> ONE proj matmul
        x = x + jnp.dot(attn, projw_ref[d], preferred_element_type=jnp.float32) + projb_ref[d]

        # MLP: x += fc2(gelu(fc1(norm2(x))))  (ln2 gamma/beta folded into fc1)
        h = _normalize(x).astype(bf16)
        h = jnp.dot(h, fc1w_ref[d], preferred_element_type=jnp.float32) + fc1b_ref[d]
        h = _gelu(h).astype(bf16)
        x = x + jnp.dot(h, fc2w_ref[d], preferred_element_type=jnp.float32) + fc2b_ref[d]

    # ---- decoder: final LN folded into deconv1; deconv2 + 1x1 conv + sigmoid kron-fused ----
    h = _normalize(x).astype(bf16)
    h = jnp.dot(h, d1w_ref[...], preferred_element_type=jnp.float32) + d1b_ref[...]
    h = jnp.maximum(h, 0.0).astype(bf16)                            # ReLU
    y = jnp.dot(h, d2w_ref[...], preferred_element_type=jnp.float32) + d2b_ref[...]
    o_ref[...] = jax.nn.sigmoid(y).astype(o_ref.dtype)              # lane-dense (R, 256) output


def _cspec(shape):
    """Constant-index BlockSpec: whole array resident in VMEM for every grid step."""
    nd = len(shape)
    return pl.BlockSpec(shape, lambda i, _nd=nd: (0,) * _nd)


def make_forward(bps, batch):
    """Build the jitted forward.  bps = batch elements per grid step: bps == batch (one grid
    step, tokens of both elements stacked on sublanes) on single-TC chips; bps == 1 with a
    CORE_PARALLEL batch grid on v7x so the two elements run on the two TensorCores."""
    assert batch % bps == 0
    steps = batch // bps
    R = bps * N_PAD
    if steps > 1:
        semantics = (getattr(pltpu, "CORE_PARALLEL", "parallel"),)
    else:
        semantics = ("arbitrary",)

    fused = pl.pallas_call(
        _fused_forward_kernel,
        grid=(steps,),
        in_specs=[
            pl.BlockSpec((R, PATCH_DIM), lambda i: (i, 0)),           # padded patch rows
            _cspec((R, EMBED_DIM)),                                   # cls + pos token bias
            _cspec((R, R)),                                           # additive attention mask
            _cspec((PATCH_DIM, EMBED_DIM)),                           # patch-embed weight
            _cspec((DEPTH, EMBED_DIM, 3 * EMBED_DIM)), _cspec((DEPTH, 1, 3 * EMBED_DIM)),
            _cspec((DEPTH, EMBED_DIM, EMBED_DIM)), _cspec((DEPTH, 1, EMBED_DIM)),
            _cspec((DEPTH, EMBED_DIM, MLP_DIM)), _cspec((DEPTH, 1, MLP_DIM)),
            _cspec((DEPTH, MLP_DIM, EMBED_DIM)), _cspec((DEPTH, 1, EMBED_DIM)),
            _cspec((EMBED_DIM, DEC1_COLS)), _cspec((1, DEC1_COLS)),
            _cspec((DEC1_COLS, OUT_COLS)), _cspec((1, OUT_COLS)),
        ],
        out_specs=pl.BlockSpec((R, OUT_COLS), lambda i: (i, 0)),
        out_shape=jax.ShapeDtypeStruct((batch * N_PAD, OUT_COLS), jnp.float32),
        scratch_shapes=[pltpu.VMEM((R, EMBED_DIM), jnp.float32)],     # lane-packed head outputs
        compiler_params=pltpu.CompilerParams(dimension_semantics=semantics),
    )

    def forward(folded, x):
        B = x.shape[0]
        # space-to-depth patch extraction, then pad the token axis: row 0 (cls) and rows
        # 17..23 stay zero so the patch matmul only contributes to real patch tokens.
        xp = x.reshape(B, IN_CHANS, GRID, PATCH, GRID, PATCH)
        xp = xp.transpose(0, 2, 4, 1, 3, 5).reshape(B, NUM_PATCHES, PATCH_DIM)
        xp = jnp.pad(xp, ((0, 0), (1, N_PAD - N_TOK), (0, 0)))
        xp = xp.reshape(B * N_PAD, PATCH_DIM)

        y = fused(xp, folded["tok_bias"], folded["attn_bias"], folded["patch_w"],
                  folded["qkv_w"], folded["qkv_b"], folded["proj_w"], folded["proj_b"],
                  folded["fc1_w"], folded["fc1_b"], folded["fc2_w"], folded["fc2_b"],
                  folded["dec1_w"], folded["dec1_b"], folded["dec2_w"], folded["dec2_b"])

        # rows: (b, token) with patch tokens 1..16 = (i, j); cols: (ki, kj, kl, km)
        y = y.reshape(B, N_PAD, OUT_COLS)[:, 1:N_TOK, :]
        y = y.reshape(B, GRID, GRID, DKER, DKER, DKER, DKER)
        # mask[b, 0, i*16 + ki*4 + kl, j*16 + kj*4 + km]
        y = y.transpose(0, 1, 3, 5, 2, 4, 6)
        return y.reshape(B, 1, GRID * DKER * DKER, GRID * DKER * DKER)

    return jax.jit(forward)


# ---------------- parameter init (deterministic, synthetic) ----------------
def init_params(key):
    keys = jax.random.split(key, 128)
    it = iter(range(128))

    def nrm(shape, scale=0.02):
        return (scale * jax.random.normal(keys[next(it)], shape)).astype(jnp.float32)

    D, P, K = EMBED_DIM, PATCH, DKER
    params = {
        "patch_w": nrm((IN_CHANS * P * P, D)),
        "patch_b": jnp.zeros((D,), jnp.float32),
        "cls_token": nrm((1, 1, D)),
        "pos_embed": nrm((1, N_TOK, D)),
        "norm_g": jnp.ones((D,), jnp.float32),
        "norm_b": jnp.zeros((D,), jnp.float32),
        "blocks": [],
        # Decoder (PyTorch ConvTranspose2d weight layout: (Cin, Cout, kH, kW))
        "dec1_w": nrm((D, DEC_C1, K, K)),
        "dec1_b": nrm((DEC_C1,)),
        "dec2_w": nrm((DEC_C1, DEC_C2, K, K)),
        "dec2_b": nrm((DEC_C2,)),
        "conv_w": nrm((DEC_C2, 1)),      # Conv2d(8,1,1) stored as a (Cin, Cout) matmul weight
        "conv_b": nrm((1,)),
    }
    for _ in range(DEPTH):
        params["blocks"].append({
            "ln1_g": jnp.ones((D,), jnp.float32), "ln1_b": jnp.zeros((D,), jnp.float32),
            "qkv_w": nrm((D, 3 * D)), "qkv_b": jnp.zeros((3 * D,), jnp.float32),
            "proj_w": nrm((D, D)), "proj_b": jnp.zeros((D,), jnp.float32),
            "ln2_g": jnp.ones((D,), jnp.float32), "ln2_b": jnp.zeros((D,), jnp.float32),
            "fc1_w": nrm((D, MLP_DIM)), "fc1_b": jnp.zeros((MLP_DIM,), jnp.float32),
            "fc2_w": nrm((MLP_DIM, D)), "fc2_b": jnp.zeros((D,), jnp.float32),
        })
    return params


# ---------------- one-time (outside jit) algebraic weight folding ----------------
def fold_params(params, bps):
    D, K = EMBED_DIM, DKER
    bf16 = jnp.bfloat16
    scale = float(HEAD_DIM) ** -0.5
    qscale = jnp.concatenate([jnp.full((D,), scale, jnp.float32),
                              jnp.ones((2 * D,), jnp.float32)])

    qkv_w, qkv_b, proj_w, proj_b = [], [], [], []
    fc1_w, fc1_b, fc2_w, fc2_b = [], [], [], []
    for blk in params["blocks"]:
        # LN(x) = xhat*g + b  =>  LN(x)@W + c = xhat@(g[:,None]*W) + (b@W + c)
        qkv_w.append((blk["qkv_w"] * blk["ln1_g"][:, None]) * qscale[None, :])
        qkv_b.append(((blk["qkv_b"] + blk["ln1_b"] @ blk["qkv_w"]) * qscale)[None, :])
        proj_w.append(blk["proj_w"])
        proj_b.append(blk["proj_b"][None, :])
        fc1_w.append(blk["fc1_w"] * blk["ln2_g"][:, None])
        fc1_b.append((blk["fc1_b"] + blk["ln2_b"] @ blk["fc1_w"])[None, :])
        fc2_w.append(blk["fc2_w"])
        fc2_b.append(blk["fc2_b"][None, :])

    # per-token additive bias: cls+pos for token 0, patch_b+pos for tokens 1..16, 0 for pads
    tok_bias = jnp.zeros((N_PAD, D), jnp.float32)
    tok_bias = tok_bias.at[0].set(params["cls_token"][0, 0] + params["pos_embed"][0, 0])
    tok_bias = tok_bias.at[1:N_TOK].set(params["patch_b"][None, :] + params["pos_embed"][0, 1:])
    tok_bias = jnp.tile(tok_bias, (bps, 1))                                    # (bps*24, 32)

    # additive attention mask: 0 for same-batch real keys, -1e30 otherwise (block-diag batch)
    R = bps * N_PAD
    r = jnp.arange(R)
    valid = (r[:, None] // N_PAD == r[None, :] // N_PAD) & ((r[None, :] % N_PAD) < N_TOK)
    attn_bias = jnp.where(valid, 0.0, -1e30).astype(jnp.float32)               # (R, R)

    # Decoder stage 1: final encoder LayerNorm folded into ConvT1; columns ordered (ki, kj, c1).
    w1 = params["dec1_w"].transpose(0, 2, 3, 1).reshape(D, DEC1_COLS)          # (32, 256)
    b1 = jnp.tile(params["dec1_b"], K * K)                                     # (256,)
    dec1_w = params["norm_g"][:, None] * w1
    dec1_b = (params["norm_b"] @ w1 + b1)[None, :]
    # Decoder stage 2: ConvT2 (no act) fused with the 1x1 conv, block-diagonalised (kron I_16)
    # so it consumes the (ki,kj,c1)-ordered stage-1 columns directly -> no permutation needed.
    wf = jnp.tensordot(params["dec2_w"], params["conv_w"][:, 0], axes=([1], [0]))  # (C1, K, K)
    wf = wf.reshape(DEC_C1, K * K)
    bf = params["dec2_b"] @ params["conv_w"][:, 0] + params["conv_b"][0]
    dec2_w = jnp.kron(jnp.eye(K * K, dtype=jnp.float32), wf)                   # (256, 256)
    dec2_b = jnp.full((1, OUT_COLS), bf, jnp.float32)

    folded = {
        "patch_w": params["patch_w"].astype(bf16),
        "tok_bias": tok_bias, "attn_bias": attn_bias,
        "qkv_w": jnp.stack(qkv_w).astype(bf16), "qkv_b": jnp.stack(qkv_b),
        "proj_w": jnp.stack(proj_w).astype(bf16), "proj_b": jnp.stack(proj_b),
        "fc1_w": jnp.stack(fc1_w).astype(bf16), "fc1_b": jnp.stack(fc1_b),
        "fc2_w": jnp.stack(fc2_w).astype(bf16), "fc2_b": jnp.stack(fc2_b),
        "dec1_w": dec1_w.astype(bf16), "dec1_b": dec1_b,
        "dec2_w": dec2_w.astype(bf16), "dec2_b": dec2_b,
    }
    return jax.device_put(folded)


def _tensorcores_per_chip():
    """2 on v7x (2 TensorCores/chip -> CORE_PARALLEL batch sharding), else 1."""
    try:
        kind = jax.devices()[0].device_kind.lower()
    except Exception:
        return 1
    return 2 if ("v7" in kind or "7x" in kind) else 1


if __name__ == "__main__":
    key = jax.random.PRNGKey(0)
    pkey, xkey = jax.random.split(key)
    params = init_params(pkey)

    B = 2
    bps = 1 if _tensorcores_per_chip() >= 2 else B      # v7x: one element per TC; else one step
    folded = fold_params(params, bps)                   # folded ONCE, outside jit
    vit_forward = make_forward(bps, B)

    x = jax.random.normal(xkey, (B, IN_CHANS, IMG, IMG), dtype=jnp.float32)
    out = jax.block_until_ready(vit_forward(folded, x))
    assert out.shape == (2, 1, 64, 64), out.shape
    assert bool(jnp.all(jnp.isfinite(out)))
    assert bool(jnp.all((out >= 0.0) & (out <= 1.0)))
    print("KERNEL_OK")
</pallas_src>

<mosaic_0001>
module attributes {stable_mosaic.version = 11 : i64} {
  func.func @_fused_forward_kernel(%arg0: i32, %arg1: memref<48x48xf32, #tpu.memory_space<vmem>>, %arg2: memref<48x32xf32, #tpu.memory_space<vmem>>, %arg3: memref<48x48xf32, #tpu.memory_space<vmem>>, %arg4: memref<48x32xbf16, #tpu.memory_space<vmem>>, %arg5: memref<2x32x96xbf16, #tpu.memory_space<vmem>>, %arg6: memref<2x1x96xf32, #tpu.memory_space<vmem>>, %arg7: memref<2x32x32xbf16, #tpu.memory_space<vmem>>, %arg8: memref<2x1x32xf32, #tpu.memory_space<vmem>>, %arg9: memref<2x32x128xbf16, #tpu.memory_space<vmem>>, %arg10: memref<2x1x128xf32, #tpu.memory_space<vmem>>, %arg11: memref<2x128x32xbf16, #tpu.memory_space<vmem>>, %arg12: memref<2x1x32xf32, #tpu.memory_space<vmem>>, %arg13: memref<32x256xbf16, #tpu.memory_space<vmem>>, %arg14: memref<1x256xf32, #tpu.memory_space<vmem>>, %arg15: memref<256x256xbf16, #tpu.memory_space<vmem>>, %arg16: memref<1x256xf32, #tpu.memory_space<vmem>>, %arg17: memref<48x256xf32, #tpu.memory_space<vmem>>, %arg18: memref<48x32xf32, #tpu.memory_space<vmem>>) attributes {dimension_semantics = [#tpu.dimension_semantics<arbitrary>], iteration_bounds = array<i64: 1>, scalar_prefetch = 0 : i64, scratch_operands = 1 : i64, tpu.core_type = #tpu.core_type<tc>, window_params = [{transform_indices = @transform_0, window_bounds = array<i64: 48, 48>}, {pipeline_mode = #tpu.pipeline_mode<synchronous>, transform_indices = @transform_1, window_bounds = array<i64: 48, 32>}, {pipeline_mode = #tpu.pipeline_mode<synchronous>, transform_indices = @transform_2, window_bounds = array<i64: 48, 48>}, {pipeline_mode = #tpu.pipeline_mode<synchronous>, transform_indices = @transform_3, window_bounds = array<i64: 48, 32>}, {pipeline_mode = #tpu.pipeline_mode<synchronous>, transform_indices = @transform_4, window_bounds = array<i64: 2, 32, 96>}, {pipeline_mode = #tpu.pipeline_mode<synchronous>, transform_indices = @transform_5, window_bounds = array<i64: 2, 1, 96>}, {pipeline_mode = #tpu.pipeline_mode<synchronous>, transform_indices = @transform_6, window_bounds = array<i64: 2, 32, 32>}, {pipeline_mode = #tpu.pipeline_mode<synchronous>, transform_indices = @transform_7, window_bounds = array<i64: 2, 1, 32>}, {pipeline_mode = #tpu.pipeline_mode<synchronous>, transform_indices = @transform_8, window_bounds = array<i64: 2, 32, 128>}, {pipeline_mode = #tpu.pipeline_mode<synchronous>, transform_indices = @transform_9, window_bounds = array<i64: 2, 1, 128>}, {pipeline_mode = #tpu.pipeline_mode<synchronous>, transform_indices = @transform_10, window_bounds = array<i64: 2, 128, 32>}, {pipeline_mode = #tpu.pipeline_mode<synchronous>, transform_indices = @transform_11, window_bounds = array<i64: 2, 1, 32>}, {pipeline_mode = #tpu.pipeline_mode<synchronous>, transform_indices = @transform_12, window_bounds = array<i64: 32, 256>}, {pipeline_mode = #tpu.pipeline_mode<synchronous>, transform_indices = @transform_13, window_bounds = array<i64: 1, 256>}, {pipeline_mode = #tpu.pipeline_mode<synchronous>, transform_indices = @transform_14, window_bounds = array<i64: 256, 256>}, {pipeline_mode = #tpu.pipeline_mode<synchronous>, transform_indices = @transform_15, window_bounds = array<i64: 1, 256>}, {transform_indices = @transform_16, window_bounds = array<i64: 48, 256>}]} {
    %c0 = arith.constant 0 : index
    %c0_0 = arith.constant 0 : index
    %0 = vector.load %arg1[%c0, %c0_0] : memref<48x48xf32, #tpu.memory_space<vmem>>, vector<48x48xf32>
    %1 = arith.truncf %0 : vector<48x48xf32> to vector<48x48xbf16>
    %c0_1 = arith.constant 0 : index
    %c0_2 = arith.constant 0 : index
    %2 = vector.load %arg4[%c0_1, %c0_2] : memref<48x32xbf16, #tpu.memory_space<vmem>>, vector<48x32xbf16>
    %cst = arith.constant dense<0.000000e+00> : vector<48x32xf32>
    %3 = tpu.matmul %1, %2, %cst {dimension_numbers = #tpu.dot_dimension_numbers<[1], [0], [0], [1], [0, 0, 1, 1], [], []>} : vector<48x48xbf16>, vector<48x32xbf16>, vector<48x32xf32> -> vector<48x32xf32>
    %c0_3 = arith.constant 0 : index
    %c0_4 = arith.constant 0 : index
    %4 = vector.load %arg2[%c0_3, %c0_4] : memref<48x32xf32, #tpu.memory_space<vmem>>, vector<48x32xf32>
    %5 = arith.addf %3, %4 : vector<48x32xf32>
    %c0_5 = arith.constant 0 : index
    %c0_6 = arith.constant 0 : index
    %6 = vector.load %arg3[%c0_5, %c0_6] : memref<48x48xf32, #tpu.memory_space<vmem>>, vector<48x48xf32>
    %cst_7 = arith.constant dense<0.000000e+00> : vector<48xf32>
    %7 = vector.multi_reduction <add>, %5, %cst_7 [1] : vector<48x32xf32> to vector<48xf32>
    %8 = vector.shape_cast %7 : vector<48xf32> to vector<48x1xf32>
    %cst_8 = arith.constant 3.200000e+01 : f32
    %9 = vector.broadcast %cst_8 : f32 to vector<48x1xf32>
    %10 = arith.divf %8, %9 : vector<48x1xf32>
    %11 = vector.broadcast %10 : vector<48x1xf32> to vector<48x32xf32>
    %12 = arith.subf %5, %11 : vector<48x32xf32>
    %13 = arith.mulf %12, %12 : vector<48x32xf32>
    %cst_9 = arith.constant dense<0.000000e+00> : vector<48xf32>
    %14 = vector.multi_reduction <add>, %13, %cst_9 [1] : vector<48x32xf32> to vector<48xf32>
    %15 = vector.shape_cast %14 : vector<48xf32> to vector<48x1xf32>
    %cst_10 = arith.constant 3.200000e+01 : f32
    %16 = vector.broadcast %cst_10 : f32 to vector<48x1xf32>
    %17 = arith.divf %15, %16 : vector<48x1xf32>
    %cst_11 = arith.constant 9.99999997E-7 : f32
    %18 = vector.broadcast %cst_11 : f32 to vector<48x1xf32>
    %19 = arith.addf %17, %18 : vector<48x1xf32>
    %20 = math.rsqrt %19 : vector<48x1xf32>
    %21 = vector.broadcast %20 : vector<48x1xf32> to vector<48x32xf32>
    %22 = arith.mulf %12, %21 : vector<48x32xf32>
    %23 = arith.truncf %22 : vector<48x32xf32> to vector<48x32xbf16>
    %c0_12 = arith.constant 0 : index
    %c0_13 = arith.constant 0 : index
    %c0_14 = arith.constant 0 : index
    %24 = vector.load %arg5[%c0_12, %c0_13, %c0_14] : memref<2x32x96xbf16, #tpu.memory_space<vmem>>, vector<1x32x96xbf16>
    %25 = vector.shape_cast %24 : vector<1x32x96xbf16> to vector<32x96xbf16>
    %cst_15 = arith.constant dense<0.000000e+00> : vector<48x96xf32>
    %26 = tpu.matmul %23, %25, %cst_15 {dimension_numbers = #tpu.dot_dimension_numbers<[1], [0], [0], [1], [0, 0, 1, 1], [], []>} : vector<48x32xbf16>, vector<32x96xbf16>, vector<48x96xf32> -> vector<48x96xf32>
    %c0_16 = arith.constant 0 : index
    %c0_17 = arith.constant 0 : index
    %c0_18 = arith.constant 0 : index
    %27 = vector.load %arg6[%c0_16, %c0_17, %c0_18] : memref<2x1x96xf32, #tpu.memory_space<vmem>>, vector<1x1x96xf32>
    %28 = vector.shape_cast %27 : vector<1x1x96xf32> to vector<1x96xf32>
    %29 = vector.broadcast %28 : vector<1x96xf32> to vector<48x96xf32>
    %30 = arith.addf %26, %29 : vector<48x96xf32>
    %31 = vector.extract_strided_slice %30 {offsets = [0, 0], sizes = [48, 8], strides = [1, 1]} : vector<48x96xf32> to vector<48x8xf32>
    %32 = arith.truncf %31 : vector<48x8xf32> to vector<48x8xbf16>
    %33 = vector.extract_strided_slice %30 {offsets = [0, 32], sizes = [48, 8], strides = [1, 1]} : vector<48x96xf32> to vector<48x8xf32>
    %34 = arith.truncf %33 : vector<48x8xf32> to vector<48x8xbf16>
    %35 = vector.extract_strided_slice %30 {offsets = [0, 64], sizes = [48, 8], strides = [1, 1]} : vector<48x96xf32> to vector<48x8xf32>
    %36 = arith.truncf %35 : vector<48x8xf32> to vector<48x8xbf16>
    %cst_19 = arith.constant dense<0.000000e+00> : vector<48x48xf32>
    %37 = tpu.matmul %32, %34, %cst_19 {dimension_numbers = #tpu.dot_dimension_numbers<[1], [1], [0], [0], [0, 0, 1, 0], [], []>} : vector<48x8xbf16>, vector<48x8xbf16>, vector<48x48xf32> -> vector<48x48xf32>
    %38 = arith.addf %37, %6 : vector<48x48xf32>
    %cst_20 = arith.constant dense<0xFF800000> : vector<48xf32>
    %39 = vector.multi_reduction <maximumf>, %38, %cst_20 [1] : vector<48x48xf32> to vector<48xf32>
    %40 = vector.shape_cast %39 : vector<48xf32> to vector<48x1xf32>
    %41 = vector.broadcast %40 : vector<48x1xf32> to vector<48x48xf32>
    %42 = arith.subf %38, %41 : vector<48x48xf32>
    %43 = math.exp %42 : vector<48x48xf32>
    %cst_21 = arith.constant dense<0.000000e+00> : vector<48xf32>
    %44 = vector.multi_reduction <add>, %43, %cst_21 [1] : vector<48x48xf32> to vector<48xf32>
    %45 = vector.shape_cast %44 : vector<48xf32> to vector<48x1xf32>
    %46 = tpu.reciprocal %45 {approx = true} : vector<48x1xf32> -> vector<48x1xf32>
    %47 = vector.broadcast %46 : vector<48x1xf32> to vector<48x48xf32>
    %48 = arith.mulf %43, %47 : vector<48x48xf32>
    %49 = arith.truncf %48 : vector<48x48xf32> to vector<48x48xbf16>
    %cst_22 = arith.constant dense<0.000000e+00> : vector<48x8xf32>
    %50 = tpu.matmul %49, %36, %cst_22 {dimension_numbers = #tpu.dot_dimension_numbers<[1], [0], [0], [1], [0, 0, 1, 1], [], []>} : vector<48x48xbf16>, vector<48x8xbf16>, vector<48x8xf32> -> vector<48x8xf32>
    %c0_23 = arith.constant 0 : index
    %c0_24 = arith.constant 0 : index
    %51 = vector.load %arg18[%c0_23, %c0_24] : memref<48x32xf32, #tpu.memory_space<vmem>>, vector<48x8xf32>
    tpu.vector_store %arg18[%c0_23, %c0_24], %50 {strides = array<i32>} : memref<48x32xf32, #tpu.memory_space<vmem>>, vector<48x8xf32>,
    %52 = vector.extract_strided_slice %30 {offsets = [0, 8], sizes = [48, 8], strides = [1, 1]} : vector<48x96xf32> to vector<48x8xf32>
    %53 = arith.truncf %52 : vector<48x8xf32> to vector<48x8xbf16>
    %54 = vector.extract_strided_slice %30 {offsets = [0, 40], sizes = [48, 8], strides = [1, 1]} : vector<48x96xf32> to vector<48x8xf32>
    %55 = arith.truncf %54 : vector<48x8xf32> to vector<48x8xbf16>
    %56 = vector.extract_strided_slice %30 {offsets = [0, 72], sizes = [48, 8], strides = [1, 1]} : vector<48x96xf32> to vector<48x8xf32>
    %57 = arith.truncf %56 : vector<48x8xf32> to vector<48x8xbf16>
    %cst_25 = arith.constant dense<0.000000e+00> : vector<48x48xf32>
    %58 = tpu.matmul %53, %55, %cst_25 {dimension_numbers = #tpu.dot_dimension_numbers<[1], [1], [0], [0], [0, 0, 1, 0], [], []>} : vector<48x8xbf16>, vector<48x8xbf16>, vector<48x48xf32> -> vector<48x48xf32>
    %59 = arith.addf %58, %6 : vector<48x48xf32>
    %cst_26 = arith.constant dense<0xFF800000> : vector<48xf32>
    %60 = vector.multi_reduction <maximumf>, %59, %cst_26 [1] : vector<48x48xf32> to vector<48xf32>
    %61 = vector.shape_cast %60 : vector<48xf32> to vector<48x1xf32>
    %62 = vector.broadcast %61 : vector<48x1xf32> to vector<48x48xf32>
    %63 = arith.subf %59, %62 : vector<48x48xf32>
    %64 = math.exp %63 : vector<48x48xf32>
    %cst_27 = arith.constant dense<0.000000e+00> : vector<48xf32>
    %65 = vector.multi_reduction <add>, %64, %cst_27 [1] : vector<48x48xf32> to vector<48xf32>
    %66 = vector.shape_cast %65 : vector<48xf32> to vector<48x1xf32>
    %67 = tpu.reciprocal %66 {approx = true} : vector<48x1xf32> -> vector<48x1xf32>
    %68 = vector.broadcast %67 : vector<48x1xf32> to vector<48x48xf32>
    %69 = arith.mulf %64, %68 : vector<48x48xf32>
    %70 = arith.truncf %69 : vector<48x48xf32> to vector<48x48xbf16>
    %cst_28 = arith.constant dense<0.000000e+00> : vector<48x8xf32>
    %71 = tpu.matmul %70, %57, %cst_28 {dimension_numbers = #tpu.dot_dimension_numbers<[1], [0], [0], [1], [0, 0, 1, 1], [], []>} : vector<48x48xbf16>, vector<48x8xbf16>, vector<48x8xf32> -> vector<48x8xf32>
    %c0_29 = arith.constant 0 : index
    %c8 = arith.constant 8 : index
    %72 = vector.load %arg18[%c0_29, %c8] : memref<48x32xf32, #tpu.memory_space<vmem>>, vector<48x8xf32>
    tpu.vector_store %arg18[%c0_29, %c8], %71 {strides = array<i32>} : memref<48x32xf32, #tpu.memory_space<vmem>>, vector<48x8xf32>,
    %73 = vector.extract_strided_slice %30 {offsets = [0, 16], sizes = [48, 8], strides = [1, 1]} : vector<48x96xf32> to vector<48x8xf32>
    %74 = arith.truncf %73 : vector<48x8xf32> to vector<48x8xbf16>
    %75 = vector.extract_strided_slice %30 {offsets = [0, 48], sizes = [48, 8], strides = [1, 1]} : vector<48x96xf32> to vector<48x8xf32>
    %76 = arith.truncf %75 : vector<48x8xf32> to vector<48x8xbf16>
    %77 = vector.extract_strided_slice %30 {offsets = [0, 80], sizes = [48, 8], strides = [1, 1]} : vector<48x96xf32> to vector<48x8xf32>
    %78 = arith.truncf %77 : vector<48x8xf32> to vector<48x8xbf16>
    %cst_30 = arith.constant dense<0.000000e+00> : vector<48x48xf32>
    %79 = tpu.matmul %74, %76, %cst_30 {dimension_numbers = #tpu.dot_dimension_numbers<[1], [1], [0], [0], [0, 0, 1, 0], [], []>} : vector<48x8xbf16>, vector<48x8xbf16>, vector<48x48xf32> -> vector<48x48xf32>
    %80 = arith.addf %79, %6 : vector<48x48xf32>
    %cst_31 = arith.constant dense<0xFF800000> : vector<48xf32>
    %81 = vector.multi_reduction <maximumf>, %80, %cst_31 [1] : vector<48x48xf32> to vector<48xf32>
    %82 = vector.shape_cast %81 : vector<48xf32> to vector<48x1xf32>
    %83 = vector.broadcast %82 : vector<48x1xf32> to vector<48x48xf32>
    %84 = arith.subf %80, %83 : vector<48x48xf32>
    %85 = math.exp %84 : vector<48x48xf32>
    %cst_32 = arith.constant dense<0.000000e+00> : vector<48xf32>
    %86 = vector.multi_reduction <add>, %85, %cst_32 [1] : vector<48x48xf32> to vector<48xf32>
    %87 = vector.shape_cast %86 : vector<48xf32> to vector<48x1xf32>
    %88 = tpu.reciprocal %87 {approx = true} : vector<48x1xf32> -> vector<48x1xf32>
    %89 = vector.broadcast %88 : vector<48x1xf32> to vector<48x48xf32>
    %90 = arith.mulf %85, %89 : vector<48x48xf32>
    %91 = arith.truncf %90 : vector<48x48xf32> to vector<48x48xbf16>
    %cst_33 = arith.constant dense<0.000000e+00> : vector<48x8xf32>
    %92 = tpu.matmul %91, %78, %cst_33 {dimension_numbers = #tpu.dot_dimension_numbers<[1], [0], [0], [1], [0, 0, 1, 1], [], []>} : vector<48x48xbf16>, vector<48x8xbf16>, vector<48x8xf32> -> vector<48x8xf32>
    %c0_34 = arith.constant 0 : index
    %c16 = arith.constant 16 : index
    %93 = vector.load %arg18[%c0_34, %c16] : memref<48x32xf32, #tpu.memory_space<vmem>>, vector<48x8xf32>
    tpu.vector_store %arg18[%c0_34, %c16], %92 {strides = array<i32>} : memref<48x32xf32, #tpu.memory_space<vmem>>, vector<48x8xf32>,
    %94 = vector.extract_strided_slice %30 {offsets = [0, 24], sizes = [48, 8], strides = [1, 1]} : vector<48x96xf32> to vector<48x8xf32>
    %95 = arith.truncf %94 : vector<48x8xf32> to vector<48x8xbf16>
    %96 = vector.extract_strided_slice %30 {offsets = [0, 56], sizes = [48, 8], strides = [1, 1]} : vector<48x96xf32> to vector<48x8xf32>
    %97 = arith.truncf %96 : vector<48x8xf32> to vector<48x8xbf16>
    %98 = vector.extract_strided_slice %30 {offsets = [0, 88], sizes = [48, 8], strides = [1, 1]} : vector<48x96xf32> to vector<48x8xf32>
    %99 = arith.truncf %98 : vector<48x8xf32> to vector<48x8xbf16>
    %cst_35 = arith.constant dense<0.000000e+00> : vector<48x48xf32>
    %100 = tpu.matmul %95, %97, %cst_35 {dimension_numbers = #tpu.dot_dimension_numbers<[1], [1], [0], [0], [0, 0, 1, 0], [], []>} : vector<48x8xbf16>, vector<48x8xbf16>, vector<48x48xf32> -> vector<48x48xf32>
    %101 = arith.addf %100, %6 : vector<48x48xf32>
    %cst_36 = arith.constant dense<0xFF800000> : vector<48xf32>
    %102 = vector.multi_reduction <maximumf>, %101, %cst_36 [1] : vector<48x48xf32> to vector<48xf32>
    %103 = vector.shape_cast %102 : vector<48xf32> to vector<48x1xf32>
    %104 = vector.broadcast %103 : vector<48x1xf32> to vector<48x48xf32>
    %105 = arith.subf %101, %104 : vector<48x48xf32>
    %106 = math.exp %105 : vector<48x48xf32>
    %cst_37 = arith.constant dense<0.000000e+00> : vector<48xf32>
    %107 = vector.multi_reduction <add>, %106, %cst_37 [1] : vector<48x48xf32> to vector<48xf32>
    %108 = vector.shape_cast %107 : vector<48xf32> to vector<48x1xf32>
    %109 = tpu.reciprocal %108 {approx = true} : vector<48x1xf32> -> vector<48x1xf32>
    %110 = vector.broadcast %109 : vector<48x1xf32> to vector<48x48xf32>
    %111 = arith.mulf %106, %110 : vector<48x48xf32>
    %112 = arith.truncf %111 : vector<48x48xf32> to vector<48x48xbf16>
    %cst_38 = arith.constant dense<0.000000e+00> : vector<48x8xf32>
    %113 = tpu.matmul %112, %99, %cst_38 {dimension_numbers = #tpu.dot_dimension_numbers<[1], [0], [0], [1], [0, 0, 1, 1], [], []>} : vector<48x48xbf16>, vector<48x8xbf16>, vector<48x8xf32> -> vector<48x8xf32>
    %c0_39 = arith.constant 0 : index
    %c24 = arith.constant 24 : index
    %114 = vector.load %arg18[%c0_39, %c24] : memref<48x32xf32, #tpu.memory_space<vmem>>, vector<48x8xf32>
    tpu.vector_store %arg18[%c0_39, %c24], %113 {strides = array<i32>} : memref<48x32xf32, #tpu.memory_space<vmem>>, vector<48x8xf32>,
    %c0_40 = arith.constant 0 : index
    %c0_41 = arith.constant 0 : index
    %115 = vector.load %arg18[%c0_40, %c0_41] : memref<48x32xf32, #tpu.memory_space<vmem>>, vector<48x32xf32>
    %116 = arith.truncf %115 : vector<48x32xf32> to vector<48x32xbf16>
    %c0_42 = arith.constant 0 : index
    %c0_43 = arith.constant 0 : index
    %c0_44 = arith.constant 0 : index
    %117 = vector.load %arg7[%c0_42, %c0_43, %c0_44] : memref<2x32x32xbf16, #tpu.memory_space<vmem>>, vector<1x32x32xbf16>
    %118 = vector.shape_cast %117 : vector<1x32x32xbf16> to vector<32x32xbf16>
    %cst_45 = arith.constant dense<0.000000e+00> : vector<48x32xf32>
    %119 = tpu.matmul %116, %118, %cst_45 {dimension_numbers = #tpu.dot_dimension_numbers<[1], [0], [0], [1], [0, 0, 1, 1], [], []>} : vector<48x32xbf16>, vector<32x32xbf16>, vector<48x32xf32> -> vector<48x32xf32>
    %120 = arith.addf %5, %119 : vector<48x32xf32>
    %c0_46 = arith.constant 0 : index
    %c0_47 = arith.constant 0 : index
    %c0_48 = arith.constant 0 : index
    %121 = vector.load %arg8[%c0_46, %c0_47, %c0_48] : memref<2x1x32xf32, #tpu.memory_space<vmem>>, vector<1x1x32xf32>
    %122 = vector.shape_cast %121 : vector<1x1x32xf32> to vector<1x32xf32>
    %123 = vector.broadcast %122 : vector<1x32xf32> to vector<48x32xf32>
    %124 = arith.addf %120, %123 : vector<48x32xf32>
    %cst_49 = arith.constant dense<0.000000e+00> : vector<48xf32>
    %125 = vector.multi_reduction <add>, %124, %cst_49 [1] : vector<48x32xf32> to vector<48xf32>
    %126 = vector.shape_cast %125 : vector<48xf32> to vector<48x1xf32>
    %cst_50 = arith.constant 3.200000e+01 : f32
    %127 = vector.broadcast %cst_50 : f32 to vector<48x1xf32>
    %128 = arith.divf %126, %127 : vector<48x1xf32>
    %129 = vector.broadcast %128 : vector<48x1xf32> to vector<48x32xf32>
    %130 = arith.subf %124, %129 : vector<48x32xf32>
    %131 = arith.mulf %130, %130 : vector<48x32xf32>
    %cst_51 = arith.constant dense<0.000000e+00> : vector<48xf32>
    %132 = vector.multi_reduction <add>, %131, %cst_51 [1] : vector<48x32xf32> to vector<48xf32>
    %133 = vector.shape_cast %132 : vector<48xf32> to vector<48x1xf32>
    %cst_52 = arith.constant 3.200000e+01 : f32
    %134 = vector.broadcast %cst_52 : f32 to vector<48x1xf32>
    %135 = arith.divf %133, %134 : vector<48x1xf32>
    %cst_53 = arith.constant 9.99999997E-7 : f32
    %136 = vector.broadcast %cst_53 : f32 to vector<48x1xf32>
    %137 = arith.addf %135, %136 : vector<48x1xf32>
    %138 = math.rsqrt %137 : vector<48x1xf32>
    %139 = vector.broadcast %138 : vector<48x1xf32> to vector<48x32xf32>
    %140 = arith.mulf %130, %139 : vector<48x32xf32>
    %141 = arith.truncf %140 : vector<48x32xf32> to vector<48x32xbf16>
    %c0_54 = arith.constant 0 : index
    %c0_55 = arith.constant 0 : index
    %c0_56 = arith.constant 0 : index
    %142 = vector.load %arg9[%c0_54, %c0_55, %c0_56] : memref<2x32x128xbf16, #tpu.memory_space<vmem>>, vector<1x32x128xbf16>
    %143 = vector.shape_cast %142 : vector<1x32x128xbf16> to vector<32x128xbf16>
    %cst_57 = arith.constant dense<0.000000e+00> : vector<48x128xf32>
    %144 = tpu.matmul %141, %143, %cst_57 {dimension_numbers = #tpu.dot_dimension_numbers<[1], [0], [0], [1], [0, 0, 1, 1], [], []>} : vector<48x32xbf16>, vector<32x128xbf16>, vector<48x128xf32> -> vector<48x128xf32>
    %c0_58 = arith.constant 0 : index
    %c0_59 = arith.constant 0 : index
    %c0_60 = arith.constant 0 : index
    %145 = vector.load %arg10[%c0_58, %c0_59, %c0_60] : memref<2x1x128xf32, #tpu.memory_space<vmem>>, vector<1x1x128xf32>
    %146 = vector.shape_cast %145 : vector<1x1x128xf32> to vector<1x128xf32>
    %147 = vector.broadcast %146 : vector<1x128xf32> to vector<48x128xf32>
    %148 = arith.addf %144, %147 : vector<48x128xf32>
    %cst_61 = arith.constant 5.000000e-01 : f32
    %149 = vector.broadcast %cst_61 : f32 to vector<48x128xf32>
    %150 = arith.mulf %149, %148 : vector<48x128xf32>
    %cst_62 = arith.constant 4.471500e-02 : f32
    %151 = vector.broadcast %cst_62 : f32 to vector<48x128xf32>
    %152 = arith.mulf %151, %148 : vector<48x128xf32>
    %153 = arith.mulf %152, %148 : vector<48x128xf32>
    %154 = arith.mulf %153, %148 : vector<48x128xf32>
    %155 = arith.addf %148, %154 : vector<48x128xf32>
    %cst_63 = arith.constant 0.797884583 : f32
    %156 = vector.broadcast %cst_63 : f32 to vector<48x128xf32>
    %157 = arith.mulf %156, %155 : vector<48x128xf32>
    %158 = math.tanh %157 : vector<48x128xf32>
    %cst_64 = arith.constant 1.000000e+00 : f32
    %159 = vector.broadcast %cst_64 : f32 to vector<48x128xf32>
    %160 = arith.addf %159, %158 : vector<48x128xf32>
    %161 = arith.mulf %150, %160 : vector<48x128xf32>
    %162 = arith.truncf %161 : vector<48x128xf32> to vector<48x128xbf16>
    %c0_65 = arith.constant 0 : index
    %c0_66 = arith.constant 0 : index
    %c0_67 = arith.constant 0 : index
    %163 = vector.load %arg11[%c0_65, %c0_66, %c0_67] : memref<2x128x32xbf16, #tpu.memory_space<vmem>>, vector<1x128x32xbf16>
    %164 = vector.shape_cast %163 : vector<1x128x32xbf16> to vector<128x32xbf16>
    %cst_68 = arith.constant dense<0.000000e+00> : vector<48x32xf32>
    %165 = tpu.matmul %162, %164, %cst_68 {dimension_numbers = #tpu.dot_dimension_numbers<[1], [0], [0], [1], [0, 0, 1, 1], [], []>} : vector<48x128xbf16>, vector<128x32xbf16>, vector<48x32xf32> -> vector<48x32xf32>
    %166 = arith.addf %124, %165 : vector<48x32xf32>
    %c0_69 = arith.constant 0 : index
    %c0_70 = arith.constant 0 : index
    %c0_71 = arith.constant 0 : index
    %167 = vector.load %arg12[%c0_69, %c0_70, %c0_71] : memref<2x1x32xf32, #tpu.memory_space<vmem>>, vector<1x1x32xf32>
    %168 = vector.shape_cast %167 : vector<1x1x32xf32> to vector<1x32xf32>
    %169 = vector.broadcast %168 : vector<1x32xf32> to vector<48x32xf32>
    %170 = arith.addf %166, %169 : vector<48x32xf32>
    %cst_72 = arith.constant dense<0.000000e+00> : vector<48xf32>
    %171 = vector.multi_reduction <add>, %170, %cst_72 [1] : vector<48x32xf32> to vector<48xf32>
    %172 = vector.shape_cast %171 : vector<48xf32> to vector<48x1xf32>
    %cst_73 = arith.constant 3.200000e+01 : f32
    %173 = vector.broadcast %cst_73 : f32 to vector<48x1xf32>
    %174 = arith.divf %172, %173 : vector<48x1xf32>
    %175 = vector.broadcast %174 : vector<48x1xf32> to vector<48x32xf32>
    %176 = arith.subf %170, %175 : vector<48x32xf32>
    %177 = arith.mulf %176, %176 : vector<48x32xf32>
    %cst_74 = arith.constant dense<0.000000e+00> : vector<48xf32>
    %178 = vector.multi_reduction <add>, %177, %cst_74 [1] : vector<48x32xf32> to vector<48xf32>
    %179 = vector.shape_cast %178 : vector<48xf32> to vector<48x1xf32>
    %cst_75 = arith.constant 3.200000e+01 : f32
    %180 = vector.broadcast %cst_75 : f32 to vector<48x1xf32>
    %181 = arith.divf %179, %180 : vector<48x1xf32>
    %cst_76 = arith.constant 9.99999997E-7 : f32
    %182 = vector.broadcast %cst_76 : f32 to vector<48x1xf32>
    %183 = arith.addf %181, %182 : vector<48x1xf32>
    %184 = math.rsqrt %183 : vector<48x1xf32>
    %185 = vector.broadcast %184 : vector<48x1xf32> to vector<48x32xf32>
    %186 = arith.mulf %176, %185 : vector<48x32xf32>
    %187 = arith.truncf %186 : vector<48x32xf32> to vector<48x32xbf16>
    %c1 = arith.constant 1 : index
    %c0_77 = arith.constant 0 : index
    %c0_78 = arith.constant 0 : index
    %188 = vector.load %arg5[%c1, %c0_77, %c0_78] : memref<2x32x96xbf16, #tpu.memory_space<vmem>>, vector<1x32x96xbf16>
    %189 = vector.shape_cast %188 : vector<1x32x96xbf16> to vector<32x96xbf16>
    %cst_79 = arith.constant dense<0.000000e+00> : vector<48x96xf32>
    %190 = tpu.matmul %187, %189, %cst_79 {dimension_numbers = #tpu.dot_dimension_numbers<[1], [0], [0], [1], [0, 0, 1, 1], [], []>} : vector<48x32xbf16>, vector<32x96xbf16>, vector<48x96xf32> -> vector<48x96xf32>
    %c1_80 = arith.constant 1 : index
    %c0_81 = arith.constant 0 : index
    %c0_82 = arith.constant 0 : index
    %191 = vector.load %arg6[%c1_80, %c0_81, %c0_82] : memref<2x1x96xf32, #tpu.memory_space<vmem>>, vector<1x1x96xf32>
    %192 = vector.shape_cast %191 : vector<1x1x96xf32> to vector<1x96xf32>
    %193 = vector.broadcast %192 : vector<1x96xf32> to vector<48x96xf32>
    %194 = arith.addf %190, %193 : vector<48x96xf32>
    %195 = vector.extract_strided_slice %194 {offsets = [0, 0], sizes = [48, 8], strides = [1, 1]} : vector<48x96xf32> to vector<48x8xf32>
    %196 = arith.truncf %195 : vector<48x8xf32> to vector<48x8xbf16>
    %197 = vector.extract_strided_slice %194 {offsets = [0, 32], sizes = [48, 8], strides = [1, 1]} : vector<48x96xf32> to vector<48x8xf32>
    %198 = arith.truncf %197 : vector<48x8xf32> to vector<48x8xbf16>
    %199 = vector.extract_strided_slice %194 {offsets = [0, 64], sizes = [48, 8], strides = [1, 1]} : vector<48x96xf32> to vector<48x8xf32>
    %200 = arith.truncf %199 : vector<48x8xf32> to vector<48x8xbf16>
    %cst_83 = arith.constant dense<0.000000e+00> : vector<48x48xf32>
    %201 = tpu.matmul %196, %198, %cst_83 {dimension_numbers = #tpu.dot_dimension_numbers<[1], [1], [0], [0], [0, 0, 1, 0], [], []>} : vector<48x8xbf16>, vector<48x8xbf16>, vector<48x48xf32> -> vector<48x48xf32>
    %202 = arith.addf %201, %6 : vector<48x48xf32>
    %cst_84 = arith.constant dense<0xFF800000> : vector<48xf32>
    %203 = vector.multi_reduction <maximumf>, %202, %cst_84 [1] : vector<48x48xf32> to vector<48xf32>
    %204 = vector.shape_cast %203 : vector<48xf32> to vector<48x1xf32>
    %205 = vector.broadcast %204 : vector<48x1xf32> to vector<48x48xf32>
    %206 = arith.subf %202, %205 : vector<48x48xf32>
    %207 = math.exp %206 : vector<48x48xf32>
    %cst_85 = arith.constant dense<0.000000e+00> : vector<48xf32>
    %208 = vector.multi_reduction <add>, %207, %cst_85 [1] : vector<48x48xf32> to vector<48xf32>
    %209 = vector.shape_cast %208 : vector<48xf32> to vector<48x1xf32>
    %210 = tpu.reciprocal %209 {approx = true} : vector<48x1xf32> -> vector<48x1xf32>
    %211 = vector.broadcast %210 : vector<48x1xf32> to vector<48x48xf32>
    %212 = arith.mulf %207, %211 : vector<48x48xf32>
    %213 = arith.truncf %212 : vector<48x48xf32> to vector<48x48xbf16>
    %cst_86 = arith.constant dense<0.000000e+00> : vector<48x8xf32>
    %214 = tpu.matmul %213, %200, %cst_86 {dimension_numbers = #tpu.dot_dimension_numbers<[1], [0], [0], [1], [0, 0, 1, 1], [], []>} : vector<48x48xbf16>, vector<48x8xbf16>, vector<48x8xf32> -> vector<48x8xf32>
    %c0_87 = arith.constant 0 : index
    %c0_88 = arith.constant 0 : index
    %215 = vector.load %arg18[%c0_87, %c0_88] : memref<48x32xf32, #tpu.memory_space<vmem>>, vector<48x8xf32>
    tpu.vector_store %arg18[%c0_87, %c0_88], %214 {strides = array<i32>} : memref<48x32xf32, #tpu.memory_space<vmem>>, vector<48x8xf32>,
    %216 = vector.extract_strided_slice %194 {offsets = [0, 8], sizes = [48, 8], strides = [1, 1]} : vector<48x96xf32> to vector<48x8xf32>
    %217 = arith.truncf %216 : vector<48x8xf32> to vector<48x8xbf16>
    %218 = vector.extract_strided_slice %194 {offsets = [0, 40], sizes = [48, 8], strides = [1, 1]} : vector<48x96xf32> to vector<48x8xf32>
    %219 = arith.truncf %218 : vector<48x8xf32> to vector<48x8xbf16>
    %220 = vector.extract_strided_slice %194 {offsets = [0, 72], sizes = [48, 8], strides = [1, 1]} : vector<48x96xf32> to vector<48x8xf32>
    %221 = arith.truncf %220 : vector<48x8xf32> to vector<48x8xbf16>
    %cst_89 = arith.constant dense<0.000000e+00> : vector<48x48xf32>
    %222 = tpu.matmul %217, %219, %cst_89 {dimension_numbers = #tpu.dot_dimension_numbers<[1], [1], [0], [0], [0, 0, 1, 0], [], []>} : vector<48x8xbf16>, vector<48x8xbf16>, vector<48x48xf32> -> vector<48x48xf32>
    %223 = arith.addf %222, %6 : vector<48x48xf32>
    %cst_90 = arith.constant dense<0xFF800000> : vector<48xf32>
    %224 = vector.multi_reduction <maximumf>, %223, %cst_90 [1] : vector<48x48xf32> to vector<48xf32>
    %225 = vector.shape_cast %224 : vector<48xf32> to vector<48x1xf32>
    %226 = vector.broadcast %225 : vector<48x1xf32> to vector<48x48xf32>
    %227 = arith.subf %223, %226 : vector<48x48xf32>
    %228 = math.exp %227 : vector<48x48xf32>
    %cst_91 = arith.constant dense<0.000000e+00> : vector<48xf32>
    %229 = vector.multi_reduction <add>, %228, %cst_91 [1] : vector<48x48xf32> to vector<48xf32>
    %230 = vector.shape_cast %229 : vector<48xf32> to vector<48x1xf32>
    %231 = tpu.reciprocal %230 {approx = true} : vector<48x1xf32> -> vector<48x1xf32>
    %232 = vector.broadcast %231 : vector<48x1xf32> to vector<48x48xf32>
    %233 = arith.mulf %228, %232 : vector<48x48xf32>
    %234 = arith.truncf %233 : vector<48x48xf32> to vector<48x48xbf16>
    %cst_92 = arith.constant dense<0.000000e+00> : vector<48x8xf32>
    %235 = tpu.matmul %234, %221, %cst_92 {dimension_numbers = #tpu.dot_dimension_numbers<[1], [0], [0], [1], [0, 0, 1, 1], [], []>} : vector<48x48xbf16>, vector<48x8xbf16>, vector<48x8xf32> -> vector<48x8xf32>
    %c0_93 = arith.constant 0 : index
    %c8_94 = arith.constant 8 : index
    %236 = vector.load %arg18[%c0_93, %c8_94] : memref<48x32xf32, #tpu.memory_space<vmem>>, vector<48x8xf32>
    tpu.vector_store %arg18[%c0_93, %c8_94], %235 {strides = array<i32>} : memref<48x32xf32, #tpu.memory_space<vmem>>, vector<48x8xf32>,
    %237 = vector.extract_strided_slice %194 {offsets = [0, 16], sizes = [48, 8], strides = [1, 1]} : vector<48x96xf32> to vector<48x8xf32>
    %238 = arith.truncf %237 : vector<48x8xf32> to vector<48x8xbf16>
    %239 = vector.extract_strided_slice %194 {offsets = [0, 48], sizes = [48, 8], strides = [1, 1]} : vector<48x96xf32> to vector<48x8xf32>
    %240 = arith.truncf %239 : vector<48x8xf32> to vector<48x8xbf16>
    %241 = vector.extract_strided_slice %194 {offsets = [0, 80], sizes = [48, 8], strides = [1, 1]} : vector<48x96xf32> to vector<48x8xf32>
    %242 = arith.truncf %241 : vector<48x8xf32> to vector<48x8xbf16>
    %cst_95 = arith.constant dense<0.000000e+00> : vector<48x48xf32>
    %243 = tpu.matmul %238, %240, %cst_95 {dimension_numbers = #tpu.dot_dimension_numbers<[1], [1], [0], [0], [0, 0, 1, 0], [], []>} : vector<48x8xbf16>, vector<48x8xbf16>, vector<48x48xf32> -> vector<48x48xf32>
    %244 = arith.addf %243, %6 : vector<48x48xf32>
    %cst_96 = arith.constant dense<0xFF800000> : vector<48xf32>
    %245 = vector.multi_reduction <maximumf>, %244, %cst_96 [1] : vector<48x48xf32> to vector<48xf32>
    %246 = vector.shape_cast %245 : vector<48xf32> to vector<48x1xf32>
    %247 = vector.broadcast %246 : vector<48x1xf32> to vector<48x48xf32>
    %248 = arith.subf %244, %247 : vector<48x48xf32>
    %249 = math.exp %248 : vector<48x48xf32>
    %cst_97 = arith.constant dense<0.000000e+00> : vector<48xf32>
    %250 = vector.multi_reduction <add>, %249, %cst_97 [1] : vector<48x48xf32> to vector<48xf32>
    %251 = vector.shape_cast %250 : vector<48xf32> to vector<48x1xf32>
    %252 = tpu.reciprocal %251 {approx = true} : vector<48x1xf32> -> vector<48x1xf32>
    %253 = vector.broadcast %252 : vector<48x1xf32> to vector<48x48xf32>
    %254 = arith.mulf %249, %253 : vector<48x48xf32>
    %255 = arith.truncf %254 : vector<48x48xf32> to vector<48x48xbf16>
    %cst_98 = arith.constant dense<0.000000e+00> : vector<48x8xf32>
    %256 = tpu.matmul %255, %242, %cst_98 {dimension_numbers = #tpu.dot_dimension_numbers<[1], [0], [0], [1], [0, 0, 1, 1], [], []>} : vector<48x48xbf16>, vector<48x8xbf16>, vector<48x8xf32> -> vector<48x8xf32>
    %c0_99 = arith.constant 0 : index
    %c16_100 = arith.constant 16 : index
    %257 = vector.load %arg18[%c0_99, %c16_100] : memref<48x32xf32, #tpu.memory_space<vmem>>, vector<48x8xf32>
    tpu.vector_store %arg18[%c0_99, %c16_100], %256 {strides = array<i32>} : memref<48x32xf32, #tpu.memory_space<vmem>>, vector<48x8xf32>,
    %258 = vector.extract_strided_slice %194 {offsets = [0, 24], sizes = [48, 8], strides = [1, 1]} : vector<48x96xf32> to vector<48x8xf32>
    %259 = arith.truncf %258 : vector<48x8xf32> to vector<48x8xbf16>
    %260 = vector.extract_strided_slice %194 {offsets = [0, 56], sizes = [48, 8], strides = [1, 1]} : vector<48x96xf32> to vector<48x8xf32>
    %261 = arith.truncf %260 : vector<48x8xf32> to vector<48x8xbf16>
    %262 = vector.extract_strided_slice %194 {offsets = [0, 88], sizes = [48, 8], strides = [1, 1]} : vector<48x96xf32> to vector<48x8xf32>
    %263 = arith.truncf %262 : vector<48x8xf32> to vector<48x8xbf16>
    %cst_101 = arith.constant dense<0.000000e+00> : vector<48x48xf32>
    %264 = tpu.matmul %259, %261, %cst_101 {dimension_numbers = #tpu.dot_dimension_numbers<[1], [1], [0], [0], [0, 0, 1, 0], [], []>} : vector<48x8xbf16>, vector<48x8xbf16>, vector<48x48xf32> -> vector<48x48xf32>
    %265 = arith.addf %264, %6 : vector<48x48xf32>
    %cst_102 = arith.constant dense<0xFF800000> : vector<48xf32>
    %266 = vector.multi_reduction <maximumf>, %265, %cst_102 [1] : vector<48x48xf32> to vector<48xf32>
    %267 = vector.shape_cast %266 : vector<48xf32> to vector<48x1xf32>
    %268 = vector.broadcast %267 : vector<48x1xf32> to vector<48x48xf32>
    %269 = arith.subf %265, %268 : vector<48x48xf32>
    %270 = math.exp %269 : vector<48x48xf32>
    %cst_103 = arith.constant dense<0.000000e+00> : vector<48xf32>
    %271 = vector.multi_reduction <add>, %270, %cst_103 [1] : vector<48x48xf32> to vector<48xf32>
    %272 = vector.shape_cast %271 : vector<48xf32> to vector<48x1xf32>
    %273 = tpu.reciprocal %272 {approx = true} : vector<48x1xf32> -> vector<48x1xf32>
    %274 = vector.broadcast %273 : vector<48x1xf32> to vector<48x48xf32>
    %275 = arith.mulf %270, %274 : vector<48x48xf32>
    %276 = arith.truncf %275 : vector<48x48xf32> to vector<48x48xbf16>
    %cst_104 = arith.constant dense<0.000000e+00> : vector<48x8xf32>
    %277 = tpu.matmul %276, %263, %cst_104 {dimension_numbers = #tpu.dot_dimension_numbers<[1], [0], [0], [1], [0, 0, 1, 1], [], []>} : vector<48x48xbf16>, vector<48x8xbf16>, vector<48x8xf32> -> vector<48x8xf32>
    %c0_105 = arith.constant 0 : index
    %c24_106 = arith.constant 24 : index
    %278 = vector.load %arg18[%c0_105, %c24_106] : memref<48x32xf32, #tpu.memory_space<vmem>>, vector<48x8xf32>
    tpu.vector_store %arg18[%c0_105, %c24_106], %277 {strides = array<i32>} : memref<48x32xf32, #tpu.memory_space<vmem>>, vector<48x8xf32>,
    %c0_107 = arith.constant 0 : index
    %c0_108 = arith.constant 0 : index
    %279 = vector.load %arg18[%c0_107, %c0_108] : memref<48x32xf32, #tpu.memory_space<vmem>>, vector<48x32xf32>
    %280 = arith.truncf %279 : vector<48x32xf32> to vector<48x32xbf16>
    %c1_109 = arith.constant 1 : index
    %c0_110 = arith.constant 0 : index
    %c0_111 = arith.constant 0 : index
    %281 = vector.load %arg7[%c1_109, %c0_110, %c0_111] : memref<2x32x32xbf16, #tpu.memory_space<vmem>>, vector<1x32x32xbf16>
    %282 = vector.shape_cast %281 : vector<1x32x32xbf16> to vector<32x32xbf16>
    %cst_112 = arith.constant dense<0.000000e+00> : vector<48x32xf32>
    %283 = tpu.matmul %280, %282, %cst_112 {dimension_numbers = #tpu.dot_dimension_numbers<[1], [0], [0], [1], [0, 0, 1, 1], [], []>} : vector<48x32xbf16>, vector<32x32xbf16>, vector<48x32xf32> -> vector<48x32xf32>
    %284 = arith.addf %170, %283 : vector<48x32xf32>
    %c1_113 = arith.constant 1 : index
    %c0_114 = arith.constant 0 : index
    %c0_115 = arith.constant 0 : index
    %285 = vector.load %arg8[%c1_113, %c0_114, %c0_115] : memref<2x1x32xf32, #tpu.memory_space<vmem>>, vector<1x1x32xf32>
    %286 = vector.shape_cast %285 : vector<1x1x32xf32> to vector<1x32xf32>
    %287 = vector.broadcast %286 : vector<1x32xf32> to vector<48x32xf32>
    %288 = arith.addf %284, %287 : vector<48x32xf32>
    %cst_116 = arith.constant dense<0.000000e+00> : vector<48xf32>
    %289 = vector.multi_reduction <add>, %288, %cst_116 [1] : vector<48x32xf32> to vector<48xf32>
    %290 = vector.shape_cast %289 : vector<48xf32> to vector<48x1xf32>
    %cst_117 = arith.constant 3.200000e+01 : f32
    %291 = vector.broadcast %cst_117 : f32 to vector<48x1xf32>
    %292 = arith.divf %290, %291 : vector<48x1xf32>
    %293 = vector.broadcast %292 : vector<48x1xf32> to vector<48x32xf32>
    %294 = arith.subf %288, %293 : vector<48x32xf32>
    %295 = arith.mulf %294, %294 : vector<48x32xf32>
    %cst_118 = arith.constant dense<0.000000e+00> : vector<48xf32>
    %296 = vector.multi_reduction <add>, %295, %cst_118 [1] : vector<48x32xf32> to vector<48xf32>
    %297 = vector.shape_cast %296 : vector<48xf32> to vector<48x1xf32>
    %cst_119 = arith.constant 3.200000e+01 : f32
    %298 = vector.broadcast %cst_119 : f32 to vector<48x1xf32>
    %299 = arith.divf %297, %298 : vector<48x1xf32>
    %cst_120 = arith.constant 9.99999997E-7 : f32
    %300 = vector.broadcast %cst_120 : f32 to vector<48x1xf32>
    %301 = arith.addf %299, %300 : vector<48x1xf32>
    %302 = math.rsqrt %301 : vector<48x1xf32>
    %303 = vector.broadcast %302 : vector<48x1xf32> to vector<48x32xf32>
    %304 = arith.mulf %294, %303 : vector<48x32xf32>
    %305 = arith.truncf %304 : vector<48x32xf32> to vector<48x32xbf16>
    %c1_121 = arith.constant 1 : index
    %c0_122 = arith.constant 0 : index
    %c0_123 = arith.constant 0 : index
    %306 = vector.load %arg9[%c1_121, %c0_122, %c0_123] : memref<2x32x128xbf16, #tpu.memory_space<vmem>>, vector<1x32x128xbf16>
    %307 = vector.shape_cast %306 : vector<1x32x128xbf16> to vector<32x128xbf16>
    %cst_124 = arith.constant dense<0.000000e+00> : vector<48x128xf32>
    %308 = tpu.matmul %305, %307, %cst_124 {dimension_numbers = #tpu.dot_dimension_numbers<[1], [0], [0], [1], [0, 0, 1, 1], [], []>} : vector<48x32xbf16>, vector<32x128xbf16>, vector<48x128xf32> -> vector<48x128xf32>
    %c1_125 = arith.constant 1 : index
    %c0_126 = arith.constant 0 : index
    %c0_127 = arith.constant 0 : index
    %309 = vector.load %arg10[%c1_125, %c0_126, %c0_127] : memref<2x1x128xf32, #tpu.memory_space<vmem>>, vector<1x1x128xf32>
    %310 = vector.shape_cast %309 : vector<1x1x128xf32> to vector<1x128xf32>
    %311 = vector.broadcast %310 : vector<1x128xf32> to vector<48x128xf32>
    %312 = arith.addf %308, %311 : vector<48x128xf32>
    %cst_128 = arith.constant 5.000000e-01 : f32
    %313 = vector.broadcast %cst_128 : f32 to vector<48x128xf32>
    %314 = arith.mulf %313, %312 : vector<48x128xf32>
    %cst_129 = arith.constant 4.471500e-02 : f32
    %315 = vector.broadcast %cst_129 : f32 to vector<48x128xf32>
    %316 = arith.mulf %315, %312 : vector<48x128xf32>
    %317 = arith.mulf %316, %312 : vector<48x128xf32>
    %318 = arith.mulf %317, %312 : vector<48x128xf32>
    %319 = arith.addf %312, %318 : vector<48x128xf32>
    %cst_130 = arith.constant 0.797884583 : f32
    %320 = vector.broadcast %cst_130 : f32 to vector<48x128xf32>
    %321 = arith.mulf %320, %319 : vector<48x128xf32>
    %322 = math.tanh %321 : vector<48x128xf32>
    %cst_131 = arith.constant 1.000000e+00 : f32
    %323 = vector.broadcast %cst_131 : f32 to vector<48x128xf32>
    %324 = arith.addf %323, %322 : vector<48x128xf32>
    %325 = arith.mulf %314, %324 : vector<48x128xf32>
    %326 = arith.truncf %325 : vector<48x128xf32> to vector<48x128xbf16>
    %c1_132 = arith.constant 1 : index
    %c0_133 = arith.constant 0 : index
    %c0_134 = arith.constant 0 : index
    %327 = vector.load %arg11[%c1_132, %c0_133, %c0_134] : memref<2x128x32xbf16, #tpu.memory_space<vmem>>, vector<1x128x32xbf16>
    %328 = vector.shape_cast %327 : vector<1x128x32xbf16> to vector<128x32xbf16>
    %cst_135 = arith.constant dense<0.000000e+00> : vector<48x32xf32>
    %329 = tpu.matmul %326, %328, %cst_135 {dimension_numbers = #tpu.dot_dimension_numbers<[1], [0], [0], [1], [0, 0, 1, 1], [], []>} : vector<48x128xbf16>, vector<128x32xbf16>, vector<48x32xf32> -> vector<48x32xf32>
    %330 = arith.addf %288, %329 : vector<48x32xf32>
    %c1_136 = arith.constant 1 : index
    %c0_137 = arith.constant 0 : index
    %c0_138 = arith.constant 0 : index
    %331 = vector.load %arg12[%c1_136, %c0_137, %c0_138] : memref<2x1x32xf32, #tpu.memory_space<vmem>>, vector<1x1x32xf32>
    %332 = vector.shape_cast %331 : vector<1x1x32xf32> to vector<1x32xf32>
    %333 = vector.broadcast %332 : vector<1x32xf32> to vector<48x32xf32>
    %334 = arith.addf %330, %333 : vector<48x32xf32>
    %cst_139 = arith.constant dense<0.000000e+00> : vector<48xf32>
    %335 = vector.multi_reduction <add>, %334, %cst_139 [1] : vector<48x32xf32> to vector<48xf32>
    %336 = vector.shape_cast %335 : vector<48xf32> to vector<48x1xf32>
    %cst_140 = arith.constant 3.200000e+01 : f32
    %337 = vector.broadcast %cst_140 : f32 to vector<48x1xf32>
    %338 = arith.divf %336, %337 : vector<48x1xf32>
    %339 = vector.broadcast %338 : vector<48x1xf32> to vector<48x32xf32>
    %340 = arith.subf %334, %339 : vector<48x32xf32>
    %341 = arith.mulf %340, %340 : vector<48x32xf32>
    %cst_141 = arith.constant dense<0.000000e+00> : vector<48xf32>
    %342 = vector.multi_reduction <add>, %341, %cst_141 [1] : vector<48x32xf32> to vector<48xf32>
    %343 = vector.shape_cast %342 : vector<48xf32> to vector<48x1xf32>
    %cst_142 = arith.constant 3.200000e+01 : f32
    %344 = vector.broadcast %cst_142 : f32 to vector<48x1xf32>
    %345 = arith.divf %343, %344 : vector<48x1xf32>
    %cst_143 = arith.constant 9.99999997E-7 : f32
    %346 = vector.broadcast %cst_143 : f32 to vector<48x1xf32>
    %347 = arith.addf %345, %346 : vector<48x1xf32>
    %348 = math.rsqrt %347 : vector<48x1xf32>
    %349 = vector.broadcast %348 : vector<48x1xf32> to vector<48x32xf32>
    %350 = arith.mulf %340, %349 : vector<48x32xf32>
    %351 = arith.truncf %350 : vector<48x32xf32> to vector<48x32xbf16>
    %c0_144 = arith.constant 0 : index
    %c0_145 = arith.constant 0 : index
    %352 = vector.load %arg13[%c0_144, %c0_145] : memref<32x256xbf16, #tpu.memory_space<vmem>>, vector<32x256xbf16>
    %cst_146 = arith.constant dense<0.000000e+00> : vector<48x256xf32>
    %353 = tpu.matmul %351, %352, %cst_146 {dimension_numbers = #tpu.dot_dimension_numbers<[1], [0], [0], [1], [0, 0, 1, 1], [], []>} : vector<48x32xbf16>, vector<32x256xbf16>, vector<48x256xf32> -> vector<48x256xf32>
    %c0_147 = arith.constant 0 : index
    %c0_148 = arith.constant 0 : index
    %354 = vector.load %arg14[%c0_147, %c0_148] : memref<1x256xf32, #tpu.memory_space<vmem>>, vector<1x256xf32>
    %355 = vector.broadcast %354 : vector<1x256xf32> to vector<48x256xf32>
    %356 = arith.addf %353, %355 : vector<48x256xf32>
    %cst_149 = arith.constant 0.000000e+00 : f32
    %357 = vector.broadcast %cst_149 : f32 to vector<48x256xf32>
    %358 = arith.maximumf %356, %357 : vector<48x256xf32>
    %359 = arith.truncf %358 : vector<48x256xf32> to vector<48x256xbf16>
    %c0_150 = arith.constant 0 : index
    %c0_151 = arith.constant 0 : index
    %360 = vector.load %arg15[%c0_150, %c0_151] : memref<256x256xbf16, #tpu.memory_space<vmem>>, vector<256x256xbf16>
    %cst_152 = arith.constant dense<0.000000e+00> : vector<48x256xf32>
    %361 = tpu.matmul %359, %360, %cst_152 {dimension_numbers = #tpu.dot_dimension_numbers<[1], [0], [0], [1], [0, 0, 1, 1], [], []>} : vector<48x256xbf16>, vector<256x256xbf16>, vector<48x256xf32> -> vector<48x256xf32>
    %c0_153 = arith.constant 0 : index
    %c0_154 = arith.constant 0 : index
    %362 = vector.load %arg16[%c0_153, %c0_154] : memref<1x256xf32, #tpu.memory_space<vmem>>, vector<1x256xf32>
    %363 = vector.broadcast %362 : vector<1x256xf32> to vector<48x256xf32>
    %364 = arith.addf %361, %363 : vector<48x256xf32>
    %365 = arith.negf %364 : vector<48x256xf32>
    %366 = math.exp %365 : vector<48x256xf32>
    %cst_155 = arith.constant 1.000000e+00 : f32
    %367 = vector.broadcast %cst_155 : f32 to vector<48x256xf32>
    %368 = arith.addf %367, %366 : vector<48x256xf32>
    %369 = arith.divf %367, %368 : vector<48x256xf32>
    %c0_156 = arith.constant 0 : index
    %c0_157 = arith.constant 0 : index
    %370 = vector.load %arg17[%c0_156, %c0_157] : memref<48x256xf32, #tpu.memory_space<vmem>>, vector<48x256xf32>
    tpu.vector_store %arg17[%c0_156, %c0_157], %369 {strides = array<i32>} : memref<48x256xf32, #tpu.memory_space<vmem>>, vector<48x256xf32>,
    return
  }
  func.func @transform_0(%arg0: i32) -> (i32, i32) {
    %c0_i32 = arith.constant 0 : i32
    %c0_i32_0 = arith.constant 0 : i32
    return %arg0, %c0_i32 : i32, i32
  }
  func.func @transform_1(%arg0: i32) -> (i32, i32) {
    %c0_i32 = arith.constant 0 : i32
    %c0_i32_0 = arith.constant 0 : i32
    %c0_i32_1 = arith.constant 0 : i32
    return %c0_i32, %c0_i32_0 : i32, i32
  }
  func.func @transform_2(%arg0: i32) -> (i32, i32) {
    %c0_i32 = arith.constant 0 : i32
    %c0_i32_0 = arith.constant 0 : i32
    %c0_i32_1 = arith.constant 0 : i32
    return %c0_i32, %c0_i32_0 : i32, i32
  }
  func.func @transform_3(%arg0: i32) -> (i32, i32) {
    %c0_i32 = arith.constant 0 : i32
    %c0_i32_0 = arith.constant 0 : i32
    %c0_i32_1 = arith.constant 0 : i32
    return %c0_i32, %c0_i32_0 : i32, i32
  }
  func.func @transform_4(%arg0: i32) -> (i32, i32, i32) {
    %c0_i32 = arith.constant 0 : i32
    %c0_i32_0 = arith.constant 0 : i32
    %c0_i32_1 = arith.constant 0 : i32
    %c0_i32_2 = arith.constant 0 : i32
    return %c0_i32, %c0_i32_0, %c0_i32_1 : i32, i32, i32
  }
  func.func @transform_5(%arg0: i32) -> (i32, i32, i32) {
    %c0_i32 = arith.constant 0 : i32
    %c0_i32_0 = arith.constant 0 : i32
    %c0_i32_1 = arith.constant 0 : i32
    %c0_i32_2 = arith.constant 0 : i32
    return %c0_i32, %c0_i32_0, %c0_i32_1 : i32, i32, i32
  }
  func.func @transform_6(%arg0: i32) -> (i32, i32, i32) {
    %c0_i32 = arith.constant 0 : i32
    %c0_i32_0 = arith.constant 0 : i32
    %c0_i32_1 = arith.constant 0 : i32
    %c0_i32_2 = arith.constant 0 : i32
    return %c0_i32, %c0_i32_0, %c0_i32_1 : i32, i32, i32
  }
  func.func @transform_7(%arg0: i32) -> (i32, i32, i32) {
    %c0_i32 = arith.constant 0 : i32
    %c0_i32_0 = arith.constant 0 : i32
    %c0_i32_1 = arith.constant 0 : i32
    %c0_i32_2 = arith.constant 0 : i32
    return %c0_i32, %c0_i32_0, %c0_i32_1 : i32, i32, i32
  }
  func.func @transform_8(%arg0: i32) -> (i32, i32, i32) {
    %c0_i32 = arith.constant 0 : i32
    %c0_i32_0 = arith.constant 0 : i32
    %c0_i32_1 = arith.constant 0 : i32
    %c0_i32_2 = arith.constant 0 : i32
    return %c0_i32, %c0_i32_0, %c0_i32_1 : i32, i32, i32
  }
  func.func @transform_9(%arg0: i32) -> (i32, i32, i32) {
    %c0_i32 = arith.constant 0 : i32
    %c0_i32_0 = arith.constant 0 : i32
    %c0_i32_1 = arith.constant 0 : i32
    %c0_i32_2 = arith.constant 0 : i32
    return %c0_i32, %c0_i32_0, %c0_i32_1 : i32, i32, i32
  }
  func.func @transform_10(%arg0: i32) -> (i32, i32, i32) {
    %c0_i32 = arith.constant 0 : i32
    %c0_i32_0 = arith.constant 0 : i32
    %c0_i32_1 = arith.constant 0 : i32
    %c0_i32_2 = arith.constant 0 : i32
    return %c0_i32, %c0_i32_0, %c0_i32_1 : i32, i32, i32
  }
  func.func @transform_11(%arg0: i32) -> (i32, i32, i32) {
    %c0_i32 = arith.constant 0 : i32
    %c0_i32_0 = arith.constant 0 : i32
    %c0_i32_1 = arith.constant 0 : i32
    %c0_i32_2 = arith.constant 0 : i32
    return %c0_i32, %c0_i32_0, %c0_i32_1 : i32, i32, i32
  }
  func.func @transform_12(%arg0: i32) -> (i32, i32) {
    %c0_i32 = arith.constant 0 : i32
    %c0_i32_0 = arith.constant 0 : i32
    %c0_i32_1 = arith.constant 0 : i32
    return %c0_i32, %c0_i32_0 : i32, i32
  }
  func.func @transform_13(%arg0: i32) -> (i32, i32) {
    %c0_i32 = arith.constant 0 : i32
    %c0_i32_0 = arith.constant 0 : i32
    %c0_i32_1 = arith.constant 0 : i32
    return %c0_i32, %c0_i32_0 : i32, i32
  }
  func.func @transform_14(%arg0: i32) -> (i32, i32) {
    %c0_i32 = arith.constant 0 : i32
    %c0_i32_0 = arith.constant 0 : i32
    %c0_i32_1 = arith.constant 0 : i32
    return %c0_i32, %c0_i32_0 : i32, i32
  }
  func.func @transform_15(%arg0: i32) -> (i32, i32) {
    %c0_i32 = arith.constant 0 : i32
    %c0_i32_0 = arith.constant 0 : i32
    %c0_i32_1 = arith.constant 0 : i32
    return %c0_i32, %c0_i32_0 : i32, i32
  }
  func.func @transform_16(%arg0: i32) -> (i32, i32) {
    %c0_i32 = arith.constant 0 : i32
    %c0_i32_0 = arith.constant 0 : i32
    return %arg0, %c0_i32 : i32, i32
  }
}

</mosaic_0001>

<llo_original>
// kernel: forward.1
$region0: #{forward.1}
  #allocation0 [shape = 'u32[]', space=smem, size = 0x4, offset = 0x4, fixed_abs, tag = 'smem constant byte address 0x4 - core index']
  #allocation1 [shape = 'u32[144,128]{1,0:T(1,128)}', space=vmem, size = 0x12000, scoped, tag = 'internal scratch']
  #allocation2 [shape = 'f32[48,32]{1,0:T(8,128)}', space=vmem, size = 0x6000, scoped, tag = 'scratch operand']
  %s0 = inlined_call_operand.vmem [shape: f32[48,48], index: 0, kind: input, shape index: {}]
  %s1 = inlined_call_operand.vmem [shape: f32[48,32], index: 1, kind: input, shape index: {}]
  %s2 = inlined_call_operand.vmem [shape: f32[48,48], index: 2, kind: input, shape index: {}]
  %s3 = inlined_call_operand.vmem [shape: bf16[48,32], index: 3, kind: input, shape index: {}]
  %s4 = inlined_call_operand.vmem [shape: bf16[2,32,96], index: 4, kind: input, shape index: {}]
  %s5 = inlined_call_operand.vmem [shape: f32[2,1,96], index: 5, kind: input, shape index: {}]
  %s6 = inlined_call_operand.vmem [shape: bf16[2,32,32], index: 6, kind: input, shape index: {}]
  %s7 = inlined_call_operand.vmem [shape: f32[2,1,32], index: 7, kind: input, shape index: {}]
  %s8 = inlined_call_operand.vmem [shape: bf16[2,32,128], index: 8, kind: input, shape index: {}]
  %s9 = inlined_call_operand.vmem [shape: f32[2,1,128], index: 9, kind: input, shape index: {}]
  %s10 = inlined_call_operand.vmem [shape: bf16[2,128,32], index: 10, kind: input, shape index: {}]
  %s11 = inlined_call_operand.vmem [shape: f32[2,1,32], index: 11, kind: input, shape index: {}]
  %s12 = inlined_call_operand.vmem [shape: bf16[32,256], index: 12, kind: input, shape index: {}]
  %s13 = inlined_call_operand.vmem [shape: f32[1,256], index: 13, kind: input, shape index: {}]
  %s14 = inlined_call_operand.vmem [shape: bf16[256,256], index: 14, kind: input, shape index: {}]
  %s15 = inlined_call_operand.vmem [shape: f32[1,256], index: 15, kind: input, shape index: {}]
  %s16 = inlined_call_operand.vmem [shape: f32[48,256], index: 16, kind: output, shape index: {}]
  %s17 = sld [smem:[#allocation0]]
  $region74: #{forward.1} parent=0
    _
  %s19 = ssub.s32 1, %s17
  %s20 = scalar_select 0, %s19, %s17
  // Predicated region
  $region2: #{forward.1} parent=0 // pred_check
    _
  $region3: #{forward.1} parent=0 // pred_check_branch
    %22 = sbr.rel (0) target = $region5
  $region4: #{forward.1} parent=0 // pred_region
    _
  $region5: #{forward.1} parent=0 // pred_fallthru
    _
  // Predicated region
  $region6: #{forward.1} parent=0 // pred_check
    _
  $region7: #{forward.1} parent=0 // pred_check_branch
    %24 = sbr.rel (0) target = $region9
  $region8: #{forward.1} parent=0 // pred_region
    _
  $region9: #{forward.1} parent=0 // pred_fallthru
    _
  // Predicated region
  $region10: #{forward.1} parent=0 // pred_check
    _
  $region11: #{forward.1} parent=0 // pred_check_branch
    %26 = sbr.rel (0) target = $region13
  $region12: #{forward.1} parent=0 // pred_region
    _
  $region13: #{forward.1} parent=0 // pred_fallthru
    _
  // Predicated region
  $region14: #{forward.1} parent=0 // pred_check
    _
  $region15: #{forward.1} parent=0 // pred_check_branch
    %28 = sbr.rel (0) target = $region17
  $region16: #{forward.1} parent=0 // pred_region
    _
  $region17: #{forward.1} parent=0 // pred_fallthru
    _
  // Predicated region
  $region18: #{forward.1} parent=0 // pred_check
    _
  $region19: #{forward.1} parent=0 // pred_check_branch
    %30 = sbr.rel (0) target = $region21
  $region20: #{forward.1} parent=0 // pred_region
    _
  $region21: #{forward.1} parent=0 // pred_fallthru
    _
  // Predicated region
  $region22: #{forward.1} parent=0 // pred_check
    _
  $region23: #{forward.1} parent=0 // pred_check_branch
    %32 = sbr.rel (0) target = $region25
  $region24: #{forward.1} parent=0 // pred_region
    _
  $region25: #{forward.1} parent=0 // pred_fallthru
    _
  // Predicated region
  $region26: #{forward.1} parent=0 // pred_check
    _
  $region27: #{forward.1} parent=0 // pred_check_branch
    %34 = sbr.rel (0) target = $region29
  $region28: #{forward.1} parent=0 // pred_region
    _
  $region29: #{forward.1} parent=0 // pred_fallthru
    _
  // Predicated region
  $region30: #{forward.1} parent=0 // pred_check
    _
  $region31: #{forward.1} parent=0 // pred_check_branch
    %36 = sbr.rel (0) target = $region33
  $region32: #{forward.1} parent=0 // pred_region
    _
  $region33: #{forward.1} parent=0 // pred_fallthru
    _
  // Predicated region
  $region34: #{forward.1} parent=0 // pred_check
    _
  $region35: #{forward.1} parent=0 // pred_check_branch
    %38 = sbr.rel (0) target = $region37
  $region36: #{forward.1} parent=0 // pred_region
    _
  $region37: #{forward.1} parent=0 // pred_fallthru
    _
  // Predicated region
  $region38: #{forward.1} parent=0 // pred_check
    _
  $region39: #{forward.1} parent=0 // pred_check_branch
    %40 = sbr.rel (0) target = $region41
  $region40: #{forward.1} parent=0 // pred_region
    _
  $region41: #{forward.1} parent=0 // pred_fallthru
    _
  // Predicated region
  $region42: #{forward.1} parent=0 // pred_check
    _
  $region43: #{forward.1} parent=0 // pred_check_branch
    %42 = sbr.rel (0) target = $region45
  $region44: #{forward.1} parent=0 // pred_region
    _
  $region45: #{forward.1} parent=0 // pred_fallthru
    _
  // Predicated region
  $region46: #{forward.1} parent=0 // pred_check
    _
  $region47: #{forward.1} parent=0 // pred_check_branch
    %44 = sbr.rel (0) target = $region49
  $region48: #{forward.1} parent=0 // pred_region
    _
  $region49: #{forward.1} parent=0 // pred_fallthru
    _
  // Predicated region
  $region50: #{forward.1} parent=0 // pred_check
    _
  $region51: #{forward.1} parent=0 // pred_check_branch
    %46 = sbr.rel (0) target = $region53
  $region52: #{forward.1} parent=0 // pred_region
    _
  $region53: #{forward.1} parent=0 // pred_fallthru
    _
  // Predicated region
  $region54: #{forward.1} parent=0 // pred_check
    _
  $region55: #{forward.1} parent=0 // pred_check_branch
    %48 = sbr.rel (0) target = $region57
  $region56: #{forward.1} parent=0 // pred_region
    _
  $region57: #{forward.1} parent=0 // pred_fallthru
    _
  // Predicated region
  $region58: #{forward.1} parent=0 // pred_check
    _
  $region59: #{forward.1} parent=0 // pred_check_branch
    %50 = sbr.rel (0) target = $region61
  $region60: #{forward.1} parent=0 // pred_region
    _
  $region61: #{forward.1} parent=0 // pred_fallthru
    _
  // Predicated region
  $region62: #{forward.1} parent=0 // pred_check
    _
  $region63: #{forward.1} parent=0 // pred_check_branch
    %52 = sbr.rel (0) target = $region65
  $region64: #{forward.1} parent=0 // pred_region
    _
  $region65: #{forward.1} parent=0 // pred_fallthru
    _
  %v54 = vld [vmem:[%s0] sm:$0xff]
  %v55 = vld [vmem:[%s0 + $0x8] sm:$0xff]
  %v56 = vld [vmem:[%s0 + $0x10] sm:$0xff]
  %v57 = vld [vmem:[%s0 + $0x18] sm:$0xff]
  %v58 = vld [vmem:[%s0 + $0x20] sm:$0xff]
  %v59 = vld [vmem:[%s0 + $0x28] sm:$0xff]
  %v60 = vpack.c.bf16 %v55, %v54
  %v61 = vpack.c.bf16 %v57, %v56
  %v62 = vpack.c.bf16 %v59, %v58
  %v63 = vld [vmem:[%s3] sm:$0xf]
  %v64 = vld [vmem:[%s3 + $0x4] sm:$0xf]
  %v65 = vld [vmem:[%s3 + $0x8] sm:$0xf]
  %v66 = vld [vmem:[%s3 + $0xc] sm:$0xf]
  %v67 = vld [vmem:[%s3 + $0x10] sm:$0xf]
  %v68 = vld [vmem:[%s3 + $0x14] sm:$0xf]
  %v69 = vld [vmem:[%s1] sm:$0xff]
  %v70 = vld [vmem:[%s1 + $0x8] sm:$0xff]
  %v71 = vld [vmem:[%s1 + $0x10] sm:$0xff]
  %v72 = vld [vmem:[%s1 + $0x18] sm:$0xff]
  %v73 = vld [vmem:[%s1 + $0x20] sm:$0xff]
  %v74 = vld [vmem:[%s1 + $0x28] sm:$0xff]
  %v81 = vunpack.c.l.b16 %v63
  %v82 = vunpack.c.l.b16 %v64
  %v83 = vunpack.c.l.b16 %v65
  %v84 = vunpack.c.l.b16 %v66
  %v85 = vunpack.c.l.b16 %v67
  %v86 = vunpack.c.l.b16 %v68
  %v87 = vpack.c.b16 %v82, %v81
  %v88 = vpack.c.b16 %v84, %v83
  %v89 = vpack.c.b16 %v86, %v85
  %vm93 = vcmask 392192
  %v95 = vsel %vm93, %v60, 0
  %v98 = vsel %vm93, %v61, 0
  %v101 = vsel %vm93, %v62, 0
  %103 = vmatprep.subr.bf16.mxu0 0
  %104 = vmatpush1.bf16.msra.mxu0 %v87
  %105 = vmatprep.subr.bf16.mxu0 0
  %106 = vmatpush1.bf16.msra.mxu0 %v88
  %107 = vmatprep.subr.bf16.mxu0 0
  %108 = vmatpush1.bf16.msra.mxu0 %v89
  %109 = vmatprep.subr.bf16.mxu0 0
  %110 = vmatpush1.bf16.msra.mxu0 0
  %111 = vmatprep.subr.bf16.mxu0 0
  %112 = vmatpush1.bf16.msra.mxu0 0
  %113 = vmatprep.subr.bf16.mxu0 0
  %114 = vmatpush1.bf16.msra.mxu0 0
  %115 = vmatprep.subr.bf16.mxu0 0
  %116 = vmatpush1.bf16.msra.mxu0 0
  %117 = vmatprep.subr.bf16.mxu0 0
  %118 = vmatpush1.bf16.msra.mxu0 0
  %119 = vmatprep.subr.bf16.mxu0 0
  %120 = vmatpush1.bf16.msra.mxu0 0
  %121 = vmatprep.subr.bf16.mxu0 0
  %122 = vmatpush1.bf16.msra.mxu0 0
  %123 = vmatprep.subr.bf16.mxu0 0
  %124 = vmatpush1.bf16.msra.mxu0 0
  %125 = vmatprep.subr.bf16.mxu0 0
  %126 = vmatpush1.bf16.msra.mxu0 0
  %127 = vmatprep.subr.bf16.mxu0 0
  %128 = vmatpush1.bf16.msra.mxu0 0
  %129 = vmatprep.subr.bf16.mxu0 0
  %130 = vmatpush1.bf16.msra.mxu0 0
  %131 = vmatprep.subr.bf16.mxu0 0
  %132 = vmatpush1.bf16.msra.mxu0 0
  %133 = vmatprep.subr.bf16.mxu0 0
  %134 = vmatpush1.bf16.msra.mxu0 0
  %135 = vmatprep.mubr.bf16.mxu0 0
  %136 = vmatmul.mubr.bf16.gmra.mrb[0].mxu0 %v95
  %v137 = vpop.f32.mrb[0].mxu0
  %v138 = vadd.f32 %v69, %v137
  %v139 = vpop.f32.mrb[0].mxu0
  %v140 = vpop.f32.mrb[0].mxu0
  %v141 = vadd.f32 %v70, %v140
  %v142 = vpop.f32.mrb[0].mxu0
  %143 = vmatprep.mubr.bf16.mxu0 0
  %144 = vmatmul.mubr.bf16.gmra.mrb[0].mxu0 %v98
  %v145 = vpop.f32.mrb[0].mxu0
  %v146 = vadd.f32 %v71, %v145
  %v147 = vpop.f32.mrb[0].mxu0
  %v148 = vpop.f32.mrb[0].mxu0
  %v149 = vadd.f32 %v72, %v148
  %v150 = vpop.f32.mrb[0].mxu0
  %151 = vmatprep.mubr.bf16.mxu0 0
  %152 = vmatmul.mubr.bf16.gmra.mrb[0].mxu0 %v101
  %v153 = vpop.f32.mrb[0].mxu0
  %v154 = vadd.f32 %v73, %v153
  %v155 = vpop.f32.mrb[0].mxu0
  %v156 = vpop.f32.mrb[0].mxu0
  %v157 = vadd.f32 %v74, %v156
  %v158 = vpop.f32.mrb[0].mxu0
  %159 = vdwg.mxu0
  %v160 = vld [vmem:[%s2] sm:$0xff]
  %v161 = vld [vmem:[%s2 + $0x8] sm:$0xff]
  %v162 = vld [vmem:[%s2 + $0x10] sm:$0xff]
  %v163 = vld [vmem:[%s2 + $0x18] sm:$0xff]
  %v164 = vld [vmem:[%s2 + $0x20] sm:$0xff]
  %v165 = vld [vmem:[%s2 + $0x28] sm:$0xff]
  %vm166 = vcmask 261120
  %v167 = vsel %vm166, %v138, 0.0
  %168 = vadd.xlane.f32.xlu0 %v167
  %v169 = vpop.xlane.xlu0 %168
  %v170 = vsel %vm166, %v141, 0.0
  %171 = vadd.xlane.f32.xlu0 %v170
  %v172 = vpop.xlane.xlu0 %171
  %v173 = vsel %vm166, %v146, 0.0
  %174 = vadd.xlane.f32.xlu0 %v173
  %v175 = vpop.xlane.xlu0 %174
  %v176 = vsel %vm166, %v149, 0.0
  %177 = vadd.xlane.f32.xlu0 %v176
  %v178 = vpop.xlane.xlu0 %177
  %v179 = vsel %vm166, %v154, 0.0
  %180 = vadd.xlane.f32.xlu0 %v179
  %v181 = vpop.xlane.xlu0 %180
  %v182 = vsel %vm166, %v157, 0.0
  %183 = vadd.xlane.f32.xlu0 %v182
  %v184 = vpop.xlane.xlu0 %183
  %v185 = vrcp.pop 32.0
  %v186 = vmul.f32 %v169, %v185
  %v187 = vmul.f32 %v172, %v185
  %v188 = vmul.f32 %v175, %v185
  %v189 = vmul.f32 %v178, %v185
  %v190 = vmul.f32 %v181, %v185
  %v191 = vmul.f32 %v184, %v185
  %v192 = vsub.f32 %v138, %v186
  %v193 = vsub.f32 %v141, %v187
  %v194 = vsub.f32 %v146, %v188
  %v195 = vsub.f32 %v149, %v189
  %v196 = vsub.f32 %v154, %v190
  %v197 = vsub.f32 %v157, %v191
  %v198 = vmul.f32 %v192, %v192
  %v199 = vmul.f32 %v193, %v193
  %v200 = vmul.f32 %v194, %v194
  %v201 = vmul.f32 %v195, %v195
  %v202 = vmul.f32 %v196, %v196
  %v203 = vmul.f32 %v197, %v197
  %v204 = vsel %vm166, %v198, 0.0
  %205 = vadd.xlane.f32.xlu0 %v204
  %v206 = vpop.xlane.xlu0 %205
  %v207 = vsel %vm166, %v199, 0.0
  %208 = vadd.xlane.f32.xlu0 %v207
  %v209 = vpop.xlane.xlu0 %208
  %v210 = vsel %vm166, %v200, 0.0
  %211 = vadd.xlane.f32.xlu0 %v210
  %v212 = vpop.xlane.xlu0 %211
  %v213 = vsel %vm166, %v201, 0.0
  %214 = vadd.xlane.f32.xlu0 %v213
  %v215 = vpop.xlane.xlu0 %214
  %v216 = vsel %vm166, %v202, 0.0
  %217 = vadd.xlane.f32.xlu0 %v216
  %v218 = vpop.xlane.xlu0 %217
  %v219 = vsel %vm166, %v203, 0.0
  %220 = vadd.xlane.f32.xlu0 %v219
  %v221 = vpop.xlane.xlu0 %220
  %v222 = vmul.f32 %v206, %v185
  %v223 = vmul.f32 %v209, %v185
  %v224 = vmul.f32 %v212, %v185
  %v225 = vmul.f32 %v215, %v185
  %v226 = vmul.f32 %v218, %v185
  %v227 = vmul.f32 %v221, %v185
  %v228 = vadd.f32 %v222, 1e-06
  %v229 = vadd.f32 %v223, 1e-06
  %v230 = vadd.f32 %v224, 1e-06
  %v231 = vadd.f32 %v225, 1e-06
  %v232 = vadd.f32 %v226, 1e-06
  %v233 = vadd.f32 %v227, 1e-06
  %v234 = vrsqrt.pop %v228
  %v235 = vrsqrt.pop %v229
  %v236 = vrsqrt.pop %v230
  %v237 = vrsqrt.pop %v231
  %v238 = vrsqrt.pop %v232
  %v239 = vrsqrt.pop %v233
  %v240 = vmul.f32 %v192, %v234
  %v241 = vmul.f32 %v193, %v235
  %v242 = vmul.f32 %v194, %v236
  %v243 = vmul.f32 %v195, %v237
  %v244 = vmul.f32 %v196, %v238
  %v245 = vmul.f32 %v197, %v239
  %v246 = vpack.c.bf16 %v241, %v240
  %v247 = vpack.c.bf16 %v243, %v242
  %v248 = vpack.c.bf16 %v245, %v244
  %v249 = vld [vmem:[%s4] sm:$0xf]
  %v250 = vld [vmem:[%s4 + $0x4] sm:$0xf]
  %v251 = vld [vmem:[%s4 + $0x8] sm:$0xf]
  %v252 = vld [vmem:[%s4 + $0xc] sm:$0xf]
  %v253 = vld [vmem:[%s5] sm:$0x1]
  %v255 = vlaneseq
  %v256 = vshrl.u32 %v255, 7
  %v257 = vsub.s32 0, %v256
  %v258 = vrot.slane %v253, %v257
  %v264 = vunpack.c.l.b16 %v249
  %v265 = vunpack.c.l.b16 %v250
  %v266 = vunpack.c.l.b16 %v251
  %v267 = vunpack.c.l.b16 %v252
  %v268 = vpack.c.b16 %v265, %v264
  %v269 = vpack.c.b16 %v267, %v266
  %v273 = vsel %vm166, %v246, 0
  %v276 = vsel %vm166, %v247, 0
  %v279 = vsel %vm166, %v248, 0
  %281 = vmatprep.subr.bf16.mxu0 0
  %282 = vmatpush1.bf16.msra.mxu0 %v268
  %283 = vmatprep.subr.bf16.mxu0 0
  %284 = vmatpush1.bf16.msra.mxu0 %v269
  %285 = vmatprep.subr.bf16.mxu0 0
  %286 = vmatpush1.bf16.msra.mxu0 0
  %287 = vmatprep.subr.bf16.mxu0 0
  %288 = vmatpush1.bf16.msra.mxu0 0
  %289 = vmatprep.subr.bf16.mxu0 0
  %290 = vmatpush1.bf16.msra.mxu0 0
  %291 = vmatprep.subr.bf16.mxu0 0
  %292 = vmatpush1.bf16.msra.mxu0 0
  %293 = vmatprep.subr.bf16.mxu0 0
  %294 = vmatpush1.bf16.msra.mxu0 0
  %295 = vmatprep.subr.bf16.mxu0 0
  %296 = vmatpush1.bf16.msra.mxu0 0
  %297 = vmatprep.subr.bf16.mxu0 0
  %298 = vmatpush1.bf16.msra.mxu0 0
  %299 = vmatprep.subr.bf16.mxu0 0
  %300 = vmatpush1.bf16.msra.mxu0 0
  %301 = vmatprep.subr.bf16.mxu0 0
  %302 = vmatpush1.bf16.msra.mxu0 0
  %303 = vmatprep.subr.bf16.mxu0 0
  %304 = vmatpush1.bf16.msra.mxu0 0
  %305 = vmatprep.subr.bf16.mxu0 0
  %306 = vmatpush1.bf16.msra.mxu0 0
  %307 = vmatprep.subr.bf16.mxu0 0
  %308 = vmatpush1.bf16.msra.mxu0 0
  %309 = vmatprep.subr.bf16.mxu0 0
  %310 = vmatpush1.bf16.msra.mxu0 0
  %311 = vmatprep.subr.bf16.mxu0 0
  %312 = vmatpush1.bf16.msra.mxu0 0
  %313 = vmatprep.mubr.bf16.mxu0 0
  %314 = vmatmul.mubr.bf16.gmra.mrb[0].mxu0 %v273
  %v315 = vpop.f32.mrb[0].mxu0
  %v316 = vadd.f32 %v258, %v315
  %v317 = vpop.f32.mrb[0].mxu0
  %v318 = vpop.f32.mrb[0].mxu0
  %v319 = vadd.f32 %v258, %v318
  %v320 = vpop.f32.mrb[0].mxu0
  %321 = vmatprep.mubr.bf16.mxu0 0
  %322 = vmatmul.mubr.bf16.gmra.mrb[0].mxu0 %v276
  %v323 = vpop.f32.mrb[0].mxu0
  %v324 = vadd.f32 %v258, %v323
  %v325 = vpop.f32.mrb[0].mxu0
  %v326 = vpop.f32.mrb[0].mxu0
  %v327 = vadd.f32 %v258, %v326
  %v328 = vpop.f32.mrb[0].mxu0
  %329 = vmatprep.mubr.bf16.mxu0 0
  %330 = vmatmul.mubr.bf16.gmra.mrb[0].mxu0 %v279
  %v331 = vpop.f32.mrb[0].mxu0
  %v332 = vadd.f32 %v258, %v331
  %v333 = vpop.f32.mrb[0].mxu0
  %v334 = vpop.f32.mrb[0].mxu0
  %v335 = vadd.f32 %v258, %v334
  %v336 = vpop.f32.mrb[0].mxu0
  %337 = vdwg.mxu0
  %v338 = vpack.c.bf16 %v319, %v316
  %v339 = vpack.c.bf16 %v327, %v324
  %v340 = vpack.c.bf16 %v335, %v332
  %344 = vrot.lane.b32.xlu0 %v338, 96
  %v345 = vpop.permute.xlu0 %344
  %346 = vrot.lane.b32.xlu0 %v339, 96
  %v347 = vpop.permute.xlu0 %346
  %348 = vrot.lane.b32.xlu0 %v340, 96
  %v349 = vpop.permute.xlu0 %348
  %vm350 = vcmask 64512
  %v352 = vsel %vm350, %v338, 0
  %v355 = vsel %vm350, %v339, 0
  %v358 = vsel %vm350, %v340, 0
  %v361 = vsel %vm350, %v345, 0
  %v364 = vsel %vm350, %v347, 0
  %v367 = vsel %vm350, %v349, 0
  %369 = vmatprep.subr.bf16.mxu0 0
  %370 = vmatpush1.bf16.xpose.msra.mxu0 %v361
  %371 = vmatprep.subr.bf16.mxu0 0
  %372 = vmatpush1.bf16.xpose.msra.mxu0 %v364
  %373 = vmatprep.subr.bf16.mxu0 0
  %374 = vmatpush1.bf16.xpose.msra.mxu0 %v367
  %375 = vmatprep.subr.bf16.mxu0 0
  %376 = vmatpush1.bf16.xpose.msra.mxu0 0
  %377 = vmatprep.subr.bf16.mxu0 0
  %378 = vmatpush1.bf16.xpose.msra.mxu0 0
  %379 = vmatprep.subr.bf16.mxu0 0
  %380 = vmatpush1.bf16.xpose.msra.mxu0 0
  %381 = vmatprep.subr.bf16.mxu0 0
  %382 = vmatpush1.bf16.xpose.msra.mxu0 0
  %383 = vmatprep.subr.bf16.mxu0 0
  %384 = vmatpush1.bf16.xpose.msra.mxu0 0
  %385 = vmatprep.subr.bf16.mxu0 0
  %386 = vmatpush1.bf16.xpose.msra.mxu0 0
  %387 = vmatprep.subr.bf16.mxu0 0
  %388 = vmatpush1.bf16.xpose.msra.mxu0 0
  %389 = vmatprep.subr.bf16.mxu0 0
  %390 = vmatpush1.bf16.xpose.msra.mxu0 0
  %391 = vmatprep.subr.bf16.mxu0 0
  %392 = vmatpush1.bf16.xpose.msra.mxu0 0
  %393 = vmatprep.subr.bf16.mxu0 0
  %394 = vmatpush1.bf16.xpose.msra.mxu0 0
  %395 = vmatprep.subr.bf16.mxu0 0
  %396 = vmatpush1.bf16.xpose.msra.mxu0 0
  %397 = vmatprep.subr.bf16.mxu0 0
  %398 = vmatpush1.bf16.xpose.msra.mxu0 0
  %399 = vmatprep.subr.bf16.mxu0 0
  %400 = vmatpush1.bf16.xpose.msra.mxu0 0
  %401 = vmatprep.mubr.bf16.mxu0 0
  %402 = vmatmul.mubr.bf16.gmra.mrb[0].mxu0 %v352
  %v403 = vpop.f32.mrb[0].mxu0
  %v404 = vadd.f32 %v160, %v403
  %v405 = vpop.f32.mrb[0].mxu0
  %v406 = vpop.f32.mrb[0].mxu0
  %v407 = vadd.f32 %v161, %v406
  %v408 = vpop.f32.mrb[0].mxu0
  %409 = vmatprep.mubr.bf16.mxu0 0
  %410 = vmatmul.mubr.bf16.gmra.mrb[0].mxu0 %v355
  %v411 = vpop.f32.mrb[0].mxu0
  %v412 = vadd.f32 %v162, %v411
  %v413 = vpop.f32.mrb[0].mxu0
  %v414 = vpop.f32.mrb[0].mxu0
  %v415 = vadd.f32 %v163, %v414
  %v416 = vpop.f32.mrb[0].mxu0
  %417 = vmatprep.mubr.bf16.mxu0 0
  %418 = vmatmul.mubr.bf16.gmra.mrb[0].mxu0 %v358
  %v419 = vpop.f32.mrb[0].mxu0
  %v420 = vadd.f32 %v164, %v419
  %v421 = vpop.f32.mrb[0].mxu0
  %v422 = vpop.f32.mrb[0].mxu0
  %v423 = vadd.f32 %v165, %v422
  %v424 = vpop.f32.mrb[0].mxu0
  %425 = vdwg.mxu0
  %v426 = vsel %vm93, %v404, -inf
  %427 = vmax.xlane.f32.xlu0 %v426
  %v428 = vpop.xlane.xlu0 %427
  %v429 = vsel %vm93, %v407, -inf
  %430 = vmax.xlane.f32.xlu0 %v429
  %v431 = vpop.xlane.xlu0 %430
  %v432 = vsel %vm93, %v412, -inf
  %433 = vmax.xlane.f32.xlu0 %v432
  %v434 = vpop.xlane.xlu0 %433
  %v435 = vsel %vm93, %v415, -inf
  %436 = vmax.xlane.f32.xlu0 %v435
  %v437 = vpop.xlane.xlu0 %436
  %v438 = vsel %vm93, %v420, -inf
  %439 = vmax.xlane.f32.xlu0 %v438
  %v440 = vpop.xlane.xlu0 %439
  %v441 = vsel %vm93, %v423, -inf
  %442 = vmax.xlane.f32.xlu0 %v441
  %v443 = vpop.xlane.xlu0 %442
  %v444 = vsub.f32 %v404, %v428
  %v445 = vsub.f32 %v407, %v431
  %v446 = vsub.f32 %v412, %v434
  %v447 = vsub.f32 %v415, %v437
  %v448 = vsub.f32 %v420, %v440
  %v449 = vsub.f32 %v423, %v443
  %v450 = vmul.f32 %v444, 1.442695
  %v451 = vpow.pop %v450
  %v452 = vmul.f32 %v445, 1.442695
  %v453 = vpow.pop %v452
  %v454 = vmul.f32 %v446, 1.442695
  %v455 = vpow.pop %v454
  %v456 = vmul.f32 %v447, 1.442695
  %v457 = vpow.pop %v456
  %v458 = vmul.f32 %v448, 1.442695
  %v459 = vpow.pop %v458
  %v460 = vmul.f32 %v449, 1.442695
  %v461 = vpow.pop %v460
  %v462 = vsel %vm93, %v451, 0.0
  %463 = vadd.xlane.f32.xlu0 %v462
  %v464 = vpop.xlane.xlu0 %463
  %v465 = vsel %vm93, %v453, 0.0
  %466 = vadd.xlane.f32.xlu0 %v465
  %v467 = vpop.xlane.xlu0 %466
  %v468 = vsel %vm93, %v455, 0.0
  %469 = vadd.xlane.f32.xlu0 %v468
  %v470 = vpop.xlane.xlu0 %469
  %v471 = vsel %vm93, %v457, 0.0
  %472 = vadd.xlane.f32.xlu0 %v471
  %v473 = vpop.xlane.xlu0 %472
  %v474 = vsel %vm93, %v459, 0.0
  %475 = vadd.xlane.f32.xlu0 %v474
  %v476 = vpop.xlane.xlu0 %475
  %v477 = vsel %vm93, %v461, 0.0
  %478 = vadd.xlane.f32.xlu0 %v477
  %v479 = vpop.xlane.xlu0 %478
  %v480 = vrcp.pop %v464
  %v481 = vrcp.pop %v467
  %v482 = vrcp.pop %v470
  %v483 = vrcp.pop %v473
  %v484 = vrcp.pop %v476
  %v485 = vrcp.pop %v479
  %v486 = vmul.f32 %v451, %v480
  %v487 = vmul.f32 %v453, %v481
  %v488 = vmul.f32 %v455, %v482
  %v489 = vmul.f32 %v457, %v483
  %v490 = vmul.f32 %v459, %v484
  %v491 = vmul.f32 %v461, %v485
  %v492 = vpack.c.bf16 %v487, %v486
  %v493 = vpack.c.bf16 %v489, %v488
  %v494 = vpack.c.bf16 %v491, %v490
  %495 = vrot.lane.b32.xlu0 %v338, 64
  %v496 = vpop.permute.xlu0 %495
  %497 = vrot.lane.b32.xlu0 %v339, 64
  %v498 = vpop.permute.xlu0 %497
  %499 = vrot.lane.b32.xlu0 %v340, 64
  %v500 = vpop.permute.xlu0 %499
  %v505 = vsel %vm93, %v492, 0
  %v508 = vsel %vm93, %v493, 0
  %v511 = vsel %vm93, %v494, 0
  %513 = vmatprep.subr.bf16.mxu0 0
  %514 = vmatpush1.bf16.msra.mxu0 %v496
  %515 = vmatprep.subr.bf16.mxu0 0
  %516 = vmatpush1.bf16.msra.mxu0 %v498
  %517 = vmatprep.subr.bf16.mxu0 0
  %518 = vmatpush1.bf16.msra.mxu0 %v500
  %519 = vmatprep.subr.bf16.mxu0 0
  %520 = vmatpush1.bf16.msra.mxu0 0
  %521 = vmatprep.subr.bf16.mxu0 0
  %522 = vmatpush1.bf16.msra.mxu0 0
  %523 = vmatprep.subr.bf16.mxu0 0
  %524 = vmatpush1.bf16.msra.mxu0 0
  %525 = vmatprep.subr.bf16.mxu0 0
  %526 = vmatpush1.bf16.msra.mxu0 0
  %527 = vmatprep.subr.bf16.mxu0 0
  %528 = vmatpush1.bf16.msra.mxu0 0
  %529 = vmatprep.subr.bf16.mxu0 0
  %530 = vmatpush1.bf16.msra.mxu0 0
  %531 = vmatprep.subr.bf16.mxu0 0
  %532 = vmatpush1.bf16.msra.mxu0 0
  %533 = vmatprep.subr.bf16.mxu0 0
  %534 = vmatpush1.bf16.msra.mxu0 0
  %535 = vmatprep.subr.bf16.mxu0 0
  %536 = vmatpush1.bf16.msra.mxu0 0
  %537 = vmatprep.subr.bf16.mxu0 0
  %538 = vmatpush1.bf16.msra.mxu0 0
  %539 = vmatprep.subr.bf16.mxu0 0
  %540 = vmatpush1.bf16.msra.mxu0 0
  %541 = vmatprep.subr.bf16.mxu0 0
  %542 = vmatpush1.bf16.msra.mxu0 0
  %543 = vmatprep.subr.bf16.mxu0 0
  %544 = vmatpush1.bf16.msra.mxu0 0
  %545 = vmatprep.mubr.bf16.mxu0 0
  %546 = vmatmul.mubr.bf16.gmra.mrb[0].mxu0 %v505
  %v547 = vpop.f32.mrb[0].mxu0
  %v548 = vadd.f32 0.0, %v547
  %v549 = vpop.f32.mrb[0].mxu0
  %v550 = vpop.f32.mrb[0].mxu0
  %v551 = vadd.f32 0.0, %v550
  %v552 = vpop.f32.mrb[0].mxu0
  %553 = vmatprep.mubr.bf16.mxu0 0
  %554 = vmatmul.mubr.bf16.gmra.mrb[0].mxu0 %v508
  %v555 = vpop.f32.mrb[0].mxu0
  %v556 = vadd.f32 0.0, %v555
  %v557 = vpop.f32.mrb[0].mxu0
  %v558 = vpop.f32.mrb[0].mxu0
  %v559 = vadd.f32 0.0, %v558
  %v560 = vpop.f32.mrb[0].mxu0
  %561 = vmatprep.mubr.bf16.mxu0 0
  %562 = vmatmul.mubr.bf16.gmra.mrb[0].mxu0 %v511
  %v563 = vpop.f32.mrb[0].mxu0
  %v564 = vadd.f32 0.0, %v563
  %v565 = vpop.f32.mrb[0].mxu0
  %v566 = vpop.f32.mrb[0].mxu0
  %v567 = vadd.f32 0.0, %v566
  %v568 = vpop.f32.mrb[0].mxu0
  %569 = vdwg.mxu0
  %570 = vst.msk [vmem:[#allocation2] sm:$0xff] %vm350, %v548
  %571 = vst.msk [vmem:[#allocation2 + $0x8] sm:$0xff] %vm350, %v551
  %572 = vst.msk [vmem:[#allocation2 + $0x10] sm:$0xff] %vm350, %v556
  %573 = vst.msk [vmem:[#allocation2 + $0x18] sm:$0xff] %vm350, %v559
  %574 = vst.msk [vmem:[#allocation2 + $0x20] sm:$0xff] %vm350, %v564
  %575 = vst.msk [vmem:[#allocation2 + $0x28] sm:$0xff] %vm350, %v567
  %576 = vrot.lane.b32.xlu0 %v338, 120
  %v577 = vpop.permute.xlu0 %576
  %578 = vrot.lane.b32.xlu0 %v339, 120
  %v579 = vpop.permute.xlu0 %578
  %580 = vrot.lane.b32.xlu0 %v340, 120
  %v581 = vpop.permute.xlu0 %580
  %582 = vrot.lane.b32.xlu0 %v338, 88
  %v583 = vpop.permute.xlu0 %582
  %584 = vrot.lane.b32.xlu0 %v339, 88
  %v585 = vpop.permute.xlu0 %584
  %586 = vrot.lane.b32.xlu0 %v340, 88
  %v587 = vpop.permute.xlu0 %586
  %v589 = vsel %vm350, %v577, 0
  %v592 = vsel %vm350, %v579, 0
  %v595 = vsel %vm350, %v581, 0
  %v598 = vsel %vm350, %v583, 0
  %v601 = vsel %vm350, %v585, 0
  %v604 = vsel %vm350, %v587, 0
  %606 = vmatprep.subr.bf16.mxu0 0
  %607 = vmatpush1.bf16.xpose.msra.mxu0 %v598
  %608 = vmatprep.subr.bf16.mxu0 0
  %609 = vmatpush1.bf16.xpose.msra.mxu0 %v601
  %610 = vmatprep.subr.bf16.mxu0 0
  %611 = vmatpush1.bf16.xpose.msra.mxu0 %v604
  %612 = vmatprep.subr.bf16.mxu0 0
  %613 = vmatpush1.bf16.xpose.msra.mxu0 0
  %614 = vmatprep.subr.bf16.mxu0 0
  %615 = vmatpush1.bf16.xpose.msra.mxu0 0
  %616 = vmatprep.subr.bf16.mxu0 0
  %617 = vmatpush1.bf16.xpose.msra.mxu0 0
  %618 = vmatprep.subr.bf16.mxu0 0
  %619 = vmatpush1.bf16.xpose.msra.mxu0 0
  %620 = vmatprep.subr.bf16.mxu0 0
  %621 = vmatpush1.bf16.xpose.msra.mxu0 0
  %622 = vmatprep.subr.bf16.mxu0 0
  %623 = vmatpush1.bf16.xpose.msra.mxu0 0
  %624 = vmatprep.subr.bf16.mxu0 0
  %625 = vmatpush1.bf16.xpose.msra.mxu0 0
  %626 = vmatprep.subr.bf16.mxu0 0
  %627 = vmatpush1.bf16.xpose.msra.mxu0 0
  %628 = vmatprep.subr.bf16.mxu0 0
  %629 = vmatpush1.bf16.xpose.msra.mxu0 0
  %630 = vmatprep.subr.bf16.mxu0 0
  %631 = vmatpush1.bf16.xpose.msra.mxu0 0
  %632 = vmatprep.subr.bf16.mxu0 0
  %633 = vmatpush1.bf16.xpose.msra.mxu0 0
  %634 = vmatprep.subr.bf16.mxu0 0
  %635 = vmatpush1.bf16.xpose.msra.mxu0 0
  %636 = vmatprep.subr.bf16.mxu0 0
  %637 = vmatpush1.bf16.xpose.msra.mxu0 0
  %638 = vmatprep.mubr.bf16.mxu0 0
  %639 = vmatmul.mubr.bf16.gmra.mrb[0].mxu0 %v589
  %v640 = vpop.f32.mrb[0].mxu0
  %v641 = vadd.f32 %v160, %v640
  %v642 = vpop.f32.mrb[0].mxu0
  %v643 = vpop.f32.mrb[0].mxu0
  %v644 = vadd.f32 %v161, %v643
  %v645 = vpop.f32.mrb[0].mxu0
  %646 = vmatprep.mubr.bf16.mxu0 0
  %647 = vmatmul.mubr.bf16.gmra.mrb[0].mxu0 %v592
  %v648 = vpop.f32.mrb[0].mxu0
  %v649 = vadd.f32 %v162, %v648
  %v650 = vpop.f32.mrb[0].mxu0
  %v651 = vpop.f32.mrb[0].mxu0
  %v652 = vadd.f32 %v163, %v651
  %v653 = vpop.f32.mrb[0].mxu0
  %654 = vmatprep.mubr.bf16.mxu0 0
  %655 = vmatmul.mubr.bf16.gmra.mrb[0].mxu0 %v595
  %v656 = vpop.f32.mrb[0].mxu0
  %v657 = vadd.f32 %v164, %v656
  %v658 = vpop.f32.mrb[0].mxu0
  %v659 = vpop.f32.mrb[0].mxu0
  %v660 = vadd.f32 %v165, %v659
  %v661 = vpop.f32.mrb[0].mxu0
  %662 = vdwg.mxu0
  %v663 = vsel %vm93, %v641, -inf
  %664 = vmax.xlane.f32.xlu0 %v663
  %v665 = vpop.xlane.xlu0 %664
  %v666 = vsel %vm93, %v644, -inf
  %667 = vmax.xlane.f32.xlu0 %v666
  %v668 = vpop.xlane.xlu0 %667
  %v669 = vsel %vm93, %v649, -inf
  %670 = vmax.xlane.f32.xlu0 %v669
  %v671 = vpop.xlane.xlu0 %670
  %v672 = vsel %vm93, %v652, -inf
  %673 = vmax.xlane.f32.xlu0 %v672
  %v674 = vpop.xlane.xlu0 %673
  %v675 = vsel %vm93, %v657, -inf
  %676 = vmax.xlane.f32.xlu0 %v675
  %v677 = vpop.xlane.xlu0 %676
  %v678 = vsel %vm93, %v660, -inf
  %679 = vmax.xlane.f32.xlu0 %v678
  %v680 = vpop.xlane.xlu0 %679
  %v681 = vsub.f32 %v641, %v665
  %v682 = vsub.f32 %v644, %v668
  %v683 = vsub.f32 %v649, %v671
  %v684 = vsub.f32 %v652, %v674
  %v685 = vsub.f32 %v657, %v677
  %v686 = vsub.f32 %v660, %v680
  %v687 = vmul.f32 %v681, 1.442695
  %v688 = vpow.pop %v687
  %v689 = vmul.f32 %v682, 1.442695
  %v690 = vpow.pop %v689
  %v691 = vmul.f32 %v683, 1.442695
  %v692 = vpow.pop %v691
  %v693 = vmul.f32 %v684, 1.442695
  %v694 = vpow.pop %v693
  %v695 = vmul.f32 %v685, 1.442695
  %v696 = vpow.pop %v695
  %v697 = vmul.f32 %v686, 1.442695
  %v698 = vpow.pop %v697
  %v699 = vsel %vm93, %v688, 0.0
  %700 = vadd.xlane.f32.xlu0 %v699
  %v701 = vpop.xlane.xlu0 %700
  %v702 = vsel %vm93, %v690, 0.0
  %703 = vadd.xlane.f32.xlu0 %v702
  %v704 = vpop.xlane.xlu0 %703
  %v705 = vsel %vm93, %v692, 0.0
  %706 = vadd.xlane.f32.xlu0 %v705
  %v707 = vpop.xlane.xlu0 %706
  %v708 = vsel %vm93, %v694, 0.0
  %709 = vadd.xlane.f32.xlu0 %v708
  %v710 = vpop.xlane.xlu0 %709
  %v711 = vsel %vm93, %v696, 0.0
  %712 = vadd.xlane.f32.xlu0 %v711
  %v713 = vpop.xlane.xlu0 %712
  %v714 = vsel %vm93, %v698, 0.0
  %715 = vadd.xlane.f32.xlu0 %v714
  %v716 = vpop.xlane.xlu0 %715
  %v717 = vrcp.pop %v701
  %v718 = vrcp.pop %v704
  %v719 = vrcp.pop %v707
  %v720 = vrcp.pop %v710
  %v721 = vrcp.pop %v713
  %v722 = vrcp.pop %v716
  %v723 = vmul.f32 %v688, %v717
  %v724 = vmul.f32 %v690, %v718
  %v725 = vmul.f32 %v692, %v719
  %v726 = vmul.f32 %v694, %v720
  %v727 = vmul.f32 %v696, %v721
  %v728 = vmul.f32 %v698, %v722
  %v729 = vpack.c.bf16 %v724, %v723
  %v730 = vpack.c.bf16 %v726, %v725
  %v731 = vpack.c.bf16 %v728, %v727
  %732 = vrot.lane.b32.xlu0 %v338, 56
  %v733 = vpop.permute.xlu0 %732
  %734 = vrot.lane.b32.xlu0 %v339, 56
  %v735 = vpop.permute.xlu0 %734
  %736 = vrot.lane.b32.xlu0 %v340, 56
  %v737 = vpop.permute.xlu0 %736
  %v742 = vsel %vm93, %v729, 0
  %v745 = vsel %vm93, %v730, 0
  %v748 = vsel %vm93, %v731, 0
  %750 = vmatprep.subr.bf16.mxu0 0
  %751 = vmatpush1.bf16.msra.mxu0 %v733
  %752 = vmatprep.subr.bf16.mxu0 0
  %753 = vmatpush1.bf16.msra.mxu0 %v735
  %754 = vmatprep.subr.bf16.mxu0 0
  %755 = vmatpush1.bf16.msra.mxu0 %v737
  %756 = vmatprep.subr.bf16.mxu0 0
  %757 = vmatpush1.bf16.msra.mxu0 0
  %758 = vmatprep.subr.bf16.mxu0 0
  %759 = vmatpush1.bf16.msra.mxu0 0
  %760 = vmatprep.subr.bf16.mxu0 0
  %761 = vmatpush1.bf16.msra.mxu0 0
  %762 = vmatprep.subr.bf16.mxu0 0
  %763 = vmatpush1.bf16.msra.mxu0 0
  %764 = vmatprep.subr.bf16.mxu0 0
  %765 = vmatpush1.bf16.msra.mxu0 0
  %766 = vmatprep.subr.bf16.mxu0 0
  %767 = vmatpush1.bf16.msra.mxu0 0
  %768 = vmatprep.subr.bf16.mxu0 0
  %769 = vmatpush1.bf16.msra.mxu0 0
  %770 = vmatprep.subr.bf16.mxu0 0
  %771 = vmatpush1.bf16.msra.mxu0 0
  %772 = vmatprep.subr.bf16.mxu0 0
  %773 = vmatpush1.bf16.msra.mxu0 0
  %774 = vmatprep.subr.bf16.mxu0 0
  %775 = vmatpush1.bf16.msra.mxu0 0
  %776 = vmatprep.subr.bf16.mxu0 0
  %777 = vmatpush1.bf16.msra.mxu0 0
  %778 = vmatprep.subr.bf16.mxu0 0
  %779 = vmatpush1.bf16.msra.mxu0 0
  %780 = vmatprep.subr.bf16.mxu0 0
  %781 = vmatpush1.bf16.msra.mxu0 0
  %782 = vmatprep.mubr.bf16.mxu0 0
  %783 = vmatmul.mubr.bf16.gmra.mrb[0].mxu0 %v742
  %v784 = vpop.f32.mrb[0].mxu0
  %v785 = vadd.f32 0.0, %v784
  %v786 = vpop.f32.mrb[0].mxu0
  %v787 = vpop.f32.mrb[0].mxu0
  %v788 = vadd.f32 0.0, %v787
  %v789 = vpop.f32.mrb[0].mxu0
  %790 = vmatprep.mubr.bf16.mxu0 0
  %791 = vmatmul.mubr.bf16.gmra.mrb[0].mxu0 %v745
  %v792 = vpop.f32.mrb[0].mxu0
  %v793 = vadd.f32 0.0, %v792
  %v794 = vpop.f32.mrb[0].mxu0
  %v795 = vpop.f32.mrb[0].mxu0
  %v796 = vadd.f32 0.0, %v795
  %v797 = vpop.f32.mrb[0].mxu0
  %798 = vmatprep.mubr.bf16.mxu0 0
  %799 = vmatmul.mubr.bf16.gmra.mrb[0].mxu0 %v748
  %v800 = vpop.f32.mrb[0].mxu0
  %v801 = vadd.f32 0.0, %v800
  %v802 = vpop.f32.mrb[0].mxu0
  %v803 = vpop.f32.mrb[0].mxu0
  %v804 = vadd.f32 0.0, %v803
  %v805 = vpop.f32.mrb[0].mxu0
  %806 = vdwg.mxu0
  %813 = vrot.lane.b32.xlu0 %v785, 8
  %v814 = vpop.permute.xlu0 %813
  %815 = vrot.lane.b32.xlu0 %v788, 8
  %v816 = vpop.permute.xlu0 %815
  %817 = vrot.lane.b32.xlu0 %v793, 8
  %v818 = vpop.permute.xlu0 %817
  %819 = vrot.lane.b32.xlu0 %v796, 8
  %v820 = vpop.permute.xlu0 %819
  %821 = vrot.lane.b32.xlu0 %v801, 8
  %v822 = vpop.permute.xlu0 %821
  %823 = vrot.lane.b32.xlu0 %v804, 8
  %v824 = vpop.permute.xlu0 %823
  %vm831 = vcmask 130112
  %832 = vst.msk [vmem:[#allocation2] sm:$0xff] %vm831, %v814
  %833 = vst.msk [vmem:[#allocation2 + $0x8] sm:$0xff] %vm831, %v816
  %834 = vst.msk [vmem:[#allocation2 + $0x10] sm:$0xff] %vm831, %v818
  %835 = vst.msk [vmem:[#allocation2 + $0x18] sm:$0xff] %vm831, %v820
  %836 = vst.msk [vmem:[#allocation2 + $0x20] sm:$0xff] %vm831, %v822
  %837 = vst.msk [vmem:[#allocation2 + $0x28] sm:$0xff] %vm831, %v824
  %838 = vrot.lane.b32.xlu0 %v338, 112
  %v839 = vpop.permute.xlu0 %838
  %840 = vrot.lane.b32.xlu0 %v339, 112
  %v841 = vpop.permute.xlu0 %840
  %842 = vrot.lane.b32.xlu0 %v340, 112
  %v843 = vpop.permute.xlu0 %842
  %844 = vrot.lane.b32.xlu0 %v338, 80
  %v845 = vpop.permute.xlu0 %844
  %846 = vrot.lane.b32.xlu0 %v339, 80
  %v847 = vpop.permute.xlu0 %846
  %848 = vrot.lane.b32.xlu0 %v340, 80
  %v849 = vpop.permute.xlu0 %848
  %v851 = vsel %vm350, %v839, 0
  %v854 = vsel %vm350, %v841, 0
  %v857 = vsel %vm350, %v843, 0
  %v860 = vsel %vm350, %v845, 0
  %v863 = vsel %vm350, %v847, 0
  %v866 = vsel %vm350, %v849, 0
  %868 = vmatprep.subr.bf16.mxu0 0
  %869 = vmatpush1.bf16.xpose.msra.mxu0 %v860
  %870 = vmatprep.subr.bf16.mxu0 0
  %871 = vmatpush1.bf16.xpose.msra.mxu0 %v863
  %872 = vmatprep.subr.bf16.mxu0 0
  %873 = vmatpush1.bf16.xpose.msra.mxu0 %v866
  %874 = vmatprep.subr.bf16.mxu0 0
  %875 = vmatpush1.bf16.xpose.msra.mxu0 0
  %876 = vmatprep.subr.bf16.mxu0 0
  %877 = vmatpush1.bf16.xpose.msra.mxu0 0
  %878 = vmatprep.subr.bf16.mxu0 0
  %879 = vmatpush1.bf16.xpose.msra.mxu0 0
  %880 = vmatprep.subr.bf16.mxu0 0
  %881 = vmatpush1.bf16.xpose.msra.mxu0 0
  %882 = vmatprep.subr.bf16.mxu0 0
  %883 = vmatpush1.bf16.xpose.msra.mxu0 0
  %884 = vmatprep.subr.bf16.mxu0 0
  %885 = vmatpush1.bf16.xpose.msra.mxu0 0
  %886 = vmatprep.subr.bf16.mxu0 0
  %887 = vmatpush1.bf16.xpose.msra.mxu0 0
  %888 = vmatprep.subr.bf16.mxu0 0
  %889 = vmatpush1.bf16.xpose.msra.mxu0 0
  %890 = vmatprep.subr.bf16.mxu0 0
  %891 = vmatpush1.bf16.xpose.msra.mxu0 0
  %892 = vmatprep.subr.bf16.mxu0 0
  %893 = vmatpush1.bf16.xpose.msra.mxu0 0
  %894 = vmatprep.subr.bf16.mxu0 0
  %895 = vmatpush1.bf16.xpose.msra.mxu0 0
  %896 = vmatprep.subr.bf16.mxu0 0
  %897 = vmatpush1.bf16.xpose.msra.mxu0 0
  %898 = vmatprep.subr.bf16.mxu0 0
  %899 = vmatpush1.bf16.xpose.msra.mxu0 0
  %900 = vmatprep.mubr.bf16.mxu0 0
  %901 = vmatmul.mubr.bf16.gmra.mrb[0].mxu0 %v851
  %v902 = vpop.f32.mrb[0].mxu0
  %v903 = vadd.f32 %v160, %v902
  %v904 = vpop.f32.mrb[0].mxu0
  %v905 = vpop.f32.mrb[0].mxu0
  %v906 = vadd.f32 %v161, %v905
  %v907 = vpop.f32.mrb[0].mxu0
  %908 = vmatprep.mubr.bf16.mxu0 0
  %909 = vmatmul.mubr.bf16.gmra.mrb[0].mxu0 %v854
  %v910 = vpop.f32.mrb[0].mxu0
  %v911 = vadd.f32 %v162, %v910
  %v912 = vpop.f32.mrb[0].mxu0
  %v913 = vpop.f32.mrb[0].mxu0
  %v914 = vadd.f32 %v163, %v913
  %v915 = vpop.f32.mrb[0].mxu0
  %916 = vmatprep.mubr.bf16.mxu0 0
  %917 = vmatmul.mubr.bf16.gmra.mrb[0].mxu0 %v857
  %v918 = vpop.f32.mrb[0].mxu0
  %v919 = vadd.f32 %v164, %v918
  %v920 = vpop.f32.mrb[0].mxu0
  %v921 = vpop.f32.mrb[0].mxu0
  %v922 = vadd.f32 %v165, %v921
  %v923 = vpop.f32.mrb[0].mxu0
  %924 = vdwg.mxu0
  %v925 = vsel %vm93, %v903, -inf
  %926 = vmax.xlane.f32.xlu0 %v925
  %v927 = vpop.xlane.xlu0 %926
  %v928 = vsel %vm93, %v906, -inf
  %929 = vmax.xlane.f32.xlu0 %v928
  %v930 = vpop.xlane.xlu0 %929
  %v931 = vsel %vm93, %v911, -inf
  %932 = vmax.xlane.f32.xlu0 %v931
  %v933 = vpop.xlane.xlu0 %932
  %v934 = vsel %vm93, %v914, -inf
  %935 = vmax.xlane.f32.xlu0 %v934
  %v936 = vpop.xlane.xlu0 %935
  %v937 = vsel %vm93, %v919, -inf
  %938 = vmax.xlane.f32.xlu0 %v937
  %v939 = vpop.xlane.xlu0 %938
  %v940 = vsel %vm93, %v922, -inf
  %941 = vmax.xlane.f32.xlu0 %v940
  %v942 = vpop.xlane.xlu0 %941
  %v943 = vsub.f32 %v903, %v927
  %v944 = vsub.f32 %v906, %v930
  %v945 = vsub.f32 %v911, %v933
  %v946 = vsub.f32 %v914, %v936
  %v947 = vsub.f32 %v919, %v939
  %v948 = vsub.f32 %v922, %v942
  %v949 = vmul.f32 %v943, 1.442695
  %v950 = vpow.pop %v949
  %v951 = vmul.f32 %v944, 1.442695
  %v952 = vpow.pop %v951
  %v953 = vmul.f32 %v945, 1.442695
  %v954 = vpow.pop %v953
  %v955 = vmul.f32 %v946, 1.442695
  %v956 = vpow.pop %v955
  %v957 = vmul.f32 %v947, 1.442695
  %v958 = vpow.pop %v957
  %v959 = vmul.f32 %v948, 1.442695
  %v960 = vpow.pop %v959
  %v961 = vsel %vm93, %v950, 0.0
  %962 = vadd.xlane.f32.xlu0 %v961
  %v963 = vpop.xlane.xlu0 %962
  %v964 = vsel %vm93, %v952, 0.0
  %965 = vadd.xlane.f32.xlu0 %v964
  %v966 = vpop.xlane.xlu0 %965
  %v967 = vsel %vm93, %v954, 0.0
  %968 = vadd.xlane.f32.xlu0 %v967
  %v969 = vpop.xlane.xlu0 %968
  %v970 = vsel %vm93, %v956, 0.0
  %971 = vadd.xlane.f32.xlu0 %v970
  %v972 = vpop.xlane.xlu0 %971
  %v973 = vsel %vm93, %v958, 0.0
  %974 = vadd.xlane.f32.xlu0 %v973
  %v975 = vpop.xlane.xlu0 %974
  %v976 = vsel %vm93, %v960, 0.0
  %977 = vadd.xlane.f32.xlu0 %v976
  %v978 = vpop.xlane.xlu0 %977
  %v979 = vrcp.pop %v963
  %v980 = vrcp.pop %v966
  %v981 = vrcp.pop %v969
  %v982 = vrcp.pop %v972
  %v983 = vrcp.pop %v975
  %v984 = vrcp.pop %v978
  %v985 = vmul.f32 %v950, %v979
  %v986 = vmul.f32 %v952, %v980
  %v987 = vmul.f32 %v954, %v981
  %v988 = vmul.f32 %v956, %v982
  %v989 = vmul.f32 %v958, %v983
  %v990 = vmul.f32 %v960, %v984
  %v991 = vpack.c.bf16 %v986, %v985
  %v992 = vpack.c.bf16 %v988, %v987
  %v993 = vpack.c.bf16 %v990, %v989
  %994 = vrot.lane.b32.xlu0 %v338, 48
  %v995 = vpop.permute.xlu0 %994
  %996 = vrot.lane.b32.xlu0 %v339, 48
  %v997 = vpop.permute.xlu0 %996
  %998 = vrot.lane.b32.xlu0 %v340, 48
  %v999 = vpop.permute.xlu0 %998
  %v1004 = vsel %vm93, %v991, 0
  %v1007 = vsel %vm93, %v992, 0
  %v1010 = vsel %vm93, %v993, 0
  %1012 = vmatprep.subr.bf16.mxu0 0
  %1013 = vmatpush1.bf16.msra.mxu0 %v995
  %1014 = vmatprep.subr.bf16.mxu0 0
  %1015 = vmatpush1.bf16.msra.mxu0 %v997
  %1016 = vmatprep.subr.bf16.mxu0 0
  %1017 = vmatpush1.bf16.msra.mxu0 %v999
  %1018 = vmatprep.subr.bf16.mxu0 0
  %1019 = vmatpush1.bf16.msra.mxu0 0
  %1020 = vmatprep.subr.bf16.mxu0 0
  %1021 = vmatpush1.bf16.msra.mxu0 0
  %1022 = vmatprep.subr.bf16.mxu0 0
  %1023 = vmatpush1.bf16.msra.mxu0 0
  %1024 = vmatprep.subr.bf16.mxu0 0
  %1025 = vmatpush1.bf16.msra.mxu0 0
  %1026 = vmatprep.subr.bf16.mxu0 0
  %1027 = vmatpush1.bf16.msra.mxu0 0
  %1028 = vmatprep.subr.bf16.mxu0 0
  %1029 = vmatpush1.bf16.msra.mxu0 0
  %1030 = vmatprep.subr.bf16.mxu0 0
  %1031 = vmatpush1.bf16.msra.mxu0 0
  %1032 = vmatprep.subr.bf16.mxu0 0
  %1033 = vmatpush1.bf16.msra.mxu0 0
  %1034 = vmatprep.subr.bf16.mxu0 0
  %1035 = vmatpush1.bf16.msra.mxu0 0
  %1036 = vmatprep.subr.bf16.mxu0 0
  %1037 = vmatpush1.bf16.msra.mxu0 0
  %1038 = vmatprep.subr.bf16.mxu0 0
  %1039 = vmatpush1.bf16.msra.mxu0 0
  %1040 = vmatprep.subr.bf16.mxu0 0
  %1041 = vmatpush1.bf16.msra.mxu0 0
  %1042 = vmatprep.subr.bf16.mxu0 0
  %1043 = vmatpush1.bf16.msra.mxu0 0
  %1044 = vmatprep.mubr.bf16.mxu0 0
  %1045 = vmatmul.mubr.bf16.gmra.mrb[0].mxu0 %v1004
  %v1046 = vpop.f32.mrb[0].mxu0
  %v1047 = vadd.f32 0.0, %v1046
  %v1048 = vpop.f32.mrb[0].mxu0
  %v1049 = vpop.f32.mrb[0].mxu0
  %v1050 = vadd.f32 0.0, %v1049
  %v1051 = vpop.f32.mrb[0].mxu0
  %1052 = vmatprep.mubr.bf16.mxu0 0
  %1053 = vmatmul.mubr.bf16.gmra.mrb[0].mxu0 %v1007
  %v1054 = vpop.f32.mrb[0].mxu0
  %v1055 = vadd.f32 0.0, %v1054
  %v1056 = vpop.f32.mrb[0].mxu0
  %v1057 = vpop.f32.mrb[0].mxu0
  %v1058 = vadd.f32 0.0, %v1057
  %v1059 = vpop.f32.mrb[0].mxu0
  %1060 = vmatprep.mubr.bf16.mxu0 0
  %1061 = vmatmul.mubr.bf16.gmra.mrb[0].mxu0 %v1010
  %v1062 = vpop.f32.mrb[0].mxu0
  %v1063 = vadd.f32 0.0, %v1062
  %v1064 = vpop.f32.mrb[0].mxu0
  %v1065 = vpop.f32.mrb[0].mxu0
  %v1066 = vadd.f32 0.0, %v1065
  %v1067 = vpop.f32.mrb[0].mxu0
  %1068 = vdwg.mxu0
  %1075 = vrot.lane.b32.xlu0 %v1047, 16
  %v1076 = vpop.permute.xlu0 %1075
  %1077 = vrot.lane.b32.xlu0 %v1050, 16
  %v1078 = vpop.permute.xlu0 %1077
  %1079 = vrot.lane.b32.xlu0 %v1055, 16
  %v1080 = vpop.permute.xlu0 %1079
  %1081 = vrot.lane.b32.xlu0 %v1058, 16
  %v1082 = vpop.permute.xlu0 %1081
  %1083 = vrot.lane.b32.xlu0 %v1063, 16
  %v1084 = vpop.permute.xlu0 %1083
  %1085 = vrot.lane.b32.xlu0 %v1066, 16
  %v1086 = vpop.permute.xlu0 %1085
  %vm1093 = vcmask 195712
  %1094 = vst.msk [vmem:[#allocation2] sm:$0xff] %vm1093, %v1076
  %1095 = vst.msk [vmem:[#allocation2 + $0x8] sm:$0xff] %vm1093, %v1078
  %1096 = vst.msk [vmem:[#allocation2 + $0x10] sm:$0xff] %vm1093, %v1080
  %1097 = vst.msk [vmem:[#allocation2 + $0x18] sm:$0xff] %vm1093, %v1082
  %1098 = vst.msk [vmem:[#allocation2 + $0x20] sm:$0xff] %vm1093, %v1084
  %1099 = vst.msk [vmem:[#allocation2 + $0x28] sm:$0xff] %vm1093, %v1086
  %1100 = vrot.lane.b32.xlu0 %v338, 104
  %v1101 = vpop.permute.xlu0 %1100
  %1102 = vrot.lane.b32.xlu0 %v339, 104
  %v1103 = vpop.permute.xlu0 %1102
  %1104 = vrot.lane.b32.xlu0 %v340, 104
  %v1105 = vpop.permute.xlu0 %1104
  %1106 = vrot.lane.b32.xlu0 %v338, 72
  %v1107 = vpop.permute.xlu0 %1106
  %1108 = vrot.lane.b32.xlu0 %v339, 72
  %v1109 = vpop.permute.xlu0 %1108
  %1110 = vrot.lane.b32.xlu0 %v340, 72
  %v1111 = vpop.permute.xlu0 %1110
  %v1113 = vsel %vm350, %v1101, 0
  %v1116 = vsel %vm350, %v1103, 0
  %v1119 = vsel %vm350, %v1105, 0
  %v1122 = vsel %vm350, %v1107, 0
  %v1125 = vsel %vm350, %v1109, 0
  %v1128 = vsel %vm350, %v1111, 0
  %1130 = vmatprep.subr.bf16.mxu0 0
  %1131 = vmatpush1.bf16.xpose.msra.mxu0 %v1122
  %1132 = vmatprep.subr.bf16.mxu0 0
  %1133 = vmatpush1.bf16.xpose.msra.mxu0 %v1125
  %1134 = vmatprep.subr.bf16.mxu0 0
  %1135 = vmatpush1.bf16.xpose.msra.mxu0 %v1128
  %1136 = vmatprep.subr.bf16.mxu0 0
  %1137 = vmatpush1.bf16.xpose.msra.mxu0 0
  %1138 = vmatprep.subr.bf16.mxu0 0
  %1139 = vmatpush1.bf16.xpose.msra.mxu0 0
  %1140 = vmatprep.subr.bf16.mxu0 0
  %1141 = vmatpush1.bf16.xpose.msra.mxu0 0
  %1142 = vmatprep.subr.bf16.mxu0 0
  %1143 = vmatpush1.bf16.xpose.msra.mxu0 0
  %1144 = vmatprep.subr.bf16.mxu0 0
  %1145 = vmatpush1.bf16.xpose.msra.mxu0 0
  %1146 = vmatprep.subr.bf16.mxu0 0
  %1147 = vmatpush1.bf16.xpose.msra.mxu0 0
  %1148 = vmatprep.subr.bf16.mxu0 0
  %1149 = vmatpush1.bf16.xpose.msra.mxu0 0
  %1150 = vmatprep.subr.bf16.mxu0 0
  %1151 = vmatpush1.bf16.xpose.msra.mxu0 0
  %1152 = vmatprep.subr.bf16.mxu0 0
  %1153 = vmatpush1.bf16.xpose.msra.mxu0 0
  %1154 = vmatprep.subr.bf16.mxu0 0
  %1155 = vmatpush1.bf16.xpose.msra.mxu0 0
  %1156 = vmatprep.subr.bf16.mxu0 0
  %1157 = vmatpush1.bf16.xpose.msra.mxu0 0
  %1158 = vmatprep.subr.bf16.mxu0 0
  %1159 = vmatpush1.bf16.xpose.msra.mxu0 0
  %1160 = vmatprep.subr.bf16.mxu0 0
  %1161 = vmatpush1.bf16.xpose.msra.mxu0 0
  %1162 = vmatprep.mubr.bf16.mxu0 0
  %1163 = vmatmul.mubr.bf16.gmra.mrb[0].mxu0 %v1113
  %v1164 = vpop.f32.mrb[0].mxu0
  %v1165 = vadd.f32 %v160, %v1164
  %v1166 = vpop.f32.mrb[0].mxu0
  %v1167 = vpop.f32.mrb[0].mxu0
  %v1168 = vadd.f32 %v161, %v1167
  %v1169 = vpop.f32.mrb[0].mxu0
  %1170 = vmatprep.mubr.bf16.mxu0 0
  %1171 = vmatmul.mubr.bf16.gmra.mrb[0].mxu0 %v1116
  %v1172 = vpop.f32.mrb[0].mxu0
  %v1173 = vadd.f32 %v162, %v1172
  %v1174 = vpop.f32.mrb[0].mxu0
  %v1175 = vpop.f32.mrb[0].mxu0
  %v1176 = vadd.f32 %v163, %v1175
  %v1177 = vpop.f32.mrb[0].mxu0
  %1178 = vmatprep.mubr.bf16.mxu0 0
  %1179 = vmatmul.mubr.bf16.gmra.mrb[0].mxu0 %v1119
  %v1180 = vpop.f32.mrb[0].mxu0
  %v1181 = vadd.f32 %v164, %v1180
  %v1182 = vpop.f32.mrb[0].mxu0
  %v1183 = vpop.f32.mrb[0].mxu0
  %v1184 = vadd.f32 %v165, %v1183
  %v1185 = vpop.f32.mrb[0].mxu0
  %1186 = vdwg.mxu0
  %v1187 = vsel %vm93, %v1165, -inf
  %1188 = vmax.xlane.f32.xlu0 %v1187
  %v1189 = vpop.xlane.xlu0 %1188
  %v1190 = vsel %vm93, %v1168, -inf
  %1191 = vmax.xlane.f32.xlu0 %v1190
  %v1192 = vpop.xlane.xlu0 %1191
  %v1193 = vsel %vm93, %v1173, -inf
  %1194 = vmax.xlane.f32.xlu0 %v1193
  %v1195 = vpop.xlane.xlu0 %1194
  %v1196 = vsel %vm93, %v1176, -inf
  %1197 = vmax.xlane.f32.xlu0 %v1196
  %v1198 = vpop.xlane.xlu0 %1197
  %v1199 = vsel %vm93, %v1181, -inf
  %1200 = vmax.xlane.f32.xlu0 %v1199
  %v1201 = vpop.xlane.xlu0 %1200
  %v1202 = vsel %vm93, %v1184, -inf
  %1203 = vmax.xlane.f32.xlu0 %v1202
  %v1204 = vpop.xlane.xlu0 %1203
  %v1205 = vsub.f32 %v1165, %v1189
  %v1206 = vsub.f32 %v1168, %v1192
  %v1207 = vsub.f32 %v1173, %v1195
  %v1208 = vsub.f32 %v1176, %v1198
  %v1209 = vsub.f32 %v1181, %v1201
  %v1210 = vsub.f32 %v1184, %v1204
  %v1211 = vmul.f32 %v1205, 1.442695
  %v1212 = vpow.pop %v1211
  %v1213 = vmul.f32 %v1206, 1.442695
  %v1214 = vpow.pop %v1213
  %v1215 = vmul.f32 %v1207, 1.442695
  %v1216 = vpow.pop %v1215
  %v1217 = vmul.f32 %v1208, 1.442695
  %v1218 = vpow.pop %v1217
  %v1219 = vmul.f32 %v1209, 1.442695
  %v1220 = vpow.pop %v1219
  %v1221 = vmul.f32 %v1210, 1.442695
  %v1222 = vpow.pop %v1221
  %v1223 = vsel %vm93, %v1212, 0.0
  %1224 = vadd.xlane.f32.xlu0 %v1223
  %v1225 = vpop.xlane.xlu0 %1224
  %v1226 = vsel %vm93, %v1214, 0.0
  %1227 = vadd.xlane.f32.xlu0 %v1226
  %v1228 = vpop.xlane.xlu0 %1227
  %v1229 = vsel %vm93, %v1216, 0.0
  %1230 = vadd.xlane.f32.xlu0 %v1229
  %v1231 = vpop.xlane.xlu0 %1230
  %v1232 = vsel %vm93, %v1218, 0.0
  %1233 = vadd.xlane.f32.xlu0 %v1232
  %v1234 = vpop.xlane.xlu0 %1233
  %v1235 = vsel %vm93, %v1220, 0.0
  %1236 = vadd.xlane.f32.xlu0 %v1235
  %v1237 = vpop.xlane.xlu0 %1236
  %v1238 = vsel %vm93, %v1222, 0.0
  %1239 = vadd.xlane.f32.xlu0 %v1238
  %v1240 = vpop.xlane.xlu0 %1239
  %v1241 = vrcp.pop %v1225
  %v1242 = vrcp.pop %v1228
  %v1243 = vrcp.pop %v1231
  %v1244 = vrcp.pop %v1234
  %v1245 = vrcp.pop %v1237
  %v1246 = vrcp.pop %v1240
  %v1247 = vmul.f32 %v1212, %v1241
  %v1248 = vmul.f32 %v1214, %v1242
  %v1249 = vmul.f32 %v1216, %v1243
  %v1250 = vmul.f32 %v1218, %v1244
  %v1251 = vmul.f32 %v1220, %v1245
  %v1252 = vmul.f32 %v1222, %v1246
  %v1253 = vpack.c.bf16 %v1248, %v1247
  %v1254 = vpack.c.bf16 %v1250, %v1249
  %v1255 = vpack.c.bf16 %v1252, %v1251
  %1256 = vrot.lane.b32.xlu0 %v338, 40
  %v1257 = vpop.permute.xlu0 %1256
  %1258 = vrot.lane.b32.xlu0 %v339, 40
  %v1259 = vpop.permute.xlu0 %1258
  %1260 = vrot.lane.b32.xlu0 %v340, 40
  %v1261 = vpop.permute.xlu0 %1260
  %v1266 = vsel %vm93, %v1253, 0
  %v1269 = vsel %vm93, %v1254, 0
  %v1272 = vsel %vm93, %v1255, 0
  %1274 = vmatprep.subr.bf16.mxu0 0
  %1275 = vmatpush1.bf16.msra.mxu0 %v1257
  %1276 = vmatprep.subr.bf16.mxu0 0
  %1277 = vmatpush1.bf16.msra.mxu0 %v1259
  %1278 = vmatprep.subr.bf16.mxu0 0
  %1279 = vmatpush1.bf16.msra.mxu0 %v1261
  %1280 = vmatprep.subr.bf16.mxu0 0
  %1281 = vmatpush1.bf16.msra.mxu0 0
  %1282 = vmatprep.subr.bf16.mxu0 0
  %1283 = vmatpush1.bf16.msra.mxu0 0
  %1284 = vmatprep.subr.bf16.mxu0 0
  %1285 = vmatpush1.bf16.msra.mxu0 0
  %1286 = vmatprep.subr.bf16.mxu0 0
  %1287 = vmatpush1.bf16.msra.mxu0 0
  %1288 = vmatprep.subr.bf16.mxu0 0
  %1289 = vmatpush1.bf16.msra.mxu0 0
  %1290 = vmatprep.subr.bf16.mxu0 0
  %1291 = vmatpush1.bf16.msra.mxu0 0
  %1292 = vmatprep.subr.bf16.mxu0 0
  %1293 = vmatpush1.bf16.msra.mxu0 0
  %1294 = vmatprep.subr.bf16.mxu0 0
  %1295 = vmatpush1.bf16.msra.mxu0 0
  %1296 = vmatprep.subr.bf16.mxu0 0
  %1297 = vmatpush1.bf16.msra.mxu0 0
  %1298 = vmatprep.subr.bf16.mxu0 0
  %1299 = vmatpush1.bf16.msra.mxu0 0
  %1300 = vmatprep.subr.bf16.mxu0 0
  %1301 = vmatpush1.bf16.msra.mxu0 0
  %1302 = vmatprep.subr.bf16.mxu0 0
  %1303 = vmatpush1.bf16.msra.mxu0 0
  %1304 = vmatprep.subr.bf16.mxu0 0
  %1305 = vmatpush1.bf16.msra.mxu0 0
  %1306 = vmatprep.mubr.bf16.mxu0 0
  %1307 = vmatmul.mubr.bf16.gmra.mrb[0].mxu0 %v1266
  %v1308 = vpop.f32.mrb[0].mxu0
  %v1309 = vadd.f32 0.0, %v1308
  %v1310 = vpop.f32.mrb[0].mxu0
  %v1311 = vpop.f32.mrb[0].mxu0
  %v1312 = vadd.f32 0.0, %v1311
  %v1313 = vpop.f32.mrb[0].mxu0
  %1314 = vmatprep.mubr.bf16.mxu0 0
  %1315 = vmatmul.mubr.bf16.gmra.mrb[0].mxu0 %v1269
  %v1316 = vpop.f32.mrb[0].mxu0
  %v1317 = vadd.f32 0.0, %v1316
  %v1318 = vpop.f32.mrb[0].mxu0
  %v1319 = vpop.f32.mrb[0].mxu0
  %v1320 = vadd.f32 0.0, %v1319
  %v1321 = vpop.f32.mrb[0].mxu0
  %1322 = vmatprep.mubr.bf16.mxu0 0
  %1323 = vmatmul.mubr.bf16.gmra.mrb[0].mxu0 %v1272
  %v1324 = vpop.f32.mrb[0].mxu0
  %v1325 = vadd.f32 0.0, %v1324
  %v1326 = vpop.f32.mrb[0].mxu0
  %v1327 = vpop.f32.mrb[0].mxu0
  %v1328 = vadd.f32 0.0, %v1327
  %v1329 = vpop.f32.mrb[0].mxu0
  %1330 = vdwg.mxu0
  %1337 = vrot.lane.b32.xlu0 %v1309, 24
  %v1338 = vpop.permute.xlu0 %1337
  %1339 = vrot.lane.b32.xlu0 %v1312, 24
  %v1340 = vpop.permute.xlu0 %1339
  %1341 = vrot.lane.b32.xlu0 %v1317, 24
  %v1342 = vpop.permute.xlu0 %1341
  %1343 = vrot.lane.b32.xlu0 %v1320, 24
  %v1344 = vpop.permute.xlu0 %1343
  %1345 = vrot.lane.b32.xlu0 %v1325, 24
  %v1346 = vpop.permute.xlu0 %1345
  %1347 = vrot.lane.b32.xlu0 %v1328, 24
  %v1348 = vpop.permute.xlu0 %1347
  %vm1355 = vcmask 261312
  %1356 = vst.msk [vmem:[#allocation2] sm:$0xff] %vm1355, %v1338
  %1357 = vst.msk [vmem:[#allocation2 + $0x8] sm:$0xff] %vm1355, %v1340
  %1358 = vst.msk [vmem:[#allocation2 + $0x10] sm:$0xff] %vm1355, %v1342
  %1359 = vst.msk [vmem:[#allocation2 + $0x18] sm:$0xff] %vm1355, %v1344
  %1360 = vst.msk [vmem:[#allocation2 + $0x20] sm:$0xff] %vm1355, %v1346
  %1361 = vst.msk [vmem:[#allocation2 + $0x28] sm:$0xff] %vm1355, %v1348
  %v1362 = vld [vmem:[#allocation2] sm:$0xff]
  %v1363 = vld [vmem:[#allocation2 + $0x8] sm:$0xff]
  %v1364 = vld [vmem:[#allocation2 + $0x10] sm:$0xff]
  %v1365 = vld [vmem:[#allocation2 + $0x18] sm:$0xff]
  %v1366 = vld [vmem:[#allocation2 + $0x20] sm:$0xff]
  %v1367 = vld [vmem:[#allocation2 + $0x28] sm:$0xff]
  %v1368 = vpack.c.bf16 %v1363, %v1362
  %v1369 = vpack.c.bf16 %v1365, %v1364
  %v1370 = vpack.c.bf16 %v1367, %v1366
  %v1371 = vld [vmem:[%s6] sm:$0xf]
  %v1372 = vld [vmem:[%s6 + $0x4] sm:$0xf]
  %v1373 = vld [vmem:[%s6 + $0x8] sm:$0xf]
  %v1374 = vld [vmem:[%s6 + $0xc] sm:$0xf]
  %v1379 = vunpack.c.l.b16 %v1371
  %v1380 = vunpack.c.l.b16 %v1372
  %v1381 = vunpack.c.l.b16 %v1373
  %v1382 = vunpack.c.l.b16 %v1374
  %v1383 = vpack.c.b16 %v1380, %v1379
  %v1384 = vpack.c.b16 %v1382, %v1381
  %v1388 = vsel %vm166, %v1368, 0
  %v1391 = vsel %vm166, %v1369, 0
  %v1394 = vsel %vm166, %v1370, 0
  %1396 = vmatprep.subr.bf16.mxu0 0
  %1397 = vmatpush1.bf16.msra.mxu0 %v1383
  %1398 = vmatprep.subr.bf16.mxu0 0
  %1399 = vmatpush1.bf16.msra.mxu0 %v1384
  %1400 = vmatprep.subr.bf16.mxu0 0
  %1401 = vmatpush1.bf16.msra.mxu0 0
  %1402 = vmatprep.subr.bf16.mxu0 0
  %1403 = vmatpush1.bf16.msra.mxu0 0
  %1404 = vmatprep.subr.bf16.mxu0 0
  %1405 = vmatpush1.bf16.msra.mxu0 0
  %1406 = vmatprep.subr.bf16.mxu0 0
  %1407 = vmatpush1.bf16.msra.mxu0 0
  %1408 = vmatprep.subr.bf16.mxu0 0
  %1409 = vmatpush1.bf16.msra.mxu0 0
  %1410 = vmatprep.subr.bf16.mxu0 0
  %1411 = vmatpush1.bf16.msra.mxu0 0
  %1412 = vmatprep.subr.bf16.mxu0 0
  %1413 = vmatpush1.bf16.msra.mxu0 0
  %1414 = vmatprep.subr.bf16.mxu0 0
  %1415 = vmatpush1.bf16.msra.mxu0 0
  %1416 = vmatprep.subr.bf16.mxu0 0
  %1417 = vmatpush1.bf16.msra.mxu0 0
  %1418 = vmatprep.subr.bf16.mxu0 0
  %1419 = vmatpush1.bf16.msra.mxu0 0
  %1420 = vmatprep.subr.bf16.mxu0 0
  %1421 = vmatpush1.bf16.msra.mxu0 0
  %1422 = vmatprep.subr.bf16.mxu0 0
  %1423 = vmatpush1.bf16.msra.mxu0 0
  %1424 = vmatprep.subr.bf16.mxu0 0
  %1425 = vmatpush1.bf16.msra.mxu0 0
  %1426 = vmatprep.subr.bf16.mxu0 0
  %1427 = vmatpush1.bf16.msra.mxu0 0
  %1428 = vmatprep.mubr.bf16.mxu0 0
  %1429 = vmatmul.mubr.bf16.gmra.mrb[0].mxu0 %v1388
  %v1430 = vpop.f32.mrb[0].mxu0
  %v1431 = vadd.f32 0.0, %v1430
  %v1432 = vpop.f32.mrb[0].mxu0
  %v1433 = vpop.f32.mrb[0].mxu0
  %v1434 = vadd.f32 0.0, %v1433
  %v1435 = vpop.f32.mrb[0].mxu0
  %1436 = vmatprep.mubr.bf16.mxu0 0
  %1437 = vmatmul.mubr.bf16.gmra.mrb[0].mxu0 %v1391
  %v1438 = vpop.f32.mrb[0].mxu0
  %v1439 = vadd.f32 0.0, %v1438
  %v1440 = vpop.f32.mrb[0].mxu0
  %v1441 = vpop.f32.mrb[0].mxu0
  %v1442 = vadd.f32 0.0, %v1441
  %v1443 = vpop.f32.mrb[0].mxu0
  %1444 = vmatprep.mubr.bf16.mxu0 0
  %1445 = vmatmul.mubr.bf16.gmra.mrb[0].mxu0 %v1394
  %v1446 = vpop.f32.mrb[0].mxu0
  %v1447 = vadd.f32 0.0, %v1446
  %v1448 = vpop.f32.mrb[0].mxu0
  %v1449 = vpop.f32.mrb[0].mxu0
  %v1450 = vadd.f32 0.0, %v1449
  %v1451 = vpop.f32.mrb[0].mxu0
  %1452 = vdwg.mxu0
  %v1453 = vadd.f32 %v138, %v1431
  %v1454 = vadd.f32 %v141, %v1434
  %v1455 = vadd.f32 %v146, %v1439
  %v1456 = vadd.f32 %v149, %v1442
  %v1457 = vadd.f32 %v154, %v1447
  %v1458 = vadd.f32 %v157, %v1450
  %v1459 = vld [vmem:[%s7] sm:$0x1]
  %v1461 = vlaneseq
  %v1462 = vshrl.u32 %v1461, 7
  %v1463 = vsub.s32 0, %v1462
  %v1464 = vrot.slane %v1459, %v1463
  %v1466 = vadd.f32 %v1453, %v1464
  %v1467 = vadd.f32 %v1454, %v1464
  %v1468 = vadd.f32 %v1455, %v1464
  %v1469 = vadd.f32 %v1456, %v1464
  %v1470 = vadd.f32 %v1457, %v1464
  %v1471 = vadd.f32 %v1458, %v1464
  %v1472 = vsel %vm166, %v1466, 0.0
  %1473 = vadd.xlane.f32.xlu0 %v1472
  %v1474 = vpop.xlane.xlu0 %1473
  %v1475 = vsel %vm166, %v1467, 0.0
  %1476 = vadd.xlane.f32.xlu0 %v1475
  %v1477 = vpop.xlane.xlu0 %1476
  %v1478 = vsel %vm166, %v1468, 0.0
  %1479 = vadd.xlane.f32.xlu0 %v1478
  %v1480 = vpop.xlane.xlu0 %1479
  %v1481 = vsel %vm166, %v1469, 0.0
  %1482 = vadd.xlane.f32.xlu0 %v1481
  %v1483 = vpop.xlane.xlu0 %1482
  %v1484 = vsel %vm166, %v1470, 0.0
  %1485 = vadd.xlane.f32.xlu0 %v1484
  %v1486 = vpop.xlane.xlu0 %1485
  %v1487 = vsel %vm166, %v1471, 0.0
  %1488 = vadd.xlane.f32.xlu0 %v1487
  %v1489 = vpop.xlane.xlu0 %1488
  %v1490 = vmul.f32 %v1474, %v185
  %v1491 = vmul.f32 %v1477, %v185
  %v1492 = vmul.f32 %v1480, %v185
  %v1493 = vmul.f32 %v1483, %v185
  %v1494 = vmul.f32 %v1486, %v185
  %v1495 = vmul.f32 %v1489, %v185
  %v1496 = vsub.f32 %v1466, %v1490
  %v1497 = vsub.f32 %v1467, %v1491
  %v1498 = vsub.f32 %v1468, %v1492
  %v1499 = vsub.f32 %v1469, %v1493
  %v1500 = vsub.f32 %v1470, %v1494
  %v1501 = vsub.f32 %v1471, %v1495
  %v1502 = vmul.f32 %v1496, %v1496
  %v1503 = vmul.f32 %v1497, %v1497
  %v1504 = vmul.f32 %v1498, %v1498
  %v1505 = vmul.f32 %v1499, %v1499
  %v1506 = vmul.f32 %v1500, %v1500
  %v1507 = vmul.f32 %v1501, %v1501
  %v1508 = vsel %vm166, %v1502, 0.0
  %1509 = vadd.xlane.f32.xlu0 %v1508
  %v1510 = vpop.xlane.xlu0 %1509
  %v1511 = vsel %vm166, %v1503, 0.0
  %1512 = vadd.xlane.f32.xlu0 %v1511
  %v1513 = vpop.xlane.xlu0 %1512
  %v1514 = vsel %vm166, %v1504, 0.0
  %1515 = vadd.xlane.f32.xlu0 %v1514
  %v1516 = vpop.xlane.xlu0 %1515
  %v1517 = vsel %vm166, %v1505, 0.0
  %1518 = vadd.xlane.f32.xlu0 %v1517
  %v1519 = vpop.xlane.xlu0 %1518
  %v1520 = vsel %vm166, %v1506, 0.0
  %1521 = vadd.xlane.f32.xlu0 %v1520
  %v1522 = vpop.xlane.xlu0 %1521
  %v1523 = vsel %vm166, %v1507, 0.0
  %1524 = vadd.xlane.f32.xlu0 %v1523
  %v1525 = vpop.xlane.xlu0 %1524
  %v1526 = vmul.f32 %v1510, %v185
  %v1527 = vmul.f32 %v1513, %v185
  %v1528 = vmul.f32 %v1516, %v185
  %v1529 = vmul.f32 %v1519, %v185
  %v1530 = vmul.f32 %v1522, %v185
  %v1531 = vmul.f32 %v1525, %v185
  %v1532 = vadd.f32 %v1526, 1e-06
  %v1533 = vadd.f32 %v1527, 1e-06
  %v1534 = vadd.f32 %v1528, 1e-06
  %v1535 = vadd.f32 %v1529, 1e-06
  %v1536 = vadd.f32 %v1530, 1e-06
  %v1537 = vadd.f32 %v1531, 1e-06
  %v1538 = vrsqrt.pop %v1532
  %v1539 = vrsqrt.pop %v1533
  %v1540 = vrsqrt.pop %v1534
  %v1541 = vrsqrt.pop %v1535
  %v1542 = vrsqrt.pop %v1536
  %v1543 = vrsqrt.pop %v1537
  %v1544 = vmul.f32 %v1496, %v1538
  %v1545 = vmul.f32 %v1497, %v1539
  %v1546 = vmul.f32 %v1498, %v1540
  %v1547 = vmul.f32 %v1499, %v1541
  %v1548 = vmul.f32 %v1500, %v1542
  %v1549 = vmul.f32 %v1501, %v1543
  %v1550 = vpack.c.bf16 %v1545, %v1544
  %v1551 = vpack.c.bf16 %v1547, %v1546
  %v1552 = vpack.c.bf16 %v1549, %v1548
  %v1553 = vld [vmem:[%s8] sm:$0xf]
  %v1554 = vld [vmem:[%s8 + $0x4] sm:$0xf]
  %v1555 = vld [vmem:[%s8 + $0x8] sm:$0xf]
  %v1556 = vld [vmem:[%s8 + $0xc] sm:$0xf]
  %v1557 = vld [vmem:[%s9] sm:$0x1]
  %v1559 = vlaneseq
  %v1560 = vshrl.u32 %v1559, 7
  %v1561 = vsub.s32 0, %v1560
  %v1562 = vrot.slane %v1557, %v1561
  %v1568 = vunpack.c.l.b16 %v1553
  %v1569 = vunpack.c.l.b16 %v1554
  %v1570 = vunpack.c.l.b16 %v1555
  %v1571 = vunpack.c.l.b16 %v1556
  %v1572 = vpack.c.b16 %v1569, %v1568
  %v1573 = vpack.c.b16 %v1571, %v1570
  %v1577 = vsel %vm166, %v1550, 0
  %v1580 = vsel %vm166, %v1551, 0
  %v1583 = vsel %vm166, %v1552, 0
  %1585 = vmatprep.subr.bf16.mxu0 0
  %1586 = vmatpush1.bf16.msra.mxu0 %v1572
  %1587 = vmatprep.subr.bf16.mxu0 0
  %1588 = vmatpush1.bf16.msra.mxu0 %v1573
  %1589 = vmatprep.subr.bf16.mxu0 0
  %1590 = vmatpush1.bf16.msra.mxu0 0
  %1591 = vmatprep.subr.bf16.mxu0 0
  %1592 = vmatpush1.bf16.msra.mxu0 0
  %1593 = vmatprep.subr.bf16.mxu0 0
  %1594 = vmatpush1.bf16.msra.mxu0 0
  %1595 = vmatprep.subr.bf16.mxu0 0
  %1596 = vmatpush1.bf16.msra.mxu0 0
  %1597 = vmatprep.subr.bf16.mxu0 0
  %1598 = vmatpush1.bf16.msra.mxu0 0
  %1599 = vmatprep.subr.bf16.mxu0 0
  %1600 = vmatpush1.bf16.msra.mxu0 0
  %1601 = vmatprep.subr.bf16.mxu0 0
  %1602 = vmatpush1.bf16.msra.mxu0 0
  %1603 = vmatprep.subr.bf16.mxu0 0
  %1604 = vmatpush1.bf16.msra.mxu0 0
  %1605 = vmatprep.subr.bf16.mxu0 0
  %1606 = vmatpush1.bf16.msra.mxu0 0
  %1607 = vmatprep.subr.bf16.mxu0 0
  %1608 = vmatpush1.bf16.msra.mxu0 0
  %1609 = vmatprep.subr.bf16.mxu0 0
  %1610 = vmatpush1.bf16.msra.mxu0 0
  %1611 = vmatprep.subr.bf16.mxu0 0
  %1612 = vmatpush1.bf16.msra.mxu0 0
  %1613 = vmatprep.subr.bf16.mxu0 0
  %1614 = vmatpush1.bf16.msra.mxu0 0
  %1615 = vmatprep.subr.bf16.mxu0 0
  %1616 = vmatpush1.bf16.msra.mxu0 0
  %1617 = vmatprep.mubr.bf16.mxu0 0
  %1618 = vmatmul.mubr.bf16.gmra.mrb[0].mxu0 %v1577
  %v1619 = vpop.f32.mrb[0].mxu0
  %v1620 = vadd.f32 %v1562, %v1619
  %v1621 = vpop.f32.mrb[0].mxu0
  %v1622 = vpop.f32.mrb[0].mxu0
  %v1623 = vadd.f32 %v1562, %v1622
  %v1624 = vpop.f32.mrb[0].mxu0
  %1625 = vmatprep.mubr.bf16.mxu0 0
  %1626 = vmatmul.mubr.bf16.gmra.mrb[0].mxu0 %v1580
  %v1627 = vpop.f32.mrb[0].mxu0
  %v1628 = vadd.f32 %v1562, %v1627
  %v1629 = vpop.f32.mrb[0].mxu0
  %v1630 = vpop.f32.mrb[0].mxu0
  %v1631 = vadd.f32 %v1562, %v1630
  %v1632 = vpop.f32.mrb[0].mxu0
  %1633 = vmatprep.mubr.bf16.mxu0 0
  %1634 = vmatmul.mubr.bf16.gmra.mrb[0].mxu0 %v1583
  %v1635 = vpop.f32.mrb[0].mxu0
  %v1636 = vadd.f32 %v1562, %v1635
  %v1637 = vpop.f32.mrb[0].mxu0
  %v1638 = vpop.f32.mrb[0].mxu0
  %v1639 = vadd.f32 %v1562, %v1638
  %v1640 = vpop.f32.mrb[0].mxu0
  %1641 = vdwg.mxu0
  %v1642 = vmul.f32 %v1620, 0.5
  %v1643 = vmul.f32 %v1623, 0.5
  %v1644 = vmul.f32 %v1628, 0.5
  %v1645 = vmul.f32 %v1631, 0.5
  %v1646 = vmul.f32 %v1636, 0.5
  %v1647 = vmul.f32 %v1639, 0.5
  %v1648 = vmul.f32 %v1620, 0.044715
  %v1649 = vmul.f32 %v1623, 0.044715
  %v1650 = vmul.f32 %v1628, 0.044715
  %v1651 = vmul.f32 %v1631, 0.044715
  %v1652 = vmul.f32 %v1636, 0.044715
  %v1653 = vmul.f32 %v1639, 0.044715
  %v1654 = vmul.f32 %v1648, %v1620
  %v1655 = vmul.f32 %v1649, %v1623
  %v1656 = vmul.f32 %v1650, %v1628
  %v1657 = vmul.f32 %v1651, %v1631
  %v1658 = vmul.f32 %v1652, %v1636
  %v1659 = vmul.f32 %v1653, %v1639
  %v1660 = vmul.f32 %v1654, %v1620
  %v1661 = vmul.f32 %v1655, %v1623
  %v1662 = vmul.f32 %v1656, %v1628
  %v1663 = vmul.f32 %v1657, %v1631
  %v1664 = vmul.f32 %v1658, %v1636
  %v1665 = vmul.f32 %v1659, %v1639
  %v1666 = vadd.f32 %v1620, %v1660
  %v1667 = vadd.f32 %v1623, %v1661
  %v1668 = vadd.f32 %v1628, %v1662
  %v1669 = vadd.f32 %v1631, %v1663
  %v1670 = vadd.f32 %v1636, %v1664
  %v1671 = vadd.f32 %v1639, %v1665
  %v1672 = vmul.f32 %v1666, 0.7978846
  %v1673 = vmul.f32 %v1667, 0.7978846
  %v1674 = vmul.f32 %v1668, 0.7978846
  %v1675 = vmul.f32 %v1669, 0.7978846
  %v1676 = vmul.f32 %v1670, 0.7978846
  %v1677 = vmul.f32 %v1671, 0.7978846
  %v1678 = vtanh.pop %v1672
  %v1679 = vtanh.pop %v1673
  %v1680 = vtanh.pop %v1674
  %v1681 = vtanh.pop %v1675
  %v1682 = vtanh.pop %v1676
  %v1683 = vtanh.pop %v1677
  %v1684 = vadd.f32 %v1678, 1.0
  %v1685 = vadd.f32 %v1679, 1.0
  %v1686 = vadd.f32 %v1680, 1.0
  %v1687 = vadd.f32 %v1681, 1.0
  %v1688 = vadd.f32 %v1682, 1.0
  %v1689 = vadd.f32 %v1683, 1.0
  %v1690 = vmul.f32 %v1642, %v1684
  %v1691 = vmul.f32 %v1643, %v1685
  %v1692 = vmul.f32 %v1644, %v1686
  %v1693 = vmul.f32 %v1645, %v1687
  %v1694 = vmul.f32 %v1646, %v1688
  %v1695 = vmul.f32 %v1647, %v1689
  %v1696 = vpack.c.bf16 %v1691, %v1690
  %v1697 = vpack.c.bf16 %v1693, %v1692
  %v1698 = vpack.c.bf16 %v1695, %v1694
  %v1699 = vld [vmem:[%s10] sm:$0xf]
  %v1700 = vld [vmem:[%s10 + $0x4] sm:$0xf]
  %v1701 = vld [vmem:[%s10 + $0x8] sm:$0xf]
  %v1702 = vld [vmem:[%s10 + $0xc] sm:$0xf]
  %v1703 = vld [vmem:[%s10 + $0x10] sm:$0xf]
  %v1704 = vld [vmem:[%s10 + $0x14] sm:$0xf]
  %v1705 = vld [vmem:[%s10 + $0x18] sm:$0xf]
  %v1706 = vld [vmem:[%s10 + $0x1c] sm:$0xf]
  %v1707 = vld [vmem:[%s10 + $0x20] sm:$0xf]
  %v1708 = vld [vmem:[%s10 + $0x24] sm:$0xf]
  %v1709 = vld [vmem:[%s10 + $0x28] sm:$0xf]
  %v1710 = vld [vmem:[%s10 + $0x2c] sm:$0xf]
  %v1711 = vld [vmem:[%s10 + $0x30] sm:$0xf]
  %v1712 = vld [vmem:[%s10 + $0x34] sm:$0xf]
  %v1713 = vld [vmem:[%s10 + $0x38] sm:$0xf]
  %v1714 = vld [vmem:[%s10 + $0x3c] sm:$0xf]
  %v1731 = vunpack.c.l.b16 %v1699
  %v1732 = vunpack.c.l.b16 %v1700
  %v1733 = vunpack.c.l.b16 %v1701
  %v1734 = vunpack.c.l.b16 %v1702
  %v1735 = vunpack.c.l.b16 %v1703
  %v1736 = vunpack.c.l.b16 %v1704
  %v1737 = vunpack.c.l.b16 %v1705
  %v1738 = vunpack.c.l.b16 %v1706
  %v1739 = vunpack.c.l.b16 %v1707
  %v1740 = vunpack.c.l.b16 %v1708
  %v1741 = vunpack.c.l.b16 %v1709
  %v1742 = vunpack.c.l.b16 %v1710
  %v1743 = vunpack.c.l.b16 %v1711
  %v1744 = vunpack.c.l.b16 %v1712
  %v1745 = vunpack.c.l.b16 %v1713
  %v1746 = vunpack.c.l.b16 %v1714
  %v1747 = vpack.c.b16 %v1732, %v1731
  %v1748 = vpack.c.b16 %v1734, %v1733
  %v1749 = vpack.c.b16 %v1736, %v1735
  %v1750 = vpack.c.b16 %v1738, %v1737
  %v1751 = vpack.c.b16 %v1740, %v1739
  %v1752 = vpack.c.b16 %v1742, %v1741
  %v1753 = vpack.c.b16 %v1744, %v1743
  %v1754 = vpack.c.b16 %v1746, %v1745
  %1763 = vmatprep.subr.bf16.mxu0 0
  %1764 = vmatpush1.bf16.msra.mxu0 %v1747
  %1765 = vmatprep.subr.bf16.mxu0 0
  %1766 = vmatpush1.bf16.msra.mxu0 %v1748
  %1767 = vmatprep.subr.bf16.mxu0 0
  %1768 = vmatpush1.bf16.msra.mxu0 %v1749
  %1769 = vmatprep.subr.bf16.mxu0 0
  %1770 = vmatpush1.bf16.msra.mxu0 %v1750
  %1771 = vmatprep.subr.bf16.mxu0 0
  %1772 = vmatpush1.bf16.msra.mxu0 %v1751
  %1773 = vmatprep.subr.bf16.mxu0 0
  %1774 = vmatpush1.bf16.msra.mxu0 %v1752
  %1775 = vmatprep.subr.bf16.mxu0 0
  %1776 = vmatpush1.bf16.msra.mxu0 %v1753
  %1777 = vmatprep.subr.bf16.mxu0 0
  %1778 = vmatpush1.bf16.msra.mxu0 %v1754
  %1779 = vmatprep.subr.bf16.mxu0 0
  %1780 = vmatpush1.bf16.msra.mxu0 0
  %1781 = vmatprep.subr.bf16.mxu0 0
  %1782 = vmatpush1.bf16.msra.mxu0 0
  %1783 = vmatprep.subr.bf16.mxu0 0
  %1784 = vmatpush1.bf16.msra.mxu0 0
  %1785 = vmatprep.subr.bf16.mxu0 0
  %1786 = vmatpush1.bf16.msra.mxu0 0
  %1787 = vmatprep.subr.bf16.mxu0 0
  %1788 = vmatpush1.bf16.msra.mxu0 0
  %1789 = vmatprep.subr.bf16.mxu0 0
  %1790 = vmatpush1.bf16.msra.mxu0 0
  %1791 = vmatprep.subr.bf16.mxu0 0
  %1792 = vmatpush1.bf16.msra.mxu0 0
  %1793 = vmatprep.subr.bf16.mxu0 0
  %1794 = vmatpush1.bf16.msra.mxu0 0
  %1795 = vmatprep.mubr.bf16.mxu0 0
  %1796 = vmatmul.mubr.bf16.gmra.mrb[0].mxu0 %v1696
  %v1797 = vpop.f32.mrb[0].mxu0
  %v1798 = vadd.f32 0.0, %v1797
  %v1799 = vpop.f32.mrb[0].mxu0
  %v1800 = vpop.f32.mrb[0].mxu0
  %v1801 = vadd.f32 0.0, %v1800
  %v1802 = vpop.f32.mrb[0].mxu0
  %1803 = vmatprep.mubr.bf16.mxu0 0
  %1804 = vmatmul.mubr.bf16.gmra.mrb[0].mxu0 %v1697
  %v1805 = vpop.f32.mrb[0].mxu0
  %v1806 = vadd.f32 0.0, %v1805
  %v1807 = vpop.f32.mrb[0].mxu0
  %v1808 = vpop.f32.mrb[0].mxu0
  %v1809 = vadd.f32 0.0, %v1808
  %v1810 = vpop.f32.mrb[0].mxu0
  %1811 = vmatprep.mubr.bf16.mxu0 0
  %1812 = vmatmul.mubr.bf16.gmra.mrb[0].mxu0 %v1698
  %v1813 = vpop.f32.mrb[0].mxu0
  %v1814 = vadd.f32 0.0, %v1813
  %v1815 = vpop.f32.mrb[0].mxu0
  %v1816 = vpop.f32.mrb[0].mxu0
  %v1817 = vadd.f32 0.0, %v1816
  %v1818 = vpop.f32.mrb[0].mxu0
  %1819 = vdwg.mxu0
  %v1820 = vadd.f32 %v1466, %v1798
  %v1821 = vadd.f32 %v1467, %v1801
  %v1822 = vadd.f32 %v1468, %v1806
  %v1823 = vadd.f32 %v1469, %v1809
  %v1824 = vadd.f32 %v1470, %v1814
  %v1825 = vadd.f32 %v1471, %v1817
  %v1826 = vld [vmem:[%s11] sm:$0x1]
  %v1828 = vlaneseq
  %v1829 = vshrl.u32 %v1828, 7
  %v1830 = vsub.s32 0, %v1829
  %v1831 = vrot.slane %v1826, %v1830
  %v1833 = vadd.f32 %v1820, %v1831
  %v1834 = vadd.f32 %v1821, %v1831
  %v1835 = vadd.f32 %v1822, %v1831
  %v1836 = vadd.f32 %v1823, %v1831
  %v1837 = vadd.f32 %v1824, %v1831
  %v1838 = vadd.f32 %v1825, %v1831
  %v1839 = vsel %vm166, %v1833, 0.0
  %1840 = vadd.xlane.f32.xlu0 %v1839
  %v1841 = vpop.xlane.xlu0 %1840
  %v1842 = vsel %vm166, %v1834, 0.0
  %1843 = vadd.xlane.f32.xlu0 %v1842
  %v1844 = vpop.xlane.xlu0 %1843
  %v1845 = vsel %vm166, %v1835, 0.0
  %1846 = vadd.xlane.f32.xlu0 %v1845
  %v1847 = vpop.xlane.xlu0 %1846
  %v1848 = vsel %vm166, %v1836, 0.0
  %1849 = vadd.xlane.f32.xlu0 %v1848
  %v1850 = vpop.xlane.xlu0 %1849
  %v1851 = vsel %vm166, %v1837, 0.0
  %1852 = vadd.xlane.f32.xlu0 %v1851
  %v1853 = vpop.xlane.xlu0 %1852
  %v1854 = vsel %vm166, %v1838, 0.0
  %1855 = vadd.xlane.f32.xlu0 %v1854
  %v1856 = vpop.xlane.xlu0 %1855
  %v1857 = vmul.f32 %v1841, %v185
  %v1858 = vmul.f32 %v1844, %v185
  %v1859 = vmul.f32 %v1847, %v185
  %v1860 = vmul.f32 %v1850, %v185
  %v1861 = vmul.f32 %v1853, %v185
  %v1862 = vmul.f32 %v1856, %v185
  %v1863 = vsub.f32 %v1833, %v1857
  %v1864 = vsub.f32 %v1834, %v1858
  %v1865 = vsub.f32 %v1835, %v1859
  %v1866 = vsub.f32 %v1836, %v1860
  %v1867 = vsub.f32 %v1837, %v1861
  %v1868 = vsub.f32 %v1838, %v1862
  %v1869 = vmul.f32 %v1863, %v1863
  %v1870 = vmul.f32 %v1864, %v1864
  %v1871 = vmul.f32 %v1865, %v1865
  %v1872 = vmul.f32 %v1866, %v1866
  %v1873 = vmul.f32 %v1867, %v1867
  %v1874 = vmul.f32 %v1868, %v1868
  %v1875 = vsel %vm166, %v1869, 0.0
  %1876 = vadd.xlane.f32.xlu0 %v1875
  %v1877 = vpop.xlane.xlu0 %1876
  %v1878 = vsel %vm166, %v1870, 0.0
  %1879 = vadd.xlane.f32.xlu0 %v1878
  %v1880 = vpop.xlane.xlu0 %1879
  %v1881 = vsel %vm166, %v1871, 0.0
  %1882 = vadd.xlane.f32.xlu0 %v1881
  %v1883 = vpop.xlane.xlu0 %1882
  %v1884 = vsel %vm166, %v1872, 0.0
  %1885 = vadd.xlane.f32.xlu0 %v1884
  %v1886 = vpop.xlane.xlu0 %1885
  %v1887 = vsel %vm166, %v1873, 0.0
  %1888 = vadd.xlane.f32.xlu0 %v1887
  %v1889 = vpop.xlane.xlu0 %1888
  %v1890 = vsel %vm166, %v1874, 0.0
  %1891 = vadd.xlane.f32.xlu0 %v1890
  %v1892 = vpop.xlane.xlu0 %1891
  %v1893 = vmul.f32 %v1877, %v185
  %v1894 = vmul.f32 %v1880, %v185
  %v1895 = vmul.f32 %v1883, %v185
  %v1896 = vmul.f32 %v1886, %v185
  %v1897 = vmul.f32 %v1889, %v185
  %v1898 = vmul.f32 %v1892, %v185
  %v1899 = vadd.f32 %v1893, 1e-06
  %v1900 = vadd.f32 %v1894, 1e-06
  %v1901 = vadd.f32 %v1895, 1e-06
  %v1902 = vadd.f32 %v1896, 1e-06
  %v1903 = vadd.f32 %v1897, 1e-06
  %v1904 = vadd.f32 %v1898, 1e-06
  %v1905 = vrsqrt.pop %v1899
  %v1906 = vrsqrt.pop %v1900
  %v1907 = vrsqrt.pop %v1901
  %v1908 = vrsqrt.pop %v1902
  %v1909 = vrsqrt.pop %v1903
  %v1910 = vrsqrt.pop %v1904
  %v1911 = vmul.f32 %v1863, %v1905
  %v1912 = vmul.f32 %v1864, %v1906
  %v1913 = vmul.f32 %v1865, %v1907
  %v1914 = vmul.f32 %v1866, %v1908
  %v1915 = vmul.f32 %v1867, %v1909
  %v1916 = vmul.f32 %v1868, %v1910
  %v1917 = vpack.c.bf16 %v1912, %v1911
  %v1918 = vpack.c.bf16 %v1914, %v1913
  %v1919 = vpack.c.bf16 %v1916, %v1915
  %s1920 = scalar_lea.vmem %s4, 16
  %v1921 = vld [vmem:[%s1920] sm:$0xf]
  %v1922 = vld [vmem:[%s1920 + $0x4] sm:$0xf]
  %v1923 = vld [vmem:[%s1920 + $0x8] sm:$0xf]
  %v1924 = vld [vmem:[%s1920 + $0xc] sm:$0xf]
  %s1925 = scalar_lea.vmem %s5, 1
  %v1926 = vld [vmem:[%s1925] sm:$0x1]
  %v1928 = vlaneseq
  %v1929 = vshrl.u32 %v1928, 7
  %v1930 = vsub.s32 0, %v1929
  %v1931 = vrot.slane %v1926, %v1930
  %v1937 = vunpack.c.l.b16 %v1921
  %v1938 = vunpack.c.l.b16 %v1922
  %v1939 = vunpack.c.l.b16 %v1923
  %v1940 = vunpack.c.l.b16 %v1924
  %v1941 = vpack.c.b16 %v1938, %v1937
  %v1942 = vpack.c.b16 %v1940, %v1939
  %v1946 = vsel %vm166, %v1917, 0
  %v1949 = vsel %vm166, %v1918, 0
  %v1952 = vsel %vm166, %v1919, 0
  %1954 = vmatprep.subr.bf16.mxu0 0
  %1955 = vmatpush1.bf16.msra.mxu0 %v1941
  %1956 = vmatprep.subr.bf16.mxu0 0
  %1957 = vmatpush1.bf16.msra.mxu0 %v1942
  %1958 = vmatprep.subr.bf16.mxu0 0
  %1959 = vmatpush1.bf16.msra.mxu0 0
  %1960 = vmatprep.subr.bf16.mxu0 0
  %1961 = vmatpush1.bf16.msra.mxu0 0
  %1962 = vmatprep.subr.bf16.mxu0 0
  %1963 = vmatpush1.bf16.msra.mxu0 0
  %1964 = vmatprep.subr.bf16.mxu0 0
  %1965 = vmatpush1.bf16.msra.mxu0 0
  %1966 = vmatprep.subr.bf16.mxu0 0
  %1967 = vmatpush1.bf16.msra.mxu0 0
  %1968 = vmatprep.subr.bf16.mxu0 0
  %1969 = vmatpush1.bf16.msra.mxu0 0
  %1970 = vmatprep.subr.bf16.mxu0 0
  %1971 = vmatpush1.bf16.msra.mxu0 0
  %1972 = vmatprep.subr.bf16.mxu0 0
  %1973 = vmatpush1.bf16.msra.mxu0 0
  %1974 = vmatprep.subr.bf16.mxu0 0
  %1975 = vmatpush1.bf16.msra.mxu0 0
  %1976 = vmatprep.subr.bf16.mxu0 0
  %1977 = vmatpush1.bf16.msra.mxu0 0
  %1978 = vmatprep.subr.bf16.mxu0 0
  %1979 = vmatpush1.bf16.msra.mxu0 0
  %1980 = vmatprep.subr.bf16.mxu0 0
  %1981 = vmatpush1.bf16.msra.mxu0 0
  %1982 = vmatprep.subr.bf16.mxu0 0
  %1983 = vmatpush1.bf16.msra.mxu0 0
  %1984 = vmatprep.subr.bf16.mxu0 0
  %1985 = vmatpush1.bf16.msra.mxu0 0
  %1986 = vmatprep.mubr.bf16.mxu0 0
  %1987 = vmatmul.mubr.bf16.gmra.mrb[0].mxu0 %v1946
  %v1988 = vpop.f32.mrb[0].mxu0
  %v1989 = vadd.f32 %v1931, %v1988
  %v1990 = vpop.f32.mrb[0].mxu0
  %v1991 = vpop.f32.mrb[0].mxu0
  %v1992 = vadd.f32 %v1931, %v1991
  %v1993 = vpop.f32.mrb[0].mxu0
  %1994 = vmatprep.mubr.bf16.mxu0 0
  %1995 = vmatmul.mubr.bf16.gmra.mrb[0].mxu0 %v1949
  %v1996 = vpop.f32.mrb[0].mxu0
  %v1997 = vadd.f32 %v1931, %v1996
  %v1998 = vpop.f32.mrb[0].mxu0
  %v1999 = vpop.f32.mrb[0].mxu0
  %v2000 = vadd.f32 %v1931, %v1999
  %v2001 = vpop.f32.mrb[0].mxu0
  %2002 = vmatprep.mubr.bf16.mxu0 0
  %2003 = vmatmul.mubr.bf16.gmra.mrb[0].mxu0 %v1952
  %v2004 = vpop.f32.mrb[0].mxu0
  %v2005 = vadd.f32 %v1931, %v2004
  %v2006 = vpop.f32.mrb[0].mxu0
  %v2007 = vpop.f32.mrb[0].mxu0
  %v2008 = vadd.f32 %v1931, %v2007
  %v2009 = vpop.f32.mrb[0].mxu0
  %2010 = vdwg.mxu0
  %v2011 = vpack.c.bf16 %v1992, %v1989
  %v2012 = vpack.c.bf16 %v2000, %v1997
  %v2013 = vpack.c.bf16 %v2008, %v2005
  %2017 = vrot.lane.b32.xlu0 %v2011, 96
  %v2018 = vpop.permute.xlu0 %2017
  %2019 = vrot.lane.b32.xlu0 %v2012, 96
  %v2020 = vpop.permute.xlu0 %2019
  %2021 = vrot.lane.b32.xlu0 %v2013, 96
  %v2022 = vpop.permute.xlu0 %2021
  %v2024 = vsel %vm350, %v2011, 0
  %v2027 = vsel %vm350, %v2012, 0
  %v2030 = vsel %vm350, %v2013, 0
  %v2033 = vsel %vm350, %v2018, 0
  %v2036 = vsel %vm350, %v2020, 0
  %v2039 = vsel %vm350, %v2022, 0
  %2041 = vmatprep.subr.bf16.mxu0 0
  %2042 = vmatpush1.bf16.xpose.msra.mxu0 %v2033
  %2043 = vmatprep.subr.bf16.mxu0 0
  %2044 = vmatpush1.bf16.xpose.msra.mxu0 %v2036
  %2045 = vmatprep.subr.bf16.mxu0 0
  %2046 = vmatpush1.bf16.xpose.msra.mxu0 %v2039
  %2047 = vmatprep.subr.bf16.mxu0 0
  %2048 = vmatpush1.bf16.xpose.msra.mxu0 0
  %2049 = vmatprep.subr.bf16.mxu0 0
  %2050 = vmatpush1.bf16.xpose.msra.mxu0 0
  %2051 = vmatprep.subr.bf16.mxu0 0
  %2052 = vmatpush1.bf16.xpose.msra.mxu0 0
  %2053 = vmatprep.subr.bf16.mxu0 0
  %2054 = vmatpush1.bf16.xpose.msra.mxu0 0
  %2055 = vmatprep.subr.bf16.mxu0 0
  %2056 = vmatpush1.bf16.xpose.msra.mxu0 0
  %2057 = vmatprep.subr.bf16.mxu0 0
  %2058 = vmatpush1.bf16.xpose.msra.mxu0 0
  %2059 = vmatprep.subr.bf16.mxu0 0
  %2060 = vmatpush1.bf16.xpose.msra.mxu0 0
  %2061 = vmatprep.subr.bf16.mxu0 0
  %2062 = vmatpush1.bf16.xpose.msra.mxu0 0
  %2063 = vmatprep.subr.bf16.mxu0 0
  %2064 = vmatpush1.bf16.xpose.msra.mxu0 0
  %2065 = vmatprep.subr.bf16.mxu0 0
  %2066 = vmatpush1.bf16.xpose.msra.mxu0 0
  %2067 = vmatprep.subr.bf16.mxu0 0
  %2068 = vmatpush1.bf16.xpose.msra.mxu0 0
  %2069 = vmatprep.subr.bf16.mxu0 0
  %2070 = vmatpush1.bf16.xpose.msra.mxu0 0
  %2071 = vmatprep.subr.bf16.mxu0 0
  %2072 = vmatpush1.bf16.xpose.msra.mxu0 0
  %2073 = vmatprep.mubr.bf16.mxu0 0
  %2074 = vmatmul.mubr.bf16.gmra.mrb[0].mxu0 %v2024
  %v2075 = vpop.f32.mrb[0].mxu0
  %v2076 = vadd.f32 %v160, %v2075
  %v2077 = vpop.f32.mrb[0].mxu0
  %v2078 = vpop.f32.mrb[0].mxu0
  %v2079 = vadd.f32 %v161, %v2078
  %v2080 = vpop.f32.mrb[0].mxu0
  %2081 = vmatprep.mubr.bf16.mxu0 0
  %2082 = vmatmul.mubr.bf16.gmra.mrb[0].mxu0 %v2027
  %v2083 = vpop.f32.mrb[0].mxu0
  %v2084 = vadd.f32 %v162, %v2083
  %v2085 = vpop.f32.mrb[0].mxu0
  %v2086 = vpop.f32.mrb[0].mxu0
  %v2087 = vadd.f32 %v163, %v2086
  %v2088 = vpop.f32.mrb[0].mxu0
  %2089 = vmatprep.mubr.bf16.mxu0 0
  %2090 = vmatmul.mubr.bf16.gmra.mrb[0].mxu0 %v2030
  %v2091 = vpop.f32.mrb[0].mxu0
  %v2092 = vadd.f32 %v164, %v2091
  %v2093 = vpop.f32.mrb[0].mxu0
  %v2094 = vpop.f32.mrb[0].mxu0
  %v2095 = vadd.f32 %v165, %v2094
  %v2096 = vpop.f32.mrb[0].mxu0
  %2097 = vdwg.mxu0
  %v2098 = vsel %vm93, %v2076, -inf
  %2099 = vmax.xlane.f32.xlu0 %v2098
  %v2100 = vpop.xlane.xlu0 %2099
  %v2101 = vsel %vm93, %v2079, -inf
  %2102 = vmax.xlane.f32.xlu0 %v2101
  %v2103 = vpop.xlane.xlu0 %2102
  %v2104 = vsel %vm93, %v2084, -inf
  %2105 = vmax.xlane.f32.xlu0 %v2104
  %v2106 = vpop.xlane.xlu0 %2105
  %v2107 = vsel %vm93, %v2087, -inf
  %2108 = vmax.xlane.f32.xlu0 %v2107
  %v2109 = vpop.xlane.xlu0 %2108
  %v2110 = vsel %vm93, %v2092, -inf
  %2111 = vmax.xlane.f32.xlu0 %v2110
  %v2112 = vpop.xlane.xlu0 %2111
  %v2113 = vsel %vm93, %v2095, -inf
  %2114 = vmax.xlane.f32.xlu0 %v2113
  %v2115 = vpop.xlane.xlu0 %2114
  %v2116 = vsub.f32 %v2076, %v2100
  %v2117 = vsub.f32 %v2079, %v2103
  %v2118 = vsub.f32 %v2084, %v2106
  %v2119 = vsub.f32 %v2087, %v2109
  %v2120 = vsub.f32 %v2092, %v2112
  %v2121 = vsub.f32 %v2095, %v2115
  %v2122 = vmul.f32 %v2116, 1.442695
  %v2123 = vpow.pop %v2122
  %v2124 = vmul.f32 %v2117, 1.442695
  %v2125 = vpow.pop %v2124
  %v2126 = vmul.f32 %v2118, 1.442695
  %v2127 = vpow.pop %v2126
  %v2128 = vmul.f32 %v2119, 1.442695
  %v2129 = vpow.pop %v2128
  %v2130 = vmul.f32 %v2120, 1.442695
  %v2131 = vpow.pop %v2130
  %v2132 = vmul.f32 %v2121, 1.442695
  %v2133 = vpow.pop %v2132
  %v2134 = vsel %vm93, %v2123, 0.0
  %2135 = vadd.xlane.f32.xlu0 %v2134
  %v2136 = vpop.xlane.xlu0 %2135
  %v2137 = vsel %vm93, %v2125, 0.0
  %2138 = vadd.xlane.f32.xlu0 %v2137
  %v2139 = vpop.xlane.xlu0 %2138
  %v2140 = vsel %vm93, %v2127, 0.0
  %2141 = vadd.xlane.f32.xlu0 %v2140
  %v2142 = vpop.xlane.xlu0 %2141
  %v2143 = vsel %vm93, %v2129, 0.0
  %2144 = vadd.xlane.f32.xlu0 %v2143
  %v2145 = vpop.xlane.xlu0 %2144
  %v2146 = vsel %vm93, %v2131, 0.0
  %2147 = vadd.xlane.f32.xlu0 %v2146
  %v2148 = vpop.xlane.xlu0 %2147
  %v2149 = vsel %vm93, %v2133, 0.0
  %2150 = vadd.xlane.f32.xlu0 %v2149
  %v2151 = vpop.xlane.xlu0 %2150
  %v2152 = vrcp.pop %v2136
  %v2153 = vrcp.pop %v2139
  %v2154 = vrcp.pop %v2142
  %v2155 = vrcp.pop %v2145
  %v2156 = vrcp.pop %v2148
  %v2157 = vrcp.pop %v2151
  %v2158 = vmul.f32 %v2123, %v2152
  %v2159 = vmul.f32 %v2125, %v2153
  %v2160 = vmul.f32 %v2127, %v2154
  %v2161 = vmul.f32 %v2129, %v2155
  %v2162 = vmul.f32 %v2131, %v2156
  %v2163 = vmul.f32 %v2133, %v2157
  %v2164 = vpack.c.bf16 %v2159, %v2158
  %v2165 = vpack.c.bf16 %v2161, %v2160
  %v2166 = vpack.c.bf16 %v2163, %v2162
  %2167 = vrot.lane.b32.xlu0 %v2011, 64
  %v2168 = vpop.permute.xlu0 %2167
  %2169 = vrot.lane.b32.xlu0 %v2012, 64
  %v2170 = vpop.permute.xlu0 %2169
  %2171 = vrot.lane.b32.xlu0 %v2013, 64
  %v2172 = vpop.permute.xlu0 %2171
  %v2177 = vsel %vm93, %v2164, 0
  %v2180 = vsel %vm93, %v2165, 0
  %v2183 = vsel %vm93, %v2166, 0
  %2185 = vmatprep.subr.bf16.mxu0 0
  %2186 = vmatpush1.bf16.msra.mxu0 %v2168
  %2187 = vmatprep.subr.bf16.mxu0 0
  %2188 = vmatpush1.bf16.msra.mxu0 %v2170
  %2189 = vmatprep.subr.bf16.mxu0 0
  %2190 = vmatpush1.bf16.msra.mxu0 %v2172
  %2191 = vmatprep.subr.bf16.mxu0 0
  %2192 = vmatpush1.bf16.msra.mxu0 0
  %2193 = vmatprep.subr.bf16.mxu0 0
  %2194 = vmatpush1.bf16.msra.mxu0 0
  %2195 = vmatprep.subr.bf16.mxu0 0
  %2196 = vmatpush1.bf16.msra.mxu0 0
  %2197 = vmatprep.subr.bf16.mxu0 0
  %2198 = vmatpush1.bf16.msra.mxu0 0
  %2199 = vmatprep.subr.bf16.mxu0 0
  %2200 = vmatpush1.bf16.msra.mxu0 0
  %2201 = vmatprep.subr.bf16.mxu0 0
  %2202 = vmatpush1.bf16.msra.mxu0 0
  %2203 = vmatprep.subr.bf16.mxu0 0
  %2204 = vmatpush1.bf16.msra.mxu0 0
  %2205 = vmatprep.subr.bf16.mxu0 0
  %2206 = vmatpush1.bf16.msra.mxu0 0
  %2207 = vmatprep.subr.bf16.mxu0 0
  %2208 = vmatpush1.bf16.msra.mxu0 0
  %2209 = vmatprep.subr.bf16.mxu0 0
  %2210 = vmatpush1.bf16.msra.mxu0 0
  %2211 = vmatprep.subr.bf16.mxu0 0
  %2212 = vmatpush1.bf16.msra.mxu0 0
  %2213 = vmatprep.subr.bf16.mxu0 0
  %2214 = vmatpush1.bf16.msra.mxu0 0
  %2215 = vmatprep.subr.bf16.mxu0 0
  %2216 = vmatpush1.bf16.msra.mxu0 0
  %2217 = vmatprep.mubr.bf16.mxu0 0
  %2218 = vmatmul.mubr.bf16.gmra.mrb[0].mxu0 %v2177
  %v2219 = vpop.f32.mrb[0].mxu0
  %v2220 = vadd.f32 0.0, %v2219
  %v2221 = vpop.f32.mrb[0].mxu0
  %v2222 = vpop.f32.mrb[0].mxu0
  %v2223 = vadd.f32 0.0, %v2222
  %v2224 = vpop.f32.mrb[0].mxu0
  %2225 = vmatprep.mubr.bf16.mxu0 0
  %2226 = vmatmul.mubr.bf16.gmra.mrb[0].mxu0 %v2180
  %v2227 = vpop.f32.mrb[0].mxu0
  %v2228 = vadd.f32 0.0, %v2227
  %v2229 = vpop.f32.mrb[0].mxu0
  %v2230 = vpop.f32.mrb[0].mxu0
  %v2231 = vadd.f32 0.0, %v2230
  %v2232 = vpop.f32.mrb[0].mxu0
  %2233 = vmatprep.mubr.bf16.mxu0 0
  %2234 = vmatmul.mubr.bf16.gmra.mrb[0].mxu0 %v2183
  %v2235 = vpop.f32.mrb[0].mxu0
  %v2236 = vadd.f32 0.0, %v2235
  %v2237 = vpop.f32.mrb[0].mxu0
  %v2238 = vpop.f32.mrb[0].mxu0
  %v2239 = vadd.f32 0.0, %v2238
  %v2240 = vpop.f32.mrb[0].mxu0
  %2241 = vdwg.mxu0
  %2242 = vst.msk [vmem:[#allocation2] sm:$0xff] %vm350, %v2220
  %2243 = vst.msk [vmem:[#allocation2 + $0x8] sm:$0xff] %vm350, %v2223
  %2244 = vst.msk [vmem:[#allocation2 + $0x10] sm:$0xff] %vm350, %v2228
  %2245 = vst.msk [vmem:[#allocation2 + $0x18] sm:$0xff] %vm350, %v2231
  %2246 = vst.msk [vmem:[#allocation2 + $0x20] sm:$0xff] %vm350, %v2236
  %2247 = vst.msk [vmem:[#allocation2 + $0x28] sm:$0xff] %vm350, %v2239
  %2248 = vrot.lane.b32.xlu0 %v2011, 120
  %v2249 = vpop.permute.xlu0 %2248
  %2250 = vrot.lane.b32.xlu0 %v2012, 120
  %v2251 = vpop.permute.xlu0 %2250
  %2252 = vrot.lane.b32.xlu0 %v2013, 120
  %v2253 = vpop.permute.xlu0 %2252
  %2254 = vrot.lane.b32.xlu0 %v2011, 88
  %v2255 = vpop.permute.xlu0 %2254
  %2256 = vrot.lane.b32.xlu0 %v2012, 88
  %v2257 = vpop.permute.xlu0 %2256
  %2258 = vrot.lane.b32.xlu0 %v2013, 88
  %v2259 = vpop.permute.xlu0 %2258
  %v2261 = vsel %vm350, %v2249, 0
  %v2264 = vsel %vm350, %v2251, 0
  %v2267 = vsel %vm350, %v2253, 0
  %v2270 = vsel %vm350, %v2255, 0
  %v2273 = vsel %vm350, %v2257, 0
  %v2276 = vsel %vm350, %v2259, 0
  %2278 = vmatprep.subr.bf16.mxu0 0
  %2279 = vmatpush1.bf16.xpose.msra.mxu0 %v2270
  %2280 = vmatprep.subr.bf16.mxu0 0
  %2281 = vmatpush1.bf16.xpose.msra.mxu0 %v2273
  %2282 = vmatprep.subr.bf16.mxu0 0
  %2283 = vmatpush1.bf16.xpose.msra.mxu0 %v2276
  %2284 = vmatprep.subr.bf16.mxu0 0
  %2285 = vmatpush1.bf16.xpose.msra.mxu0 0
  %2286 = vmatprep.subr.bf16.mxu0 0
  %2287 = vmatpush1.bf16.xpose.msra.mxu0 0
  %2288 = vmatprep.subr.bf16.mxu0 0
  %2289 = vmatpush1.bf16.xpose.msra.mxu0 0
  %2290 = vmatprep.subr.bf16.mxu0 0
  %2291 = vmatpush1.bf16.xpose.msra.mxu0 0
  %2292 = vmatprep.subr.bf16.mxu0 0
  %2293 = vmatpush1.bf16.xpose.msra.mxu0 0
  %2294 = vmatprep.subr.bf16.mxu0 0
  %2295 = vmatpush1.bf16.xpose.msra.mxu0 0
  %2296 = vmatprep.subr.bf16.mxu0 0
  %2297 = vmatpush1.bf16.xpose.msra.mxu0 0
  %2298 = vmatprep.subr.bf16.mxu0 0
  %2299 = vmatpush1.bf16.xpose.msra.mxu0 0
  %2300 = vmatprep.subr.bf16.mxu0 0
  %2301 = vmatpush1.bf16.xpose.msra.mxu0 0
  %2302 = vmatprep.subr.bf16.mxu0 0
  %2303 = vmatpush1.bf16.xpose.msra.mxu0 0
  %2304 = vmatprep.subr.bf16.mxu0 0
  %2305 = vmatpush1.bf16.xpose.msra.mxu0 0
  %2306 = vmatprep.subr.bf16.mxu0 0
  %2307 = vmatpush1.bf16.xpose.msra.mxu0 0
  %2308 = vmatprep.subr.bf16.mxu0 0
  %2309 = vmatpush1.bf16.xpose.msra.mxu0 0
  %2310 = vmatprep.mubr.bf16.mxu0 0
  %2311 = vmatmul.mubr.bf16.gmra.mrb[0].mxu0 %v2261
  %v2312 = vpop.f32.mrb[0].mxu0
  %v2313 = vadd.f32 %v160, %v2312
  %v2314 = vpop.f32.mrb[0].mxu0
  %v2315 = vpop.f32.mrb[0].mxu0
  %v2316 = vadd.f32 %v161, %v2315
  %v2317 = vpop.f32.mrb[0].mxu0
  %2318 = vmatprep.mubr.bf16.mxu0 0
  %2319 = vmatmul.mubr.bf16.gmra.mrb[0].mxu0 %v2264
  %v2320 = vpop.f32.mrb[0].mxu0
  %v2321 = vadd.f32 %v162, %v2320
  %v2322 = vpop.f32.mrb[0].mxu0
  %v2323 = vpop.f32.mrb[0].mxu0
  %v2324 = vadd.f32 %v163, %v2323
  %v2325 = vpop.f32.mrb[0].mxu0
  %2326 = vmatprep.mubr.bf16.mxu0 0
  %2327 = vmatmul.mubr.bf16.gmra.mrb[0].mxu0 %v2267
  %v2328 = vpop.f32.mrb[0].mxu0
  %v2329 = vadd.f32 %v164, %v2328
  %v2330 = vpop.f32.mrb[0].mxu0
  %v2331 = vpop.f32.mrb[0].mxu0
  %v2332 = vadd.f32 %v165, %v2331
  %v2333 = vpop.f32.mrb[0].mxu0
  %2334 = vdwg.mxu0
  %v2335 = vsel %vm93, %v2313, -inf
  %2336 = vmax.xlane.f32.xlu0 %v2335
  %v2337 = vpop.xlane.xlu0 %2336
  %v2338 = vsel %vm93, %v2316, -inf
  %2339 = vmax.xlane.f32.xlu0 %v2338
  %v2340 = vpop.xlane.xlu0 %2339
  %v2341 = vsel %vm93, %v2321, -inf
  %2342 = vmax.xlane.f32.xlu0 %v2341
  %v2343 = vpop.xlane.xlu0 %2342
  %v2344 = vsel %vm93, %v2324, -inf
  %2345 = vmax.xlane.f32.xlu0 %v2344
  %v2346 = vpop.xlane.xlu0 %2345
  %v2347 = vsel %vm93, %v2329, -inf
  %2348 = vmax.xlane.f32.xlu0 %v2347
  %v2349 = vpop.xlane.xlu0 %2348
  %v2350 = vsel %vm93, %v2332, -inf
  %2351 = vmax.xlane.f32.xlu0 %v2350
  %v2352 = vpop.xlane.xlu0 %2351
  %v2353 = vsub.f32 %v2313, %v2337
  %v2354 = vsub.f32 %v2316, %v2340
  %v2355 = vsub.f32 %v2321, %v2343
  %v2356 = vsub.f32 %v2324, %v2346
  %v2357 = vsub.f32 %v2329, %v2349
  %v2358 = vsub.f32 %v2332, %v2352
  %v2359 = vmul.f32 %v2353, 1.442695
  %v2360 = vpow.pop %v2359
  %v2361 = vmul.f32 %v2354, 1.442695
  %v2362 = vpow.pop %v2361
  %v2363 = vmul.f32 %v2355, 1.442695
  %v2364 = vpow.pop %v2363
  %v2365 = vmul.f32 %v2356, 1.442695
  %v2366 = vpow.pop %v2365
  %v2367 = vmul.f32 %v2357, 1.442695
  %v2368 = vpow.pop %v2367
  %v2369 = vmul.f32 %v2358, 1.442695
  %v2370 = vpow.pop %v2369
  %v2371 = vsel %vm93, %v2360, 0.0
  %2372 = vadd.xlane.f32.xlu0 %v2371
  %v2373 = vpop.xlane.xlu0 %2372
  %v2374 = vsel %vm93, %v2362, 0.0
  %2375 = vadd.xlane.f32.xlu0 %v2374
  %v2376 = vpop.xlane.xlu0 %2375
  %v2377 = vsel %vm93, %v2364, 0.0
  %2378 = vadd.xlane.f32.xlu0 %v2377
  %v2379 = vpop.xlane.xlu0 %2378
  %v2380 = vsel %vm93, %v2366, 0.0
  %2381 = vadd.xlane.f32.xlu0 %v2380
  %v2382 = vpop.xlane.xlu0 %2381
  %v2383 = vsel %vm93, %v2368, 0.0
  %2384 = vadd.xlane.f32.xlu0 %v2383
  %v2385 = vpop.xlane.xlu0 %2384
  %v2386 = vsel %vm93, %v2370, 0.0
  %2387 = vadd.xlane.f32.xlu0 %v2386
  %v2388 = vpop.xlane.xlu0 %2387
  %v2389 = vrcp.pop %v2373
  %v2390 = vrcp.pop %v2376
  %v2391 = vrcp.pop %v2379
  %v2392 = vrcp.pop %v2382
  %v2393 = vrcp.pop %v2385
  %v2394 = vrcp.pop %v2388
  %v2395 = vmul.f32 %v2360, %v2389
  %v2396 = vmul.f32 %v2362, %v2390
  %v2397 = vmul.f32 %v2364, %v2391
  %v2398 = vmul.f32 %v2366, %v2392
  %v2399 = vmul.f32 %v2368, %v2393
  %v2400 = vmul.f32 %v2370, %v2394
  %v2401 = vpack.c.bf16 %v2396, %v2395
  %v2402 = vpack.c.bf16 %v2398, %v2397
  %v2403 = vpack.c.bf16 %v2400, %v2399
  %2404 = vrot.lane.b32.xlu0 %v2011, 56
  %v2405 = vpop.permute.xlu0 %2404
  %2406 = vrot.lane.b32.xlu0 %v2012, 56
  %v2407 = vpop.permute.xlu0 %2406
  %2408 = vrot.lane.b32.xlu0 %v2013, 56
  %v2409 = vpop.permute.xlu0 %2408
  %v2414 = vsel %vm93, %v2401, 0
  %v2417 = vsel %vm93, %v2402, 0
  %v2420 = vsel %vm93, %v2403, 0
  %2422 = vmatprep.subr.bf16.mxu0 0
  %2423 = vmatpush1.bf16.msra.mxu0 %v2405
  %2424 = vmatprep.subr.bf16.mxu0 0
  %2425 = vmatpush1.bf16.msra.mxu0 %v2407
  %2426 = vmatprep.subr.bf16.mxu0 0
  %2427 = vmatpush1.bf16.msra.mxu0 %v2409
  %2428 = vmatprep.subr.bf16.mxu0 0
  %2429 = vmatpush1.bf16.msra.mxu0 0
  %2430 = vmatprep.subr.bf16.mxu0 0
  %2431 = vmatpush1.bf16.msra.mxu0 0
  %2432 = vmatprep.subr.bf16.mxu0 0
  %2433 = vmatpush1.bf16.msra.mxu0 0
  %2434 = vmatprep.subr.bf16.mxu0 0
  %2435 = vmatpush1.bf16.msra.mxu0 0
  %2436 = vmatprep.subr.bf16.mxu0 0
  %2437 = vmatpush1.bf16.msra.mxu0 0
  %2438 = vmatprep.subr.bf16.mxu0 0
  %2439 = vmatpush1.bf16.msra.mxu0 0
  %2440 = vmatprep.subr.bf16.mxu0 0
  %2441 = vmatpush1.bf16.msra.mxu0 0
  %2442 = vmatprep.subr.bf16.mxu0 0
  %2443 = vmatpush1.bf16.msra.mxu0 0
  %2444 = vmatprep.subr.bf16.mxu0 0
  %2445 = vmatpush1.bf16.msra.mxu0 0
  %2446 = vmatprep.subr.bf16.mxu0 0
  %2447 = vmatpush1.bf16.msra.mxu0 0
  %2448 = vmatprep.subr.bf16.mxu0 0
  %2449 = vmatpush1.bf16.msra.mxu0 0
  %2450 = vmatprep.subr.bf16.mxu0 0
  %2451 = vmatpush1.bf16.msra.mxu0 0
  %2452 = vmatprep.subr.bf16.mxu0 0
  %2453 = vmatpush1.bf16.msra.mxu0 0
  %2454 = vmatprep.mubr.bf16.mxu0 0
  %2455 = vmatmul.mubr.bf16.gmra.mrb[0].mxu0 %v2414
  %v2456 = vpop.f32.mrb[0].mxu0
  %v2457 = vadd.f32 0.0, %v2456
  %v2458 = vpop.f32.mrb[0].mxu0
  %v2459 = vpop.f32.mrb[0].mxu0
  %v2460 = vadd.f32 0.0, %v2459
  %v2461 = vpop.f32.mrb[0].mxu0
  %2462 = vmatprep.mubr.bf16.mxu0 0
  %2463 = vmatmul.mubr.bf16.gmra.mrb[0].mxu0 %v2417
  %v2464 = vpop.f32.mrb[0].mxu0
  %v2465 = vadd.f32 0.0, %v2464
  %v2466 = vpop.f32.mrb[0].mxu0
  %v2467 = vpop.f32.mrb[0].mxu0
  %v2468 = vadd.f32 0.0, %v2467
  %v2469 = vpop.f32.mrb[0].mxu0
  %2470 = vmatprep.mubr.bf16.mxu0 0
  %2471 = vmatmul.mubr.bf16.gmra.mrb[0].mxu0 %v2420
  %v2472 = vpop.f32.mrb[0].mxu0
  %v2473 = vadd.f32 0.0, %v2472
  %v2474 = vpop.f32.mrb[0].mxu0
  %v2475 = vpop.f32.mrb[0].mxu0
  %v2476 = vadd.f32 0.0, %v2475
  %v2477 = vpop.f32.mrb[0].mxu0
  %2478 = vdwg.mxu0
  %2485 = vrot.lane.b32.xlu0 %v2457, 8
  %v2486 = vpop.permute.xlu0 %2485
  %2487 = vrot.lane.b32.xlu0 %v2460, 8
  %v2488 = vpop.permute.xlu0 %2487
  %2489 = vrot.lane.b32.xlu0 %v2465, 8
  %v2490 = vpop.permute.xlu0 %2489
  %2491 = vrot.lane.b32.xlu0 %v2468, 8
  %v2492 = vpop.permute.xlu0 %2491
  %2493 = vrot.lane.b32.xlu0 %v2473, 8
  %v2494 = vpop.permute.xlu0 %2493
  %2495 = vrot.lane.b32.xlu0 %v2476, 8
  %v2496 = vpop.permute.xlu0 %2495
  %2503 = vst.msk [vmem:[#allocation2] sm:$0xff] %vm831, %v2486
  %2504 = vst.msk [vmem:[#allocation2 + $0x8] sm:$0xff] %vm831, %v2488
  %2505 = vst.msk [vmem:[#allocation2 + $0x10] sm:$0xff] %vm831, %v2490
  %2506 = vst.msk [vmem:[#allocation2 + $0x18] sm:$0xff] %vm831, %v2492
  %2507 = vst.msk [vmem:[#allocation2 + $0x20] sm:$0xff] %vm831, %v2494
  %2508 = vst.msk [vmem:[#allocation2 + $0x28] sm:$0xff] %vm831, %v2496
  %2509 = vrot.lane.b32.xlu0 %v2011, 112
  %v2510 = vpop.permute.xlu0 %2509
  %2511 = vrot.lane.b32.xlu0 %v2012, 112
  %v2512 = vpop.permute.xlu0 %2511
  %2513 = vrot.lane.b32.xlu0 %v2013, 112
  %v2514 = vpop.permute.xlu0 %2513
  %2515 = vrot.lane.b32.xlu0 %v2011, 80
  %v2516 = vpop.permute.xlu0 %2515
  %2517 = vrot.lane.b32.xlu0 %v2012, 80
  %v2518 = vpop.permute.xlu0 %2517
  %2519 = vrot.lane.b32.xlu0 %v2013, 80
  %v2520 = vpop.permute.xlu0 %2519
  %v2522 = vsel %vm350, %v2510, 0
  %v2525 = vsel %vm350, %v2512, 0
  %v2528 = vsel %vm350, %v2514, 0
  %v2531 = vsel %vm350, %v2516, 0
  %v2534 = vsel %vm350, %v2518, 0
  %v2537 = vsel %vm350, %v2520, 0
  %2539 = vmatprep.subr.bf16.mxu0 0
  %2540 = vmatpush1.bf16.xpose.msra.mxu0 %v2531
  %2541 = vmatprep.subr.bf16.mxu0 0
  %2542 = vmatpush1.bf16.xpose.msra.mxu0 %v2534
  %2543 = vmatprep.subr.bf16.mxu0 0
  %2544 = vmatpush1.bf16.xpose.msra.mxu0 %v2537
  %2545 = vmatprep.subr.bf16.mxu0 0
  %2546 = vmatpush1.bf16.xpose.msra.mxu0 0
  %2547 = vmatprep.subr.bf16.mxu0 0
  %2548 = vmatpush1.bf16.xpose.msra.mxu0 0
  %2549 = vmatprep.subr.bf16.mxu0 0
  %2550 = vmatpush1.bf16.xpose.msra.mxu0 0
  %2551 = vmatprep.subr.bf16.mxu0 0
  %2552 = vmatpush1.bf16.xpose.msra.mxu0 0
  %2553 = vmatprep.subr.bf16.mxu0 0
  %2554 = vmatpush1.bf16.xpose.msra.mxu0 0
  %2555 = vmatprep.subr.bf16.mxu0 0
  %2556 = vmatpush1.bf16.xpose.msra.mxu0 0
  %2557 = vmatprep.subr.bf16.mxu0 0
  %2558 = vmatpush1.bf16.xpose.msra.mxu0 0
  %2559 = vmatprep.subr.bf16.mxu0 0
  %2560 = vmatpush1.bf16.xpose.msra.mxu0 0
  %2561 = vmatprep.subr.bf16.mxu0 0
  %2562 = vmatpush1.bf16.xpose.msra.mxu0 0
  %2563 = vmatprep.subr.bf16.mxu0 0
  %2564 = vmatpush1.bf16.xpose.msra.mxu0 0
  %2565 = vmatprep.subr.bf16.mxu0 0
  %2566 = vmatpush1.bf16.xpose.msra.mxu0 0
  %2567 = vmatprep.subr.bf16.mxu0 0
  %2568 = vmatpush1.bf16.xpose.msra.mxu0 0
  %2569 = vmatprep.subr.bf16.mxu0 0
  %2570 = vmatpush1.bf16.xpose.msra.mxu0 0
  %2571 = vmatprep.mubr.bf16.mxu0 0
  %2572 = vmatmul.mubr.bf16.gmra.mrb[0].mxu0 %v2522
  %v2573 = vpop.f32.mrb[0].mxu0
  %v2574 = vadd.f32 %v160, %v2573
  %v2575 = vpop.f32.mrb[0].mxu0
  %v2576 = vpop.f32.mrb[0].mxu0
  %v2577 = vadd.f32 %v161, %v2576
  %v2578 = vpop.f32.mrb[0].mxu0
  %2579 = vmatprep.mubr.bf16.mxu0 0
  %2580 = vmatmul.mubr.bf16.gmra.mrb[0].mxu0 %v2525
  %v2581 = vpop.f32.mrb[0].mxu0
  %v2582 = vadd.f32 %v162, %v2581
  %v2583 = vpop.f32.mrb[0].mxu0
  %v2584 = vpop.f32.mrb[0].mxu0
  %v2585 = vadd.f32 %v163, %v2584
  %v2586 = vpop.f32.mrb[0].mxu0
  %2587 = vmatprep.mubr.bf16.mxu0 0
  %2588 = vmatmul.mubr.bf16.gmra.mrb[0].mxu0 %v2528
  %v2589 = vpop.f32.mrb[0].mxu0
  %v2590 = vadd.f32 %v164, %v2589
  %v2591 = vpop.f32.mrb[0].mxu0
  %v2592 = vpop.f32.mrb[0].mxu0
  %v2593 = vadd.f32 %v165, %v2592
  %v2594 = vpop.f32.mrb[0].mxu0
  %2595 = vdwg.mxu0
  %v2596 = vsel %vm93, %v2574, -inf
  %2597 = vmax.xlane.f32.xlu0 %v2596
  %v2598 = vpop.xlane.xlu0 %2597
  %v2599 = vsel %vm93, %v2577, -inf
  %2600 = vmax.xlane.f32.xlu0 %v2599
  %v2601 = vpop.xlane.xlu0 %2600
  %v2602 = vsel %vm93, %v2582, -inf
  %2603 = vmax.xlane.f32.xlu0 %v2602
  %v2604 = vpop.xlane.xlu0 %2603
  %v2605 = vsel %vm93, %v2585, -inf
  %2606 = vmax.xlane.f32.xlu0 %v2605
  %v2607 = vpop.xlane.xlu0 %2606
  %v2608 = vsel %vm93, %v2590, -inf
  %2609 = vmax.xlane.f32.xlu0 %v2608
  %v2610 = vpop.xlane.xlu0 %2609
  %v2611 = vsel %vm93, %v2593, -inf
  %2612 = vmax.xlane.f32.xlu0 %v2611
  %v2613 = vpop.xlane.xlu0 %2612
  %v2614 = vsub.f32 %v2574, %v2598
  %v2615 = vsub.f32 %v2577, %v2601
  %v2616 = vsub.f32 %v2582, %v2604
  %v2617 = vsub.f32 %v2585, %v2607
  %v2618 = vsub.f32 %v2590, %v2610
  %v2619 = vsub.f32 %v2593, %v2613
  %v2620 = vmul.f32 %v2614, 1.442695
  %v2621 = vpow.pop %v2620
  %v2622 = vmul.f32 %v2615, 1.442695
  %v2623 = vpow.pop %v2622
  %v2624 = vmul.f32 %v2616, 1.442695
  %v2625 = vpow.pop %v2624
  %v2626 = vmul.f32 %v2617, 1.442695
  %v2627 = vpow.pop %v2626
  %v2628 = vmul.f32 %v2618, 1.442695
  %v2629 = vpow.pop %v2628
  %v2630 = vmul.f32 %v2619, 1.442695
  %v2631 = vpow.pop %v2630
  %v2632 = vsel %vm93, %v2621, 0.0
  %2633 = vadd.xlane.f32.xlu0 %v2632
  %v2634 = vpop.xlane.xlu0 %2633
  %v2635 = vsel %vm93, %v2623, 0.0
  %2636 = vadd.xlane.f32.xlu0 %v2635
  %v2637 = vpop.xlane.xlu0 %2636
  %v2638 = vsel %vm93, %v2625, 0.0
  %2639 = vadd.xlane.f32.xlu0 %v2638
  %v2640 = vpop.xlane.xlu0 %2639
  %v2641 = vsel %vm93, %v2627, 0.0
  %2642 = vadd.xlane.f32.xlu0 %v2641
  %v2643 = vpop.xlane.xlu0 %2642
  %v2644 = vsel %vm93, %v2629, 0.0
  %2645 = vadd.xlane.f32.xlu0 %v2644
  %v2646 = vpop.xlane.xlu0 %2645
  %v2647 = vsel %vm93, %v2631, 0.0
  %2648 = vadd.xlane.f32.xlu0 %v2647
  %v2649 = vpop.xlane.xlu0 %2648
  %v2650 = vrcp.pop %v2634
  %v2651 = vrcp.pop %v2637
  %v2652 = vrcp.pop %v2640
  %v2653 = vrcp.pop %v2643
  %v2654 = vrcp.pop %v2646
  %v2655 = vrcp.pop %v2649
  %v2656 = vmul.f32 %v2621, %v2650
  %v2657 = vmul.f32 %v2623, %v2651
  %v2658 = vmul.f32 %v2625, %v2652
  %v2659 = vmul.f32 %v2627, %v2653
  %v2660 = vmul.f32 %v2629, %v2654
  %v2661 = vmul.f32 %v2631, %v2655
  %v2662 = vpack.c.bf16 %v2657, %v2656
  %v2663 = vpack.c.bf16 %v2659, %v2658
  %v2664 = vpack.c.bf16 %v2661, %v2660
  %2665 = vrot.lane.b32.xlu0 %v2011, 48
  %v2666 = vpop.permute.xlu0 %2665
  %2667 = vrot.lane.b32.xlu0 %v2012, 48
  %v2668 = vpop.permute.xlu0 %2667
  %2669 = vrot.lane.b32.xlu0 %v2013, 48
  %v2670 = vpop.permute.xlu0 %2669
  %v2675 = vsel %vm93, %v2662, 0
  %v2678 = vsel %vm93, %v2663, 0
  %v2681 = vsel %vm93, %v2664, 0
  %2683 = vmatprep.subr.bf16.mxu0 0
  %2684 = vmatpush1.bf16.msra.mxu0 %v2666
  %2685 = vmatprep.subr.bf16.mxu0 0
  %2686 = vmatpush1.bf16.msra.mxu0 %v2668
  %2687 = vmatprep.subr.bf16.mxu0 0
  %2688 = vmatpush1.bf16.msra.mxu0 %v2670
  %2689 = vmatprep.subr.bf16.mxu0 0
  %2690 = vmatpush1.bf16.msra.mxu0 0
  %2691 = vmatprep.subr.bf16.mxu0 0
  %2692 = vmatpush1.bf16.msra.mxu0 0
  %2693 = vmatprep.subr.bf16.mxu0 0
  %2694 = vmatpush1.bf16.msra.mxu0 0
  %2695 = vmatprep.subr.bf16.mxu0 0
  %2696 = vmatpush1.bf16.msra.mxu0 0
  %2697 = vmatprep.subr.bf16.mxu0 0
  %2698 = vmatpush1.bf16.msra.mxu0 0
  %2699 = vmatprep.subr.bf16.mxu0 0
  %2700 = vmatpush1.bf16.msra.mxu0 0
  %2701 = vmatprep.subr.bf16.mxu0 0
  %2702 = vmatpush1.bf16.msra.mxu0 0
  %2703 = vmatprep.subr.bf16.mxu0 0
  %2704 = vmatpush1.bf16.msra.mxu0 0
  %2705 = vmatprep.subr.bf16.mxu0 0
  %2706 = vmatpush1.bf16.msra.mxu0 0
  %2707 = vmatprep.subr.bf16.mxu0 0
  %2708 = vmatpush1.bf16.msra.mxu0 0
  %2709 = vmatprep.subr.bf16.mxu0 0
  %2710 = vmatpush1.bf16.msra.mxu0 0
  %2711 = vmatprep.subr.bf16.mxu0 0
  %2712 = vmatpush1.bf16.msra.mxu0 0
  %2713 = vmatprep.subr.bf16.mxu0 0
  %2714 = vmatpush1.bf16.msra.mxu0 0
  %2715 = vmatprep.mubr.bf16.mxu0 0
  %2716 = vmatmul.mubr.bf16.gmra.mrb[0].mxu0 %v2675
  %v2717 = vpop.f32.mrb[0].mxu0
  %v2718 = vadd.f32 0.0, %v2717
  %v2719 = vpop.f32.mrb[0].mxu0
  %v2720 = vpop.f32.mrb[0].mxu0
  %v2721 = vadd.f32 0.0, %v2720
  %v2722 = vpop.f32.mrb[0].mxu0
  %2723 = vmatprep.mubr.bf16.mxu0 0
  %2724 = vmatmul.mubr.bf16.gmra.mrb[0].mxu0 %v2678
  %v2725 = vpop.f32.mrb[0].mxu0
  %v2726 = vadd.f32 0.0, %v2725
  %v2727 = vpop.f32.mrb[0].mxu0
  %v2728 = vpop.f32.mrb[0].mxu0
  %v2729 = vadd.f32 0.0, %v2728
  %v2730 = vpop.f32.mrb[0].mxu0
  %2731 = vmatprep.mubr.bf16.mxu0 0
  %2732 = vmatmul.mubr.bf16.gmra.mrb[0].mxu0 %v2681
  %v2733 = vpop.f32.mrb[0].mxu0
  %v2734 = vadd.f32 0.0, %v2733
  %v2735 = vpop.f32.mrb[0].mxu0
  %v2736 = vpop.f32.mrb[0].mxu0
  %v2737 = vadd.f32 0.0, %v2736
  %v2738 = vpop.f32.mrb[0].mxu0
  %2739 = vdwg.mxu0
  %2746 = vrot.lane.b32.xlu0 %v2718, 16
  %v2747 = vpop.permute.xlu0 %2746
  %2748 = vrot.lane.b32.xlu0 %v2721, 16
  %v2749 = vpop.permute.xlu0 %2748
  %2750 = vrot.lane.b32.xlu0 %v2726, 16
  %v2751 = vpop.permute.xlu0 %2750
  %2752 = vrot.lane.b32.xlu0 %v2729, 16
  %v2753 = vpop.permute.xlu0 %2752
  %2754 = vrot.lane.b32.xlu0 %v2734, 16
  %v2755 = vpop.permute.xlu0 %2754
  %2756 = vrot.lane.b32.xlu0 %v2737, 16
  %v2757 = vpop.permute.xlu0 %2756
  %2764 = vst.msk [vmem:[#allocation2] sm:$0xff] %vm1093, %v2747
  %2765 = vst.msk [vmem:[#allocation2 + $0x8] sm:$0xff] %vm1093, %v2749
  %2766 = vst.msk [vmem:[#allocation2 + $0x10] sm:$0xff] %vm1093, %v2751
  %2767 = vst.msk [vmem:[#allocation2 + $0x18] sm:$0xff] %vm1093, %v2753
  %2768 = vst.msk [vmem:[#allocation2 + $0x20] sm:$0xff] %vm1093, %v2755
  %2769 = vst.msk [vmem:[#allocation2 + $0x28] sm:$0xff] %vm1093, %v2757
  %2770 = vrot.lane.b32.xlu0 %v2011, 104
  %v2771 = vpop.permute.xlu0 %2770
  %2772 = vrot.lane.b32.xlu0 %v2012, 104
  %v2773 = vpop.permute.xlu0 %2772
  %2774 = vrot.lane.b32.xlu0 %v2013, 104
  %v2775 = vpop.permute.xlu0 %2774
  %2776 = vrot.lane.b32.xlu0 %v2011, 72
  %v2777 = vpop.permute.xlu0 %2776
  %2778 = vrot.lane.b32.xlu0 %v2012, 72
  %v2779 = vpop.permute.xlu0 %2778
  %2780 = vrot.lane.b32.xlu0 %v2013, 72
  %v2781 = vpop.permute.xlu0 %2780
  %v2783 = vsel %vm350, %v2771, 0
  %v2786 = vsel %vm350, %v2773, 0
  %v2789 = vsel %vm350, %v2775, 0
  %v2792 = vsel %vm350, %v2777, 0
  %v2795 = vsel %vm350, %v2779, 0
  %v2798 = vsel %vm350, %v2781, 0
  %2800 = vmatprep.subr.bf16.mxu0 0
  %2801 = vmatpush1.bf16.xpose.msra.mxu0 %v2792
  %2802 = vmatprep.subr.bf16.mxu0 0
  %2803 = vmatpush1.bf16.xpose.msra.mxu0 %v2795
  %2804 = vmatprep.subr.bf16.mxu0 0
  %2805 = vmatpush1.bf16.xpose.msra.mxu0 %v2798
  %2806 = vmatprep.subr.bf16.mxu0 0
  %2807 = vmatpush1.bf16.xpose.msra.mxu0 0
  %2808 = vmatprep.subr.bf16.mxu0 0
  %2809 = vmatpush1.bf16.xpose.msra.mxu0 0
  %2810 = vmatprep.subr.bf16.mxu0 0
  %2811 = vmatpush1.bf16.xpose.msra.mxu0 0
  %2812 = vmatprep.subr.bf16.mxu0 0
  %2813 = vmatpush1.bf16.xpose.msra.mxu0 0
  %2814 = vmatprep.subr.bf16.mxu0 0
  %2815 = vmatpush1.bf16.xpose.msra.mxu0 0
  %2816 = vmatprep.subr.bf16.mxu0 0
  %2817 = vmatpush1.bf16.xpose.msra.mxu0 0
  %2818 = vmatprep.subr.bf16.mxu0 0
  %2819 = vmatpush1.bf16.xpose.msra.mxu0 0
  %2820 = vmatprep.subr.bf16.mxu0 0
  %2821 = vmatpush1.bf16.xpose.msra.mxu0 0
  %2822 = vmatprep.subr.bf16.mxu0 0
  %2823 = vmatpush1.bf16.xpose.msra.mxu0 0
  %2824 = vmatprep.subr.bf16.mxu0 0
  %2825 = vmatpush1.bf16.xpose.msra.mxu0 0
  %2826 = vmatprep.subr.bf16.mxu0 0
  %2827 = vmatpush1.bf16.xpose.msra.mxu0 0
  %2828 = vmatprep.subr.bf16.mxu0 0
  %2829 = vmatpush1.bf16.xpose.msra.mxu0 0
  %2830 = vmatprep.subr.bf16.mxu0 0
  %2831 = vmatpush1.bf16.xpose.msra.mxu0 0
  %2832 = vmatprep.mubr.bf16.mxu0 0
  %2833 = vmatmul.mubr.bf16.gmra.mrb[0].mxu0 %v2783
  %v2834 = vpop.f32.mrb[0].mxu0
  %v2835 = vadd.f32 %v160, %v2834
  %v2836 = vpop.f32.mrb[0].mxu0
  %v2837 = vpop.f32.mrb[0].mxu0
  %v2838 = vadd.f32 %v161, %v2837
  %v2839 = vpop.f32.mrb[0].mxu0
  %2840 = vmatprep.mubr.bf16.mxu0 0
  %2841 = vmatmul.mubr.bf16.gmra.mrb[0].mxu0 %v2786
  %v2842 = vpop.f32.mrb[0].mxu0
  %v2843 = vadd.f32 %v162, %v2842
  %v2844 = vpop.f32.mrb[0].mxu0
  %v2845 = vpop.f32.mrb[0].mxu0
  %v2846 = vadd.f32 %v163, %v2845
  %v2847 = vpop.f32.mrb[0].mxu0
  %2848 = vmatprep.mubr.bf16.mxu0 0
  %2849 = vmatmul.mubr.bf16.gmra.mrb[0].mxu0 %v2789
  %v2850 = vpop.f32.mrb[0].mxu0
  %v2851 = vadd.f32 %v164, %v2850
  %v2852 = vpop.f32.mrb[0].mxu0
  %v2853 = vpop.f32.mrb[0].mxu0
  %v2854 = vadd.f32 %v165, %v2853
  %v2855 = vpop.f32.mrb[0].mxu0
  %2856 = vdwg.mxu0
  %v2857 = vsel %vm93, %v2835, -inf
  %2858 = vmax.xlane.f32.xlu0 %v2857
  %v2859 = vpop.xlane.xlu0 %2858
  %v2860 = vsel %vm93, %v2838, -inf
  %2861 = vmax.xlane.f32.xlu0 %v2860
  %v2862 = vpop.xlane.xlu0 %2861
  %v2863 = vsel %vm93, %v2843, -inf
  %2864 = vmax.xlane.f32.xlu0 %v2863
  %v2865 = vpop.xlane.xlu0 %2864
  %v2866 = vsel %vm93, %v2846, -inf
  %2867 = vmax.xlane.f32.xlu0 %v2866
  %v2868 = vpop.xlane.xlu0 %2867
  %v2869 = vsel %vm93, %v2851, -inf
  %2870 = vmax.xlane.f32.xlu0 %v2869
  %v2871 = vpop.xlane.xlu0 %2870
  %v2872 = vsel %vm93, %v2854, -inf
  %2873 = vmax.xlane.f32.xlu0 %v2872
  %v2874 = vpop.xlane.xlu0 %2873
  %v2875 = vsub.f32 %v2835, %v2859
  %v2876 = vsub.f32 %v2838, %v2862
  %v2877 = vsub.f32 %v2843, %v2865
  %v2878 = vsub.f32 %v2846, %v2868
  %v2879 = vsub.f32 %v2851, %v2871
  %v2880 = vsub.f32 %v2854, %v2874
  %v2881 = vmul.f32 %v2875, 1.442695
  %v2882 = vpow.pop %v2881
  %v2883 = vmul.f32 %v2876, 1.442695
  %v2884 = vpow.pop %v2883
  %v2885 = vmul.f32 %v2877, 1.442695
  %v2886 = vpow.pop %v2885
  %v2887 = vmul.f32 %v2878, 1.442695
  %v2888 = vpow.pop %v2887
  %v2889 = vmul.f32 %v2879, 1.442695
  %v2890 = vpow.pop %v2889
  %v2891 = vmul.f32 %v2880, 1.442695
  %v2892 = vpow.pop %v2891
  %v2893 = vsel %vm93, %v2882, 0.0
  %2894 = vadd.xlane.f32.xlu0 %v2893
  %v2895 = vpop.xlane.xlu0 %2894
  %v2896 = vsel %vm93, %v2884, 0.0
  %2897 = vadd.xlane.f32.xlu0 %v2896
  %v2898 = vpop.xlane.xlu0 %2897
  %v2899 = vsel %vm93, %v2886, 0.0
  %2900 = vadd.xlane.f32.xlu0 %v2899
  %v2901 = vpop.xlane.xlu0 %2900
  %v2902 = vsel %vm93, %v2888, 0.0
  %2903 = vadd.xlane.f32.xlu0 %v2902
  %v2904 = vpop.xlane.xlu0 %2903
  %v2905 = vsel %vm93, %v2890, 0.0
  %2906 = vadd.xlane.f32.xlu0 %v2905
  %v2907 = vpop.xlane.xlu0 %2906
  %v2908 = vsel %vm93, %v2892, 0.0
  %2909 = vadd.xlane.f32.xlu0 %v2908
  %v2910 = vpop.xlane.xlu0 %2909
  %v2911 = vrcp.pop %v2895
  %v2912 = vrcp.pop %v2898
  %v2913 = vrcp.pop %v2901
  %v2914 = vrcp.pop %v2904
  %v2915 = vrcp.pop %v2907
  %v2916 = vrcp.pop %v2910
  %v2917 = vmul.f32 %v2882, %v2911
  %v2918 = vmul.f32 %v2884, %v2912
  %v2919 = vmul.f32 %v2886, %v2913
  %v2920 = vmul.f32 %v2888, %v2914
  %v2921 = vmul.f32 %v2890, %v2915
  %v2922 = vmul.f32 %v2892, %v2916
  %v2923 = vpack.c.bf16 %v2918, %v2917
  %v2924 = vpack.c.bf16 %v2920, %v2919
  %v2925 = vpack.c.bf16 %v2922, %v2921
  %2926 = vrot.lane.b32.xlu0 %v2011, 40
  %v2927 = vpop.permute.xlu0 %2926
  %2928 = vrot.lane.b32.xlu0 %v2012, 40
  %v2929 = vpop.permute.xlu0 %2928
  %2930 = vrot.lane.b32.xlu0 %v2013, 40
  %v2931 = vpop.permute.xlu0 %2930
  %v2936 = vsel %vm93, %v2923, 0
  %v2939 = vsel %vm93, %v2924, 0
  %v2942 = vsel %vm93, %v2925, 0
  %2944 = vmatprep.subr.bf16.mxu0 0
  %2945 = vmatpush1.bf16.msra.mxu0 %v2927
  %2946 = vmatprep.subr.bf16.mxu0 0
  %2947 = vmatpush1.bf16.msra.mxu0 %v2929
  %2948 = vmatprep.subr.bf16.mxu0 0
  %2949 = vmatpush1.bf16.msra.mxu0 %v2931
  %2950 = vmatprep.subr.bf16.mxu0 0
  %2951 = vmatpush1.bf16.msra.mxu0 0
  %2952 = vmatprep.subr.bf16.mxu0 0
  %2953 = vmatpush1.bf16.msra.mxu0 0
  %2954 = vmatprep.subr.bf16.mxu0 0
  %2955 = vmatpush1.bf16.msra.mxu0 0
  %2956 = vmatprep.subr.bf16.mxu0 0
  %2957 = vmatpush1.bf16.msra.mxu0 0
  %2958 = vmatprep.subr.bf16.mxu0 0
  %2959 = vmatpush1.bf16.msra.mxu0 0
  %2960 = vmatprep.subr.bf16.mxu0 0
  %2961 = vmatpush1.bf16.msra.mxu0 0
  %2962 = vmatprep.subr.bf16.mxu0 0
  %2963 = vmatpush1.bf16.msra.mxu0 0
  %2964 = vmatprep.subr.bf16.mxu0 0
  %2965 = vmatpush1.bf16.msra.mxu0 0
  %2966 = vmatprep.subr.bf16.mxu0 0
  %2967 = vmatpush1.bf16.msra.mxu0 0
  %2968 = vmatprep.subr.bf16.mxu0 0
  %2969 = vmatpush1.bf16.msra.mxu0 0
  %2970 = vmatprep.subr.bf16.mxu0 0
  %2971 = vmatpush1.bf16.msra.mxu0 0
  %2972 = vmatprep.subr.bf16.mxu0 0
  %2973 = vmatpush1.bf16.msra.mxu0 0
  %2974 = vmatprep.subr.bf16.mxu0 0
  %2975 = vmatpush1.bf16.msra.mxu0 0
  %2976 = vmatprep.mubr.bf16.mxu0 0
  %2977 = vmatmul.mubr.bf16.gmra.mrb[0].mxu0 %v2936
  %v2978 = vpop.f32.mrb[0].mxu0
  %v2979 = vadd.f32 0.0, %v2978
  %v2980 = vpop.f32.mrb[0].mxu0
  %v2981 = vpop.f32.mrb[0].mxu0
  %v2982 = vadd.f32 0.0, %v2981
  %v2983 = vpop.f32.mrb[0].mxu0
  %2984 = vmatprep.mubr.bf16.mxu0 0
  %2985 = vmatmul.mubr.bf16.gmra.mrb[0].mxu0 %v2939
  %v2986 = vpop.f32.mrb[0].mxu0
  %v2987 = vadd.f32 0.0, %v2986
  %v2988 = vpop.f32.mrb[0].mxu0
  %v2989 = vpop.f32.mrb[0].mxu0
  %v2990 = vadd.f32 0.0, %v2989
  %v2991 = vpop.f32.mrb[0].mxu0
  %2992 = vmatprep.mubr.bf16.mxu0 0
  %2993 = vmatmul.mubr.bf16.gmra.mrb[0].mxu0 %v2942
  %v2994 = vpop.f32.mrb[0].mxu0
  %v2995 = vadd.f32 0.0, %v2994
  %v2996 = vpop.f32.mrb[0].mxu0
  %v2997 = vpop.f32.mrb[0].mxu0
  %v2998 = vadd.f32 0.0, %v2997
  %v2999 = vpop.f32.mrb[0].mxu0
  %3000 = vdwg.mxu0
  %3007 = vrot.lane.b32.xlu0 %v2979, 24
  %v3008 = vpop.permute.xlu0 %3007
  %3009 = vrot.lane.b32.xlu0 %v2982, 24
  %v3010 = vpop.permute.xlu0 %3009
  %3011 = vrot.lane.b32.xlu0 %v2987, 24
  %v3012 = vpop.permute.xlu0 %3011
  %3013 = vrot.lane.b32.xlu0 %v2990, 24
  %v3014 = vpop.permute.xlu0 %3013
  %3015 = vrot.lane.b32.xlu0 %v2995, 24
  %v3016 = vpop.permute.xlu0 %3015
  %3017 = vrot.lane.b32.xlu0 %v2998, 24
  %v3018 = vpop.permute.xlu0 %3017
  %3025 = vst.msk [vmem:[#allocation2] sm:$0xff] %vm1355, %v3008
  %3026 = vst.msk [vmem:[#allocation2 + $0x8] sm:$0xff] %vm1355, %v3010
  %3027 = vst.msk [vmem:[#allocation2 + $0x10] sm:$0xff] %vm1355, %v3012
  %3028 = vst.msk [vmem:[#allocation2 + $0x18] sm:$0xff] %vm1355, %v3014
  %3029 = vst.msk [vmem:[#allocation2 + $0x20] sm:$0xff] %vm1355, %v3016
  %3030 = vst.msk [vmem:[#allocation2 + $0x28] sm:$0xff] %vm1355, %v3018
  %v3031 = vld [vmem:[#allocation2] sm:$0xff]
  %v3032 = vld [vmem:[#allocation2 + $0x8] sm:$0xff]
  %v3033 = vld [vmem:[#allocation2 + $0x10] sm:$0xff]
  %v3034 = vld [vmem:[#allocation2 + $0x18] sm:$0xff]
  %v3035 = vld [vmem:[#allocation2 + $0x20] sm:$0xff]
  %v3036 = vld [vmem:[#allocation2 + $0x28] sm:$0xff]
  %v3037 = vpack.c.bf16 %v3032, %v3031
  %v3038 = vpack.c.bf16 %v3034, %v3033
  %v3039 = vpack.c.bf16 %v3036, %v3035
  %s3040 = scalar_lea.vmem %s6, 16
  %v3041 = vld [vmem:[%s3040] sm:$0xf]
  %v3042 = vld [vmem:[%s3040 + $0x4] sm:$0xf]
  %v3043 = vld [vmem:[%s3040 + $0x8] sm:$0xf]
  %v3044 = vld [vmem:[%s3040 + $0xc] sm:$0xf]
  %v3049 = vunpack.c.l.b16 %v3041
  %v3050 = vunpack.c.l.b16 %v3042
  %v3051 = vunpack.c.l.b16 %v3043
  %v3052 = vunpack.c.l.b16 %v3044
  %v3053 = vpack.c.b16 %v3050, %v3049
  %v3054 = vpack.c.b16 %v3052, %v3051
  %v3058 = vsel %vm166, %v3037, 0
  %v3061 = vsel %vm166, %v3038, 0
  %v3064 = vsel %vm166, %v3039, 0
  %3066 = vmatprep.subr.bf16.mxu0 0
  %3067 = vmatpush1.bf16.msra.mxu0 %v3053
  %3068 = vmatprep.subr.bf16.mxu0 0
  %3069 = vmatpush1.bf16.msra.mxu0 %v3054
  %3070 = vmatprep.subr.bf16.mxu0 0
  %3071 = vmatpush1.bf16.msra.mxu0 0
  %3072 = vmatprep.subr.bf16.mxu0 0
  %3073 = vmatpush1.bf16.msra.mxu0 0
  %3074 = vmatprep.subr.bf16.mxu0 0
  %3075 = vmatpush1.bf16.msra.mxu0 0
  %3076 = vmatprep.subr.bf16.mxu0 0
  %3077 = vmatpush1.bf16.msra.mxu0 0
  %3078 = vmatprep.subr.bf16.mxu0 0
  %3079 = vmatpush1.bf16.msra.mxu0 0
  %3080 = vmatprep.subr.bf16.mxu0 0
  %3081 = vmatpush1.bf16.msra.mxu0 0
  %3082 = vmatprep.subr.bf16.mxu0 0
  %3083 = vmatpush1.bf16.msra.mxu0 0
  %3084 = vmatprep.subr.bf16.mxu0 0
  %3085 = vmatpush1.bf16.msra.mxu0 0
  %3086 = vmatprep.subr.bf16.mxu0 0
  %3087 = vmatpush1.bf16.msra.mxu0 0
  %3088 = vmatprep.subr.bf16.mxu0 0
  %3089 = vmatpush1.bf16.msra.mxu0 0
  %3090 = vmatprep.subr.bf16.mxu0 0
  %3091 = vmatpush1.bf16.msra.mxu0 0
  %3092 = vmatprep.subr.bf16.mxu0 0
  %3093 = vmatpush1.bf16.msra.mxu0 0
  %3094 = vmatprep.subr.bf16.mxu0 0
  %3095 = vmatpush1.bf16.msra.mxu0 0
  %3096 = vmatprep.subr.bf16.mxu0 0
  %3097 = vmatpush1.bf16.msra.mxu0 0
  %3098 = vmatprep.mubr.bf16.mxu0 0
  %3099 = vmatmul.mubr.bf16.gmra.mrb[0].mxu0 %v3058
  %v3100 = vpop.f32.mrb[0].mxu0
  %v3101 = vadd.f32 0.0, %v3100
  %v3102 = vpop.f32.mrb[0].mxu0
  %v3103 = vpop.f32.mrb[0].mxu0
  %v3104 = vadd.f32 0.0, %v3103
  %v3105 = vpop.f32.mrb[0].mxu0
  %3106 = vmatprep.mubr.bf16.mxu0 0
  %3107 = vmatmul.mubr.bf16.gmra.mrb[0].mxu0 %v3061
  %v3108 = vpop.f32.mrb[0].mxu0
  %v3109 = vadd.f32 0.0, %v3108
  %v3110 = vpop.f32.mrb[0].mxu0
  %v3111 = vpop.f32.mrb[0].mxu0
  %v3112 = vadd.f32 0.0, %v3111
  %v3113 = vpop.f32.mrb[0].mxu0
  %3114 = vmatprep.mubr.bf16.mxu0 0
  %3115 = vmatmul.mubr.bf16.gmra.mrb[0].mxu0 %v3064
  %v3116 = vpop.f32.mrb[0].mxu0
  %v3117 = vadd.f32 0.0, %v3116
  %v3118 = vpop.f32.mrb[0].mxu0
  %v3119 = vpop.f32.mrb[0].mxu0
  %v3120 = vadd.f32 0.0, %v3119
  %v3121 = vpop.f32.mrb[0].mxu0
  %3122 = vdwg.mxu0
  %v3123 = vadd.f32 %v1833, %v3101
  %v3124 = vadd.f32 %v1834, %v3104
  %v3125 = vadd.f32 %v1835, %v3109
  %v3126 = vadd.f32 %v1836, %v3112
  %v3127 = vadd.f32 %v1837, %v3117
  %v3128 = vadd.f32 %v1838, %v3120
  %s3129 = scalar_lea.vmem %s7, 1
  %v3130 = vld [vmem:[%s3129] sm:$0x1]
  %v3132 = vlaneseq
  %v3133 = vshrl.u32 %v3132, 7
  %v3134 = vsub.s32 0, %v3133
  %v3135 = vrot.slane %v3130, %v3134
  %v3137 = vadd.f32 %v3123, %v3135
  %v3138 = vadd.f32 %v3124, %v3135
  %v3139 = vadd.f32 %v3125, %v3135
  %v3140 = vadd.f32 %v3126, %v3135
  %v3141 = vadd.f32 %v3127, %v3135
  %v3142 = vadd.f32 %v3128, %v3135
  %v3143 = vsel %vm166, %v3137, 0.0
  %3144 = vadd.xlane.f32.xlu0 %v3143
  %v3145 = vpop.xlane.xlu0 %3144
  %v3146 = vsel %vm166, %v3138, 0.0
  %3147 = vadd.xlane.f32.xlu0 %v3146
  %v3148 = vpop.xlane.xlu0 %3147
  %v3149 = vsel %vm166, %v3139, 0.0
  %3150 = vadd.xlane.f32.xlu0 %v3149
  %v3151 = vpop.xlane.xlu0 %3150
  %v3152 = vsel %vm166, %v3140, 0.0
  %3153 = vadd.xlane.f32.xlu0 %v3152
  %v3154 = vpop.xlane.xlu0 %3153
  %v3155 = vsel %vm166, %v3141, 0.0
  %3156 = vadd.xlane.f32.xlu0 %v3155
  %v3157 = vpop.xlane.xlu0 %3156
  %v3158 = vsel %vm166, %v3142, 0.0
  %3159 = vadd.xlane.f32.xlu0 %v3158
  %v3160 = vpop.xlane.xlu0 %3159
  %v3161 = vmul.f32 %v3145, %v185
  %v3162 = vmul.f32 %v3148, %v185
  %v3163 = vmul.f32 %v3151, %v185
  %v3164 = vmul.f32 %v3154, %v185
  %v3165 = vmul.f32 %v3157, %v185
  %v3166 = vmul.f32 %v3160, %v185
  %v3167 = vsub.f32 %v3137, %v3161
  %v3168 = vsub.f32 %v3138, %v3162
  %v3169 = vsub.f32 %v3139, %v3163
  %v3170 = vsub.f32 %v3140, %v3164
  %v3171 = vsub.f32 %v3141, %v3165
  %v3172 = vsub.f32 %v3142, %v3166
  %v3173 = vmul.f32 %v3167, %v3167
  %v3174 = vmul.f32 %v3168, %v3168
  %v3175 = vmul.f32 %v3169, %v3169
  %v3176 = vmul.f32 %v3170, %v3170
  %v3177 = vmul.f32 %v3171, %v3171
  %v3178 = vmul.f32 %v3172, %v3172
  %v3179 = vsel %vm166, %v3173, 0.0
  %3180 = vadd.xlane.f32.xlu0 %v3179
  %v3181 = vpop.xlane.xlu0 %3180
  %v3182 = vsel %vm166, %v3174, 0.0
  %3183 = vadd.xlane.f32.xlu0 %v3182
  %v3184 = vpop.xlane.xlu0 %3183
  %v3185 = vsel %vm166, %v3175, 0.0
  %3186 = vadd.xlane.f32.xlu0 %v3185
  %v3187 = vpop.xlane.xlu0 %3186
  %v3188 = vsel %vm166, %v3176, 0.0
  %3189 = vadd.xlane.f32.xlu0 %v3188
  %v3190 = vpop.xlane.xlu0 %3189
  %v3191 = vsel %vm166, %v3177, 0.0
  %3192 = vadd.xlane.f32.xlu0 %v3191
  %v3193 = vpop.xlane.xlu0 %3192
  %v3194 = vsel %vm166, %v3178, 0.0
  %3195 = vadd.xlane.f32.xlu0 %v3194
  %v3196 = vpop.xlane.xlu0 %3195
  %v3197 = vmul.f32 %v3181, %v185
  %v3198 = vmul.f32 %v3184, %v185
  %v3199 = vmul.f32 %v3187, %v185
  %v3200 = vmul.f32 %v3190, %v185
  %v3201 = vmul.f32 %v3193, %v185
  %v3202 = vmul.f32 %v3196, %v185
  %v3203 = vadd.f32 %v3197, 1e-06
  %v3204 = vadd.f32 %v3198, 1e-06
  %v3205 = vadd.f32 %v3199, 1e-06
  %v3206 = vadd.f32 %v3200, 1e-06
  %v3207 = vadd.f32 %v3201, 1e-06
  %v3208 = vadd.f32 %v3202, 1e-06
  %v3209 = vrsqrt.pop %v3203
  %v3210 = vrsqrt.pop %v3204
  %v3211 = vrsqrt.pop %v3205
  %v3212 = vrsqrt.pop %v3206
  %v3213 = vrsqrt.pop %v3207
  %v3214 = vrsqrt.pop %v3208
  %v3215 = vmul.f32 %v3167, %v3209
  %v3216 = vmul.f32 %v3168, %v3210
  %v3217 = vmul.f32 %v3169, %v3211
  %v3218 = vmul.f32 %v3170, %v3212
  %v3219 = vmul.f32 %v3171, %v3213
  %v3220 = vmul.f32 %v3172, %v3214
  %v3221 = vpack.c.bf16 %v3216, %v3215
  %v3222 = vpack.c.bf16 %v3218, %v3217
  %v3223 = vpack.c.bf16 %v3220, %v3219
  %s3224 = scalar_lea.vmem %s8, 16
  %v3225 = vld [vmem:[%s3224] sm:$0xf]
  %v3226 = vld [vmem:[%s3224 + $0x4] sm:$0xf]
  %v3227 = vld [vmem:[%s3224 + $0x8] sm:$0xf]
  %v3228 = vld [vmem:[%s3224 + $0xc] sm:$0xf]
  %s3229 = scalar_lea.vmem %s9, 1
  %v3230 = vld [vmem:[%s3229] sm:$0x1]
  %v3232 = vlaneseq
  %v3233 = vshrl.u32 %v3232, 7
  %v3234 = vsub.s32 0, %v3233
  %v3235 = vrot.slane %v3230, %v3234
  %v3241 = vunpack.c.l.b16 %v3225
  %v3242 = vunpack.c.l.b16 %v3226
  %v3243 = vunpack.c.l.b16 %v3227
  %v3244 = vunpack.c.l.b16 %v3228
  %v3245 = vpack.c.b16 %v3242, %v3241
  %v3246 = vpack.c.b16 %v3244, %v3243
  %v3250 = vsel %vm166, %v3221, 0
  %v3253 = vsel %vm166, %v3222, 0
  %v3256 = vsel %vm166, %v3223, 0
  %3258 = vmatprep.subr.bf16.mxu0 0
  %3259 = vmatpush1.bf16.msra.mxu0 %v3245
  %3260 = vmatprep.subr.bf16.mxu0 0
  %3261 = vmatpush1.bf16.msra.mxu0 %v3246
  %3262 = vmatprep.subr.bf16.mxu0 0
  %3263 = vmatpush1.bf16.msra.mxu0 0
  %3264 = vmatprep.subr.bf16.mxu0 0
  %3265 = vmatpush1.bf16.msra.mxu0 0
  %3266 = vmatprep.subr.bf16.mxu0 0
  %3267 = vmatpush1.bf16.msra.mxu0 0
  %3268 = vmatprep.subr.bf16.mxu0 0
  %3269 = vmatpush1.bf16.msra.mxu0 0
  %3270 = vmatprep.subr.bf16.mxu0 0
  %3271 = vmatpush1.bf16.msra.mxu0 0
  %3272 = vmatprep.subr.bf16.mxu0 0
  %3273 = vmatpush1.bf16.msra.mxu0 0
  %3274 = vmatprep.subr.bf16.mxu0 0
  %3275 = vmatpush1.bf16.msra.mxu0 0
  %3276 = vmatprep.subr.bf16.mxu0 0
  %3277 = vmatpush1.bf16.msra.mxu0 0
  %3278 = vmatprep.subr.bf16.mxu0 0
  %3279 = vmatpush1.bf16.msra.mxu0 0
  %3280 = vmatprep.subr.bf16.mxu0 0
  %3281 = vmatpush1.bf16.msra.mxu0 0
  %3282 = vmatprep.subr.bf16.mxu0 0
  %3283 = vmatpush1.bf16.msra.mxu0 0
  %3284 = vmatprep.subr.bf16.mxu0 0
  %3285 = vmatpush1.bf16.msra.mxu0 0
  %3286 = vmatprep.subr.bf16.mxu0 0
  %3287 = vmatpush1.bf16.msra.mxu0 0
  %3288 = vmatprep.subr.bf16.mxu0 0
  %3289 = vmatpush1.bf16.msra.mxu0 0
  %3290 = vmatprep.mubr.bf16.mxu0 0
  %3291 = vmatmul.mubr.bf16.gmra.mrb[0].mxu0 %v3250
  %v3292 = vpop.f32.mrb[0].mxu0
  %v3293 = vadd.f32 %v3235, %v3292
  %v3294 = vpop.f32.mrb[0].mxu0
  %v3295 = vpop.f32.mrb[0].mxu0
  %v3296 = vadd.f32 %v3235, %v3295
  %v3297 = vpop.f32.mrb[0].mxu0
  %3298 = vmatprep.mubr.bf16.mxu0 0
  %3299 = vmatmul.mubr.bf16.gmra.mrb[0].mxu0 %v3253
  %v3300 = vpop.f32.mrb[0].mxu0
  %v3301 = vadd.f32 %v3235, %v3300
  %v3302 = vpop.f32.mrb[0].mxu0
  %v3303 = vpop.f32.mrb[0].mxu0
  %v3304 = vadd.f32 %v3235, %v3303
  %v3305 = vpop.f32.mrb[0].mxu0
  %3306 = vmatprep.mubr.bf16.mxu0 0
  %3307 = vmatmul.mubr.bf16.gmra.mrb[0].mxu0 %v3256
  %v3308 = vpop.f32.mrb[0].mxu0
  %v3309 = vadd.f32 %v3235, %v3308
  %v3310 = vpop.f32.mrb[0].mxu0
  %v3311 = vpop.f32.mrb[0].mxu0
  %v3312 = vadd.f32 %v3235, %v3311
  %v3313 = vpop.f32.mrb[0].mxu0
  %3314 = vdwg.mxu0
  %v3315 = vmul.f32 %v3293, 0.5
  %v3316 = vmul.f32 %v3296, 0.5
  %v3317 = vmul.f32 %v3301, 0.5
  %v3318 = vmul.f32 %v3304, 0.5
  %v3319 = vmul.f32 %v3309, 0.5
  %v3320 = vmul.f32 %v3312, 0.5
  %v3321 = vmul.f32 %v3293, 0.044715
  %v3322 = vmul.f32 %v3296, 0.044715
  %v3323 = vmul.f32 %v3301, 0.044715
  %v3324 = vmul.f32 %v3304, 0.044715
  %v3325 = vmul.f32 %v3309, 0.044715
  %v3326 = vmul.f32 %v3312, 0.044715
  %v3327 = vmul.f32 %v3321, %v3293
  %v3328 = vmul.f32 %v3322, %v3296
  %v3329 = vmul.f32 %v3323, %v3301
  %v3330 = vmul.f32 %v3324, %v3304
  %v3331 = vmul.f32 %v3325, %v3309
  %v3332 = vmul.f32 %v3326, %v3312
  %v3333 = vmul.f32 %v3327, %v3293
  %v3334 = vmul.f32 %v3328, %v3296
  %v3335 = vmul.f32 %v3329, %v3301
  %v3336 = vmul.f32 %v3330, %v3304
  %v3337 = vmul.f32 %v3331, %v3309
  %v3338 = vmul.f32 %v3332, %v3312
  %v3339 = vadd.f32 %v3293, %v3333
  %v3340 = vadd.f32 %v3296, %v3334
  %v3341 = vadd.f32 %v3301, %v3335
  %v3342 = vadd.f32 %v3304, %v3336
  %v3343 = vadd.f32 %v3309, %v3337
  %v3344 = vadd.f32 %v3312, %v3338
  %v3345 = vmul.f32 %v3339, 0.7978846
  %v3346 = vmul.f32 %v3340, 0.7978846
  %v3347 = vmul.f32 %v3341, 0.7978846
  %v3348 = vmul.f32 %v3342, 0.7978846
  %v3349 = vmul.f32 %v3343, 0.7978846
  %v3350 = vmul.f32 %v3344, 0.7978846
  %v3351 = vtanh.pop %v3345
  %v3352 = vtanh.pop %v3346
  %v3353 = vtanh.pop %v3347
  %v3354 = vtanh.pop %v3348
  %v3355 = vtanh.pop %v3349
  %v3356 = vtanh.pop %v3350
  %v3357 = vadd.f32 %v3351, 1.0
  %v3358 = vadd.f32 %v3352, 1.0
  %v3359 = vadd.f32 %v3353, 1.0
  %v3360 = vadd.f32 %v3354, 1.0
  %v3361 = vadd.f32 %v3355, 1.0
  %v3362 = vadd.f32 %v3356, 1.0
  %v3363 = vmul.f32 %v3315, %v3357
  %v3364 = vmul.f32 %v3316, %v3358
  %v3365 = vmul.f32 %v3317, %v3359
  %v3366 = vmul.f32 %v3318, %v3360
  %v3367 = vmul.f32 %v3319, %v3361
  %v3368 = vmul.f32 %v3320, %v3362
  %v3369 = vpack.c.bf16 %v3364, %v3363
  %v3370 = vpack.c.bf16 %v3366, %v3365
  %v3371 = vpack.c.bf16 %v3368, %v3367
  %s3372 = scalar_lea.vmem %s10, 64
  %v3373 = vld [vmem:[%s3372] sm:$0xf]
  %v3374 = vld [vmem:[%s3372 + $0x4] sm:$0xf]
  %v3375 = vld [vmem:[%s3372 + $0x8] sm:$0xf]
  %v3376 = vld [vmem:[%s3372 + $0xc] sm:$0xf]
  %v3377 = vld [vmem:[%s3372 + $0x10] sm:$0xf]
  %v3378 = vld [vmem:[%s3372 + $0x14] sm:$0xf]
  %v3379 = vld [vmem:[%s3372 + $0x18] sm:$0xf]
  %v3380 = vld [vmem:[%s3372 + $0x1c] sm:$0xf]
  %v3381 = vld [vmem:[%s3372 + $0x20] sm:$0xf]
  %v3382 = vld [vmem:[%s3372 + $0x24] sm:$0xf]
  %v3383 = vld [vmem:[%s3372 + $0x28] sm:$0xf]
  %v3384 = vld [vmem:[%s3372 + $0x2c] sm:$0xf]
  %v3385 = vld [vmem:[%s3372 + $0x30] sm:$0xf]
  %v3386 = vld [vmem:[%s3372 + $0x34] sm:$0xf]
  %v3387 = vld [vmem:[%s3372 + $0x38] sm:$0xf]
  %v3388 = vld [vmem:[%s3372 + $0x3c] sm:$0xf]
  %v3405 = vunpack.c.l.b16 %v3373
  %v3406 = vunpack.c.l.b16 %v3374
  %v3407 = vunpack.c.l.b16 %v3375
  %v3408 = vunpack.c.l.b16 %v3376
  %v3409 = vunpack.c.l.b16 %v3377
  %v3410 = vunpack.c.l.b16 %v3378
  %v3411 = vunpack.c.l.b16 %v3379
  %v3412 = vunpack.c.l.b16 %v3380
  %v3413 = vunpack.c.l.b16 %v3381
  %v3414 = vunpack.c.l.b16 %v3382
  %v3415 = vunpack.c.l.b16 %v3383
  %v3416 = vunpack.c.l.b16 %v3384
  %v3417 = vunpack.c.l.b16 %v3385
  %v3418 = vunpack.c.l.b16 %v3386
  %v3419 = vunpack.c.l.b16 %v3387
  %v3420 = vunpack.c.l.b16 %v3388
  %v3421 = vpack.c.b16 %v3406, %v3405
  %v3422 = vpack.c.b16 %v3408, %v3407
  %v3423 = vpack.c.b16 %v3410, %v3409
  %v3424 = vpack.c.b16 %v3412, %v3411
  %v3425 = vpack.c.b16 %v3414, %v3413
  %v3426 = vpack.c.b16 %v3416, %v3415
  %v3427 = vpack.c.b16 %v3418, %v3417
  %v3428 = vpack.c.b16 %v3420, %v3419
  %3437 = vmatprep.subr.bf16.mxu0 0
  %3438 = vmatpush1.bf16.msra.mxu0 %v3421
  %3439 = vmatprep.subr.bf16.mxu0 0
  %3440 = vmatpush1.bf16.msra.mxu0 %v3422
  %3441 = vmatprep.subr.bf16.mxu0 0
  %3442 = vmatpush1.bf16.msra.mxu0 %v3423
  %3443 = vmatprep.subr.bf16.mxu0 0
  %3444 = vmatpush1.bf16.msra.mxu0 %v3424
  %3445 = vmatprep.subr.bf16.mxu0 0
  %3446 = vmatpush1.bf16.msra.mxu0 %v3425
  %3447 = vmatprep.subr.bf16.mxu0 0
  %3448 = vmatpush1.bf16.msra.mxu0 %v3426
  %3449 = vmatprep.subr.bf16.mxu0 0
  %3450 = vmatpush1.bf16.msra.mxu0 %v3427
  %3451 = vmatprep.subr.bf16.mxu0 0
  %3452 = vmatpush1.bf16.msra.mxu0 %v3428
  %3453 = vmatprep.subr.bf16.mxu0 0
  %3454 = vmatpush1.bf16.msra.mxu0 0
  %3455 = vmatprep.subr.bf16.mxu0 0
  %3456 = vmatpush1.bf16.msra.mxu0 0
  %3457 = vmatprep.subr.bf16.mxu0 0
  %3458 = vmatpush1.bf16.msra.mxu0 0
  %3459 = vmatprep.subr.bf16.mxu0 0
  %3460 = vmatpush1.bf16.msra.mxu0 0
  %3461 = vmatprep.subr.bf16.mxu0 0
  %3462 = vmatpush1.bf16.msra.mxu0 0
  %3463 = vmatprep.subr.bf16.mxu0 0
  %3464 = vmatpush1.bf16.msra.mxu0 0
  %3465 = vmatprep.subr.bf16.mxu0 0
  %3466 = vmatpush1.bf16.msra.mxu0 0
  %3467 = vmatprep.subr.bf16.mxu0 0
  %3468 = vmatpush1.bf16.msra.mxu0 0
  %3469 = vmatprep.mubr.bf16.mxu0 0
  %3470 = vmatmul.mubr.bf16.gmra.mrb[0].mxu0 %v3369
  %v3471 = vpop.f32.mrb[0].mxu0
  %v3472 = vadd.f32 0.0, %v3471
  %v3473 = vpop.f32.mrb[0].mxu0
  %v3474 = vpop.f32.mrb[0].mxu0
  %v3475 = vadd.f32 0.0, %v3474
  %v3476 = vpop.f32.mrb[0].mxu0
  %3477 = vmatprep.mubr.bf16.mxu0 0
  %3478 = vmatmul.mubr.bf16.gmra.mrb[0].mxu0 %v3370
  %v3479 = vpop.f32.mrb[0].mxu0
  %v3480 = vadd.f32 0.0, %v3479
  %v3481 = vpop.f32.mrb[0].mxu0
  %v3482 = vpop.f32.mrb[0].mxu0
  %v3483 = vadd.f32 0.0, %v3482
  %v3484 = vpop.f32.mrb[0].mxu0
  %3485 = vmatprep.mubr.bf16.mxu0 0
  %3486 = vmatmul.mubr.bf16.gmra.mrb[0].mxu0 %v3371
  %v3487 = vpop.f32.mrb[0].mxu0
  %v3488 = vadd.f32 0.0, %v3487
  %v3489 = vpop.f32.mrb[0].mxu0
  %v3490 = vpop.f32.mrb[0].mxu0
  %v3491 = vadd.f32 0.0, %v3490
  %v3492 = vpop.f32.mrb[0].mxu0
  %3493 = vdwg.mxu0
  %v3494 = vadd.f32 %v3137, %v3472
  %v3495 = vadd.f32 %v3138, %v3475
  %v3496 = vadd.f32 %v3139, %v3480
  %v3497 = vadd.f32 %v3140, %v3483
  %v3498 = vadd.f32 %v3141, %v3488
  %v3499 = vadd.f32 %v3142, %v3491
  %s3500 = scalar_lea.vmem %s11, 1
  %v3501 = vld [vmem:[%s3500] sm:$0x1]
  %v3503 = vlaneseq
  %v3504 = vshrl.u32 %v3503, 7
  %v3505 = vsub.s32 0, %v3504
  %v3506 = vrot.slane %v3501, %v3505
  %v3508 = vadd.f32 %v3494, %v3506
  %v3509 = vadd.f32 %v3495, %v3506
  %v3510 = vadd.f32 %v3496, %v3506
  %v3511 = vadd.f32 %v3497, %v3506
  %v3512 = vadd.f32 %v3498, %v3506
  %v3513 = vadd.f32 %v3499, %v3506
  %v3514 = vsel %vm166, %v3508, 0.0
  %3515 = vadd.xlane.f32.xlu0 %v3514
  %v3516 = vpop.xlane.xlu0 %3515
  %v3517 = vsel %vm166, %v3509, 0.0
  %3518 = vadd.xlane.f32.xlu0 %v3517
  %v3519 = vpop.xlane.xlu0 %3518
  %v3520 = vsel %vm166, %v3510, 0.0
  %3521 = vadd.xlane.f32.xlu0 %v3520
  %v3522 = vpop.xlane.xlu0 %3521
  %v3523 = vsel %vm166, %v3511, 0.0
  %3524 = vadd.xlane.f32.xlu0 %v3523
  %v3525 = vpop.xlane.xlu0 %3524
  %v3526 = vsel %vm166, %v3512, 0.0
  %3527 = vadd.xlane.f32.xlu0 %v3526
  %v3528 = vpop.xlane.xlu0 %3527
  %v3529 = vsel %vm166, %v3513, 0.0
  %3530 = vadd.xlane.f32.xlu0 %v3529
  %v3531 = vpop.xlane.xlu0 %3530
  %v3532 = vmul.f32 %v3516, %v185
  %v3533 = vmul.f32 %v3519, %v185
  %v3534 = vmul.f32 %v3522, %v185
  %v3535 = vmul.f32 %v3525, %v185
  %v3536 = vmul.f32 %v3528, %v185
  %v3537 = vmul.f32 %v3531, %v185
  %v3538 = vsub.f32 %v3508, %v3532
  %v3539 = vsub.f32 %v3509, %v3533
  %v3540 = vsub.f32 %v3510, %v3534
  %v3541 = vsub.f32 %v3511, %v3535
  %v3542 = vsub.f32 %v3512, %v3536
  %v3543 = vsub.f32 %v3513, %v3537
  %v3544 = vmul.f32 %v3538, %v3538
  %v3545 = vmul.f32 %v3539, %v3539
  %v3546 = vmul.f32 %v3540, %v3540
  %v3547 = vmul.f32 %v3541, %v3541
  %v3548 = vmul.f32 %v3542, %v3542
  %v3549 = vmul.f32 %v3543, %v3543
  %v3550 = vsel %vm166, %v3544, 0.0
  %3551 = vadd.xlane.f32.xlu0 %v3550
  %v3552 = vpop.xlane.xlu0 %3551
  %v3553 = vsel %vm166, %v3545, 0.0
  %3554 = vadd.xlane.f32.xlu0 %v3553
  %v3555 = vpop.xlane.xlu0 %3554
  %v3556 = vsel %vm166, %v3546, 0.0
  %3557 = vadd.xlane.f32.xlu0 %v3556
  %v3558 = vpop.xlane.xlu0 %3557
  %v3559 = vsel %vm166, %v3547, 0.0
  %3560 = vadd.xlane.f32.xlu0 %v3559
  %v3561 = vpop.xlane.xlu0 %3560
  %v3562 = vsel %vm166, %v3548, 0.0
  %3563 = vadd.xlane.f32.xlu0 %v3562
  %v3564 = vpop.xlane.xlu0 %3563
  %v3565 = vsel %vm166, %v3549, 0.0
  %3566 = vadd.xlane.f32.xlu0 %v3565
  %v3567 = vpop.xlane.xlu0 %3566
  %v3568 = vmul.f32 %v3552, %v185
  %v3569 = vmul.f32 %v3555, %v185
  %v3570 = vmul.f32 %v3558, %v185
  %v3571 = vmul.f32 %v3561, %v185
  %v3572 = vmul.f32 %v3564, %v185
  %v3573 = vmul.f32 %v3567, %v185
  %v3574 = vadd.f32 %v3568, 1e-06
  %v3575 = vadd.f32 %v3569, 1e-06
  %v3576 = vadd.f32 %v3570, 1e-06
  %v3577 = vadd.f32 %v3571, 1e-06
  %v3578 = vadd.f32 %v3572, 1e-06
  %v3579 = vadd.f32 %v3573, 1e-06
  %v3580 = vrsqrt.pop %v3574
  %v3581 = vrsqrt.pop %v3575
  %v3582 = vrsqrt.pop %v3576
  %v3583 = vrsqrt.pop %v3577
  %v3584 = vrsqrt.pop %v3578
  %v3585 = vrsqrt.pop %v3579
  %v3586 = vmul.f32 %v3538, %v3580
  %v3587 = vmul.f32 %v3539, %v3581
  %v3588 = vmul.f32 %v3540, %v3582
  %v3589 = vmul.f32 %v3541, %v3583
  %v3590 = vmul.f32 %v3542, %v3584
  %v3591 = vmul.f32 %v3543, %v3585
  %v3592 = vpack.c.bf16 %v3587, %v3586
  %v3593 = vpack.c.bf16 %v3589, %v3588
  %v3594 = vpack.c.bf16 %v3591, %v3590
  %v3595 = vld [vmem:[%s12] sm:$0xff]
  %v3596 = vld [vmem:[%s12 + $0x8] sm:$0xff]
  %v3597 = vld [vmem:[%s12 + $0x10] sm:$0xff]
  %v3598 = vld [vmem:[%s12 + $0x18] sm:$0xff]
  %v3599 = vld [vmem:[%s13] sm:$0x3]
  %v3601 = vlaneseq
  %v3602 = vshrl.u32 %v3601, 7
  %v3603 = vsub.s32 0, %v3602
  %v3604 = vrot.slane %v3599, %v3603
  %v3605 = vlaneseq
  %v3606 = vshrl.u32 %v3605, 7
  %v3607 = vsub.s32 1, %v3606
  %v3608 = vrot.slane %v3599, %v3607
  %v3615 = vunpack.c.l.b16 %v3595
  %v3616 = vunpack.c.h.b16 %v3595
  %v3617 = vunpack.c.l.b16 %v3596
  %v3618 = vunpack.c.h.b16 %v3596
  %v3619 = vunpack.c.l.b16 %v3597
  %v3620 = vunpack.c.h.b16 %v3597
  %v3621 = vunpack.c.l.b16 %v3598
  %v3622 = vunpack.c.h.b16 %v3598
  %v3623 = vpack.c.b16 %v3617, %v3615
  %v3624 = vpack.c.b16 %v3618, %v3616
  %v3625 = vpack.c.b16 %v3621, %v3619
  %v3626 = vpack.c.b16 %v3622, %v3620
  %v3632 = vsel %vm166, %v3592, 0
  %v3635 = vsel %vm166, %v3593, 0
  %v3638 = vsel %vm166, %v3594, 0
  %3640 = vmatprep.subr.bf16.mxu0 %v3624
  %3641 = vmatpush1.bf16.msra.mxu0 %v3623
  %3642 = vmatprep.subr.bf16.mxu0 %v3626
  %3643 = vmatpush1.bf16.msra.mxu0 %v3625
  %3644 = vmatprep.subr.bf16.mxu0 0
  %3645 = vmatpush1.bf16.msra.mxu0 0
  %3646 = vmatprep.subr.bf16.mxu0 0
  %3647 = vmatpush1.bf16.msra.mxu0 0
  %3648 = vmatprep.subr.bf16.mxu0 0
  %3649 = vmatpush1.bf16.msra.mxu0 0
  %3650 = vmatprep.subr.bf16.mxu0 0
  %3651 = vmatpush1.bf16.msra.mxu0 0
  %3652 = vmatprep.subr.bf16.mxu0 0
  %3653 = vmatpush1.bf16.msra.mxu0 0
  %3654 = vmatprep.subr.bf16.mxu0 0
  %3655 = vmatpush1.bf16.msra.mxu0 0
  %3656 = vmatprep.subr.bf16.mxu0 0
  %3657 = vmatpush1.bf16.msra.mxu0 0
  %3658 = vmatprep.subr.bf16.mxu0 0
  %3659 = vmatpush1.bf16.msra.mxu0 0
  %3660 = vmatprep.subr.bf16.mxu0 0
  %3661 = vmatpush1.bf16.msra.mxu0 0
  %3662 = vmatprep.subr.bf16.mxu0 0
  %3663 = vmatpush1.bf16.msra.mxu0 0
  %3664 = vmatprep.subr.bf16.mxu0 0
  %3665 = vmatpush1.bf16.msra.mxu0 0
  %3666 = vmatprep.subr.bf16.mxu0 0
  %3667 = vmatpush1.bf16.msra.mxu0 0
  %3668 = vmatprep.subr.bf16.mxu0 0
  %3669 = vmatpush1.bf16.msra.mxu0 0
  %3670 = vmatprep.subr.bf16.mxu0 0
  %3671 = vmatpush1.bf16.msra.mxu0 0
  %3672 = vmatprep.mubr.bf16.mxu0 0
  %3673 = vmatmul.mubr.bf16.gmra.mrb[0].mxu0 %v3632
  %v3674 = vpop.f32.mrb[0].mxu0
  %v3675 = vadd.f32 %v3604, %v3674
  %v3676 = vpop.f32.mrb[0].mxu0
  %v3677 = vadd.f32 %v3608, %v3676
  %v3678 = vpop.f32.mrb[0].mxu0
  %v3679 = vadd.f32 %v3604, %v3678
  %v3680 = vpop.f32.mrb[0].mxu0
  %v3681 = vadd.f32 %v3608, %v3680
  %3682 = vmatprep.mubr.bf16.mxu0 0
  %3683 = vmatmul.mubr.bf16.gmra.mrb[0].mxu0 %v3635
  %v3684 = vpop.f32.mrb[0].mxu0
  %v3685 = vadd.f32 %v3604, %v3684
  %v3686 = vpop.f32.mrb[0].mxu0
  %v3687 = vadd.f32 %v3608, %v3686
  %v3688 = vpop.f32.mrb[0].mxu0
  %v3689 = vadd.f32 %v3604, %v3688
  %v3690 = vpop.f32.mrb[0].mxu0
  %v3691 = vadd.f32 %v3608, %v3690
  %3692 = vmatprep.mubr.bf16.mxu0 0
  %3693 = vmatmul.mubr.bf16.gmra.mrb[0].mxu0 %v3638
  %v3694 = vpop.f32.mrb[0].mxu0
  %v3695 = vadd.f32 %v3604, %v3694
  %v3696 = vpop.f32.mrb[0].mxu0
  %v3697 = vadd.f32 %v3608, %v3696
  %v3698 = vpop.f32.mrb[0].mxu0
  %v3699 = vadd.f32 %v3604, %v3698
  %v3700 = vpop.f32.mrb[0].mxu0
  %v3701 = vadd.f32 %v3608, %v3700
  %3702 = vdwg.mxu0
  %v3703 = vmax.f32 %v3675, 0.0
  %v3704 = vmax.f32 %v3677, 0.0
  %v3705 = vmax.f32 %v3679, 0.0
  %v3706 = vmax.f32 %v3681, 0.0
  %v3707 = vmax.f32 %v3685, 0.0
  %v3708 = vmax.f32 %v3687, 0.0
  %v3709 = vmax.f32 %v3689, 0.0
  %v3710 = vmax.f32 %v3691, 0.0
  %v3711 = vmax.f32 %v3695, 0.0
  %v3712 = vmax.f32 %v3697, 0.0
  %v3713 = vmax.f32 %v3699, 0.0
  %v3714 = vmax.f32 %v3701, 0.0
  %v3715 = vpack.c.bf16 %v3705, %v3703
  %v3716 = vpack.c.bf16 %v3706, %v3704
  %v3717 = vpack.c.bf16 %v3709, %v3707
  %v3718 = vpack.c.bf16 %v3710, %v3708
  %v3719 = vpack.c.bf16 %v3713, %v3711
  %v3720 = vpack.c.bf16 %v3714, %v3712
  %v3721 = vld [vmem:[%s14] sm:$0xff]
  %v3722 = vld [vmem:[%s14 + $0x8] sm:$0xff]
  %v3723 = vld [vmem:[%s14 + $0x10] sm:$0xff]
  %v3724 = vld [vmem:[%s14 + $0x18] sm:$0xff]
  %v3725 = vld [vmem:[%s14 + $0x20] sm:$0xff]
  %v3726 = vld [vmem:[%s14 + $0x28] sm:$0xff]
  %v3727 = vld [vmem:[%s14 + $0x30] sm:$0xff]
  %v3728 = vld [vmem:[%s14 + $0x38] sm:$0xff]
  %v3729 = vld [vmem:[%s14 + $0x40] sm:$0xff]
  %v3730 = vld [vmem:[%s14 + $0x48] sm:$0xff]
  %v3731 = vld [vmem:[%s14 + $0x50] sm:$0xff]
  %v3732 = vld [vmem:[%s14 + $0x58] sm:$0xff]
  %v3733 = vld [vmem:[%s14 + $0x60] sm:$0xff]
  %v3734 = vld [vmem:[%s14 + $0x68] sm:$0xff]
  %v3735 = vld [vmem:[%s14 + $0x70] sm:$0xff]
  %v3736 = vld [vmem:[%s14 + $0x78] sm:$0xff]
  %v3737 = vld [vmem:[%s14 + $0x80] sm:$0xff]
  %v3738 = vld [vmem:[%s14 + $0x88] sm:$0xff]
  %v3739 = vld [vmem:[%s14 + $0x90] sm:$0xff]
  %v3740 = vld [vmem:[%s14 + $0x98] sm:$0xff]
  %v3741 = vld [vmem:[%s14 + $0xa0] sm:$0xff]
  %v3742 = vld [vmem:[%s14 + $0xa8] sm:$0xff]
  %v3743 = vld [vmem:[%s14 + $0xb0] sm:$0xff]
  %v3744 = vld [vmem:[%s14 + $0xb8] sm:$0xff]
  %v3745 = vld [vmem:[%s14 + $0xc0] sm:$0xff]
  %v3746 = vld [vmem:[%s14 + $0xc8] sm:$0xff]
  %v3747 = vld [vmem:[%s14 + $0xd0] sm:$0xff]
  %v3748 = vld [vmem:[%s14 + $0xd8] sm:$0xff]
  %v3749 = vld [vmem:[%s14 + $0xe0] sm:$0xff]
  %v3750 = vld [vmem:[%s14 + $0xe8] sm:$0xff]
  %v3751 = vld [vmem:[%s14 + $0xf0] sm:$0xff]
  %v3752 = vld [vmem:[%s14 + $0xf8] sm:$0xff]
  %v3753 = vld [vmem:[%s15] sm:$0x3]
  %v3755 = vlaneseq
  %v3756 = vshrl.u32 %v3755, 7
  %v3757 = vsub.s32 0, %v3756
  %v3758 = vrot.slane %v3753, %v3757
  %v3759 = vlaneseq
  %v3760 = vshrl.u32 %v3759, 7
  %v3761 = vsub.s32 1, %v3760
  %v3762 = vrot.slane %v3753, %v3761
  %v3797 = vunpack.c.l.b16 %v3721
  %v3798 = vunpack.c.h.b16 %v3721
  %v3799 = vunpack.c.l.b16 %v3722
  %v3800 = vunpack.c.h.b16 %v3722
  %v3801 = vunpack.c.l.b16 %v3723
  %v3802 = vunpack.c.h.b16 %v3723
  %v3803 = vunpack.c.l.b16 %v3724
  %v3804 = vunpack.c.h.b16 %v3724
  %v3805 = vunpack.c.l.b16 %v3725
  %v3806 = vunpack.c.h.b16 %v3725
  %v3807 = vunpack.c.l.b16 %v3726
  %v3808 = vunpack.c.h.b16 %v3726
  %v3809 = vunpack.c.l.b16 %v3727
  %v3810 = vunpack.c.h.b16 %v3727
  %v3811 = vunpack.c.l.b16 %v3728
  %v3812 = vunpack.c.h.b16 %v3728
  %v3813 = vunpack.c.l.b16 %v3729
  %v3814 = vunpack.c.h.b16 %v3729
  %v3815 = vunpack.c.l.b16 %v3730
  %v3816 = vunpack.c.h.b16 %v3730
  %v3817 = vunpack.c.l.b16 %v3731
  %v3818 = vunpack.c.h.b16 %v3731
  %v3819 = vunpack.c.l.b16 %v3732
  %v3820 = vunpack.c.h.b16 %v3732
  %v3821 = vunpack.c.l.b16 %v3733
  %v3822 = vunpack.c.h.b16 %v3733
  %v3823 = vunpack.c.l.b16 %v3734
  %v3824 = vunpack.c.h.b16 %v3734
  %v3825 = vunpack.c.l.b16 %v3735
  %v3826 = vunpack.c.h.b16 %v3735
  %v3827 = vunpack.c.l.b16 %v3736
  %v3828 = vunpack.c.h.b16 %v3736
  %v3829 = vunpack.c.l.b16 %v3737
  %v3830 = vunpack.c.h.b16 %v3737
  %v3831 = vunpack.c.l.b16 %v3738
  %v3832 = vunpack.c.h.b16 %v3738
  %v3833 = vunpack.c.l.b16 %v3739
  %v3834 = vunpack.c.h.b16 %v3739
  %v3835 = vunpack.c.l.b16 %v3740
  %v3836 = vunpack.c.h.b16 %v3740
  %v3837 = vunpack.c.l.b16 %v3741
  %v3838 = vunpack.c.h.b16 %v3741
  %v3839 = vunpack.c.l.b16 %v3742
  %v3840 = vunpack.c.h.b16 %v3742
  %v3841 = vunpack.c.l.b16 %v3743
  %v3842 = vunpack.c.h.b16 %v3743
  %v3843 = vunpack.c.l.b16 %v3744
  %v3844 = vunpack.c.h.b16 %v3744
  %v3845 = vunpack.c.l.b16 %v3745
  %v3846 = vunpack.c.h.b16 %v3745
  %v3847 = vunpack.c.l.b16 %v3746
  %v3848 = vunpack.c.h.b16 %v3746
  %v3849 = vunpack.c.l.b16 %v3747
  %v3850 = vunpack.c.h.b16 %v3747
  %v3851 = vunpack.c.l.b16 %v3748
  %v3852 = vunpack.c.h.b16 %v3748
  %v3853 = vunpack.c.l.b16 %v3749
  %v3854 = vunpack.c.h.b16 %v3749
  %v3855 = vunpack.c.l.b16 %v3750
  %v3856 = vunpack.c.h.b16 %v3750
  %v3857 = vunpack.c.l.b16 %v3751
  %v3858 = vunpack.c.h.b16 %v3751
  %v3859 = vunpack.c.l.b16 %v3752
  %v3860 = vunpack.c.h.b16 %v3752
  %v3861 = vpack.c.b16 %v3799, %v3797
  %v3862 = vpack.c.b16 %v3800, %v3798
  %v3863 = vpack.c.b16 %v3803, %v3801
  %v3864 = vpack.c.b16 %v3804, %v3802
  %v3865 = vpack.c.b16 %v3807, %v3805
  %v3866 = vpack.c.b16 %v3808, %v3806
  %v3867 = vpack.c.b16 %v3811, %v3809
  %v3868 = vpack.c.b16 %v3812, %v3810
  %v3869 = vpack.c.b16 %v3815, %v3813
  %v3870 = vpack.c.b16 %v3816, %v3814
  %v3871 = vpack.c.b16 %v3819, %v3817
  %v3872 = vpack.c.b16 %v3820, %v3818
  %v3873 = vpack.c.b16 %v3823, %v3821
  %v3874 = vpack.c.b16 %v3824, %v3822
  %v3875 = vpack.c.b16 %v3827, %v3825
  %v3876 = vpack.c.b16 %v3828, %v3826
  %v3877 = vpack.c.b16 %v3831, %v3829
  %v3878 = vpack.c.b16 %v3832, %v3830
  %v3879 = vpack.c.b16 %v3835, %v3833
  %v3880 = vpack.c.b16 %v3836, %v3834
  %v3881 = vpack.c.b16 %v3839, %v3837
  %v3882 = vpack.c.b16 %v3840, %v3838
  %v3883 = vpack.c.b16 %v3843, %v3841
  %v3884 = vpack.c.b16 %v3844, %v3842
  %v3885 = vpack.c.b16 %v3847, %v3845
  %v3886 = vpack.c.b16 %v3848, %v3846
  %v3887 = vpack.c.b16 %v3851, %v3849
  %v3888 = vpack.c.b16 %v3852, %v3850
  %v3889 = vpack.c.b16 %v3855, %v3853
  %v3890 = vpack.c.b16 %v3856, %v3854
  %v3891 = vpack.c.b16 %v3859, %v3857
  %v3892 = vpack.c.b16 %v3860, %v3858
  %3925 = vmatprep.subr.bf16.mxu0 %v3862
  %3926 = vmatpush1.bf16.msra.mxu0 %v3861
  %3927 = vmatprep.subr.bf16.mxu0 %v3864
  %3928 = vmatpush1.bf16.msra.mxu0 %v3863
  %3929 = vmatprep.subr.bf16.mxu0 %v3866
  %3930 = vmatpush1.bf16.msra.mxu0 %v3865
  %3931 = vmatprep.subr.bf16.mxu0 %v3868
  %3932 = vmatpush1.bf16.msra.mxu0 %v3867
  %3933 = vmatprep.subr.bf16.mxu0 %v3870
  %3934 = vmatpush1.bf16.msra.mxu0 %v3869
  %3935 = vmatprep.subr.bf16.mxu0 %v3872
  %3936 = vmatpush1.bf16.msra.mxu0 %v3871
  %3937 = vmatprep.subr.bf16.mxu0 %v3874
  %3938 = vmatpush1.bf16.msra.mxu0 %v3873
  %3939 = vmatprep.subr.bf16.mxu0 %v3876
  %3940 = vmatpush1.bf16.msra.mxu0 %v3875
  %3941 = vmatprep.subr.bf16.mxu0 %v3878
  %3942 = vmatpush1.bf16.msra.mxu0 %v3877
  %3943 = vmatprep.subr.bf16.mxu0 %v3880
  %3944 = vmatpush1.bf16.msra.mxu0 %v3879
  %3945 = vmatprep.subr.bf16.mxu0 %v3882
  %3946 = vmatpush1.bf16.msra.mxu0 %v3881
  %3947 = vmatprep.subr.bf16.mxu0 %v3884
  %3948 = vmatpush1.bf16.msra.mxu0 %v3883
  %3949 = vmatprep.subr.bf16.mxu0 %v3886
  %3950 = vmatpush1.bf16.msra.mxu0 %v3885
  %3951 = vmatprep.subr.bf16.mxu0 %v3888
  %3952 = vmatpush1.bf16.msra.mxu0 %v3887
  %3953 = vmatprep.subr.bf16.mxu0 %v3890
  %3954 = vmatpush1.bf16.msra.mxu0 %v3889
  %3955 = vmatprep.subr.bf16.mxu0 %v3892
  %3956 = vmatpush1.bf16.msra.mxu0 %v3891
  %3957 = vmatprep.mubr.bf16.mxu0 %v3716
  %3958 = vmatmul.mubr.bf16.gmra.mrb[0].mxu0 %v3715
  %v3959 = vpop.f32.mrb[0].mxu0
  %v3960 = vadd.f32 %v3758, %v3959
  %v3961 = vpop.f32.mrb[0].mxu0
  %v3962 = vadd.f32 %v3762, %v3961
  %v3963 = vpop.f32.mrb[0].mxu0
  %v3964 = vadd.f32 %v3758, %v3963
  %v3965 = vpop.f32.mrb[0].mxu0
  %v3966 = vadd.f32 %v3762, %v3965
  %3967 = vmatprep.mubr.bf16.mxu0 %v3718
  %3968 = vmatmul.mubr.bf16.gmra.mrb[0].mxu0 %v3717
  %v3969 = vpop.f32.mrb[0].mxu0
  %v3970 = vadd.f32 %v3758, %v3969
  %v3971 = vpop.f32.mrb[0].mxu0
  %v3972 = vadd.f32 %v3762, %v3971
  %v3973 = vpop.f32.mrb[0].mxu0
  %v3974 = vadd.f32 %v3758, %v3973
  %v3975 = vpop.f32.mrb[0].mxu0
  %v3976 = vadd.f32 %v3762, %v3975
  %3977 = vmatprep.mubr.bf16.mxu0 %v3720
  %3978 = vmatmul.mubr.bf16.gmra.mrb[0].mxu0 %v3719
  %v3979 = vpop.f32.mrb[0].mxu0
  %v3980 = vadd.f32 %v3758, %v3979
  %v3981 = vpop.f32.mrb[0].mxu0
  %v3982 = vadd.f32 %v3762, %v3981
  %v3983 = vpop.f32.mrb[0].mxu0
  %v3984 = vadd.f32 %v3758, %v3983
  %v3985 = vpop.f32.mrb[0].mxu0
  %v3986 = vadd.f32 %v3762, %v3985
  %3987 = vdwg.mxu0
  %v3988 = vxor.u32 %v3960, 2147483648
  %v3989 = vxor.u32 %v3962, 2147483648
  %v3990 = vxor.u32 %v3964, 2147483648
  %v3991 = vxor.u32 %v3966, 2147483648
  %v3992 = vxor.u32 %v3970, 2147483648
  %v3993 = vxor.u32 %v3972, 2147483648
  %v3994 = vxor.u32 %v3974, 2147483648
  %v3995 = vxor.u32 %v3976, 2147483648
  %v3996 = vxor.u32 %v3980, 2147483648
  %v3997 = vxor.u32 %v3982, 2147483648
  %v3998 = vxor.u32 %v3984, 2147483648
  %v3999 = vxor.u32 %v3986, 2147483648
  %v4000 = vmul.f32 %v3988, 1.442695
  %v4001 = vpow.pop %v4000
  %v4002 = vmul.f32 %v3989, 1.442695
  %v4003 = vpow.pop %v4002
  %v4004 = vmul.f32 %v3990, 1.442695
  %v4005 = vpow.pop %v4004
  %v4006 = vmul.f32 %v3991, 1.442695
  %v4007 = vpow.pop %v4006
  %v4008 = vmul.f32 %v3992, 1.442695
  %v4009 = vpow.pop %v4008
  %v4010 = vmul.f32 %v3993, 1.442695
  %v4011 = vpow.pop %v4010
  %v4012 = vmul.f32 %v3994, 1.442695
  %v4013 = vpow.pop %v4012
  %v4014 = vmul.f32 %v3995, 1.442695
  %v4015 = vpow.pop %v4014
  %v4016 = vmul.f32 %v3996, 1.442695
  %v4017 = vpow.pop %v4016
  %v4018 = vmul.f32 %v3997, 1.442695
  %v4019 = vpow.pop %v4018
  %v4020 = vmul.f32 %v3998, 1.442695
  %v4021 = vpow.pop %v4020
  %v4022 = vmul.f32 %v3999, 1.442695
  %v4023 = vpow.pop %v4022
  %v4024 = vadd.f32 %v4001, 1.0
  %v4025 = vadd.f32 %v4003, 1.0
  %v4026 = vadd.f32 %v4005, 1.0
  %v4027 = vadd.f32 %v4007, 1.0
  %v4028 = vadd.f32 %v4009, 1.0
  %v4029 = vadd.f32 %v4011, 1.0
  %v4030 = vadd.f32 %v4013, 1.0
  %v4031 = vadd.f32 %v4015, 1.0
  %v4032 = vadd.f32 %v4017, 1.0
  %v4033 = vadd.f32 %v4019, 1.0
  %v4034 = vadd.f32 %v4021, 1.0
  %v4035 = vadd.f32 %v4023, 1.0
  %v4036 = vrcp.pop %v4024
  %v4037 = vmul.f32 1.0, %v4036
  %v4038 = vrcp.pop %v4025
  %v4039 = vmul.f32 1.0, %v4038
  %v4040 = vrcp.pop %v4026
  %v4041 = vmul.f32 1.0, %v4040
  %v4042 = vrcp.pop %v4027
  %v4043 = vmul.f32 1.0, %v4042
  %v4044 = vrcp.pop %v4028
  %v4045 = vmul.f32 1.0, %v4044
  %v4046 = vrcp.pop %v4029
  %v4047 = vmul.f32 1.0, %v4046
  %v4048 = vrcp.pop %v4030
  %v4049 = vmul.f32 1.0, %v4048
  %v4050 = vrcp.pop %v4031
  %v4051 = vmul.f32 1.0, %v4050
  %v4052 = vrcp.pop %v4032
  %v4053 = vmul.f32 1.0, %v4052
  %v4054 = vrcp.pop %v4033
  %v4055 = vmul.f32 1.0, %v4054
  %v4056 = vrcp.pop %v4034
  %v4057 = vmul.f32 1.0, %v4056
  %v4058 = vrcp.pop %v4035
  %v4059 = vmul.f32 1.0, %v4058
  %4060 = vst [vmem:[%s16] sm:$0xff] %v4037
  %4061 = vst [vmem:[%s16 + $0x8] sm:$0xff] %v4039
  %4062 = vst [vmem:[%s16 + $0x10] sm:$0xff] %v4041
  %4063 = vst [vmem:[%s16 + $0x18] sm:$0xff] %v4043
  %4064 = vst [vmem:[%s16 + $0x20] sm:$0xff] %v4045
  %4065 = vst [vmem:[%s16 + $0x28] sm:$0xff] %v4047
  %4066 = vst [vmem:[%s16 + $0x30] sm:$0xff] %v4049
  %4067 = vst [vmem:[%s16 + $0x38] sm:$0xff] %v4051
  %4068 = vst [vmem:[%s16 + $0x40] sm:$0xff] %v4053
  %4069 = vst [vmem:[%s16 + $0x48] sm:$0xff] %v4055
  %4070 = vst [vmem:[%s16 + $0x50] sm:$0xff] %v4057
  %4071 = vst [vmem:[%s16 + $0x58] sm:$0xff] %v4059
  // Predicated region
  $region66: #{forward.1} parent=0 // pred_check
    _
  $region67: #{forward.1} parent=0 // pred_check_branch
    %4073 = sbr.rel (0) target = $region69
  $region68: #{forward.1} parent=0 // pred_region
    _
  $region69: #{forward.1} parent=0 // pred_fallthru
    _
  // Predicated region
  $region70: #{forward.1} parent=0 // pred_check
    _
  $region71: #{forward.1} parent=0 // pred_check_branch
    %4075 = sbr.rel (0) target = $region73
  $region72: #{forward.1} parent=0 // pred_region
    _
  $region73: #{forward.1} parent=0 // pred_fallthru
    _

</llo_original>
